<compile_context>
chip_gen: v6e
topology: v6e:2x2x1
jax: 0.10.0
libtpu: 0.0.40
codegen_flags: <defaults>
</compile_context>

<pallas_src>
import numpy as np
import jax
import jax.numpy as jnp
from jax import lax
from jax.experimental import pallas as pl
from jax.experimental.pallas import tpu as pltpu


# ----------------------------- fused kernel ----------------------------------
def _fused_kernel(x_ref, rand_ref, w2_ref, w3_ref, w4_ref,
                  wfa_ref, wfb_ref, wfc_ref, bf_ref,
                  wc1_ref, bc1_ref, wc2_ref, bc2_ref,
                  o_ref):
    x = x_ref[...].astype(jnp.float32)                 # (BB, C, HW), f32 compute
    BB, C, HW = x.shape
    inv_n = 1.0 / float(HW)
    rank = w3_ref.shape[1]
    d = 3.0 * float(rank)
    hi = lax.Precision.HIGHEST                         # exact-f32 MXU passes

    # ---- spatial mean-centering (batched over the whole block) --------------
    xn = x - jnp.sum(x, axis=-1, keepdims=True) * inv_n            # (BB, C, HW)

    # ---- order 2: ONE batched MXU matmul for all BB covariances -------------
    cov_all = jnp.einsum("bik,bjk->bij", xn, xn,
                         preferred_element_type=jnp.float32,
                         precision=hi) * inv_n                     # (BB, C, C)

    # ---- order 3: random-weighted spatial sum (batched lane reduce) ---------
    m3_all = jnp.sum(xn * rand_ref[...][None], axis=-1, keepdims=True)  # (BB, C, 1)

    # Diagonal mask: read E[xn^2] straight off the covariance diagonal instead
    # of doing another (C, HW) lane reduction.
    ri = lax.broadcasted_iota(jnp.int32, (C, C), 0)
    ci = lax.broadcasted_iota(jnp.int32, (C, C), 1)
    eye = (ri == ci).astype(jnp.float32)

    # ---- tiny per-sample head (all operands are (1,rank)/(C,1)/(1,out) sized)
    for b in range(BB):
        cov = cov_all[b]                                            # (C, C)

        # order-2 projection: f2[r] = sum_{i,j} cov[i,j] * W2[i,j,r]
        # (cov is symmetric, so column i == row i and broadcasting stays 2-D)
        f2 = None
        for i in range(C):
            t = jnp.sum(w2_ref[i] * cov[:, i:i + 1], axis=0, keepdims=True)  # (1, rank)
            f2 = t if f2 is None else f2 + t

        # order-3 / order-4 projections
        f3 = jnp.sum(w3_ref[...] * m3_all[b], axis=0, keepdims=True)         # (1, rank)
        c4 = jnp.sum(cov * eye, axis=-1, keepdims=True)                      # (C, 1) = E[xn^2]
        # NOTE: reference subtracts 3*mean(xn)^2 which is identically 0
        # (xn is mean-centred), so the term is dropped.
        f4 = jnp.sum(w4_ref[...] * c4, axis=0, keepdims=True)                # (1, rank)

        # LayerNorm over the virtual concat [f2 f3 f4] (no concatenate op)
        mu = (jnp.sum(f2, -1, keepdims=True) + jnp.sum(f3, -1, keepdims=True)
              + jnp.sum(f4, -1, keepdims=True)) / d
        var = (jnp.sum((f2 - mu) ** 2, -1, keepdims=True)
               + jnp.sum((f3 - mu) ** 2, -1, keepdims=True)
               + jnp.sum((f4 - mu) ** 2, -1, keepdims=True)) / d
        inv = lax.rsqrt(var + 1e-5)
        g2, g3, g4 = (f2 - mu) * inv, (f3 - mu) * inv, (f4 - mu) * inv       # (1, rank)

        # fuse Linear (lane-dense (rank, out_dim) weights on the MXU) + Mish
        h = (jnp.dot(g2, wfa_ref[...], preferred_element_type=jnp.float32, precision=hi)
             + jnp.dot(g3, wfb_ref[...], preferred_element_type=jnp.float32, precision=hi)
             + jnp.dot(g4, wfc_ref[...], preferred_element_type=jnp.float32, precision=hi)
             + bf_ref[...])                                                   # (1, out_dim)
        sp = jnp.maximum(h, 0.0) + jnp.log1p(jnp.exp(-jnp.abs(h)))            # softplus
        h = h * jnp.tanh(sp)                                                  # Mish

        # gate MLP: Linear -> ReLU -> Linear -> Sigmoid
        t1 = jnp.sum(wc1_ref[...] * h, axis=-1, keepdims=True) + bc1_ref[...]  # (hidden, 1)
        t1 = jnp.maximum(t1, 0.0)
        z = jnp.dot(wc2_ref[...], t1, preferred_element_type=jnp.float32,
                    precision=hi) + bc2_ref[...]                               # (C, 1)
        s = 0.5 * (jnp.tanh(0.5 * z) + 1.0)                                    # sigmoid, no overflow

        # channel gate while the tile is still in VMEM; store in input dtype
        o_ref[b] = (x[b] * s).astype(o_ref.dtype)


# ----------------------------- wrapper ----------------------------------------
def homa_channel_gate(x, params, block_b=None):
    B, C, H, W = x.shape
    HW = H * W
    if block_b is None:
        # Keep >= 2 grid steps when possible (so ("parallel",) can shard steps
        # across both v7x TensorCores) while still packing several samples per
        # step to amortize the fixed per-step cost on single-TC v5e/v6e.
        block_b = max(1, min(8, B // 2)) if B >= 2 else max(B, 1)
    bp = pl.cdiv(B, block_b) * block_b

    x3 = x.reshape(B, C, HW)                     # native dtype; cast to f32 in-kernel
    if bp != B:
        x3 = jnp.pad(x3, ((0, bp - B), (0, 0), (0, 0)))

    rank = params["w3t"].shape[-1]
    out_dim = params["bf_row"].shape[-1]
    hidden = params["bc1_col"].shape[0]

    const2 = lambda b: (0, 0)
    out3 = pl.pallas_call(
        _fused_kernel,
        out_shape=jax.ShapeDtypeStruct((bp, C, HW), x.dtype),
        grid=(bp // block_b,),
        in_specs=[
            pl.BlockSpec((block_b, C, HW), lambda b: (b, 0, 0)),   # x (batch block)
            pl.BlockSpec((C, 1), const2),                          # random_tensor
            pl.BlockSpec((C, C, rank), lambda b: (0, 0, 0)),       # W2^T as (C, C, rank)
            pl.BlockSpec((C, rank), const2),                       # W3^T
            pl.BlockSpec((C, rank), const2),                       # W4^T
            pl.BlockSpec((rank, out_dim), const2),                 # Wf[:, 0:r]^T   (lane-dense)
            pl.BlockSpec((rank, out_dim), const2),                 # Wf[:, r:2r]^T  (lane-dense)
            pl.BlockSpec((rank, out_dim), const2),                 # Wf[:, 2r:3r]^T (lane-dense)
            pl.BlockSpec((1, out_dim), const2),                    # bf (row)
            pl.BlockSpec((hidden, out_dim), const2),               # Wc1 (lane-dense)
            pl.BlockSpec((hidden, 1), const2),                     # bc1 (col)
            pl.BlockSpec((C, hidden), const2),                     # Wc2
            pl.BlockSpec((C, 1), const2),                          # bc2 (col)
        ],
        out_specs=pl.BlockSpec((block_b, C, HW), lambda b: (b, 0, 0)),
        compiler_params=pltpu.CompilerParams(dimension_semantics=("parallel",)),
    )(x3, params["rand_col"], params["w2_3"], params["w3t"], params["w4t"],
      params["wfa_t"], params["wfb_t"], params["wfc_t"], params["bf_row"],
      params["wc1"], params["bc1_col"], params["wc2"], params["bc2_col"])

    if bp != B:
        out3 = out3[:B]
    return out3.reshape(B, C, H, W)


# -------------- deterministic parameter init (shapes from __init__) -----------
def init_params(key, in_ch=4, out_dim=128, rank=32, reduction=16):
    hidden = max(in_ch // reduction, 4)
    ks = jax.random.split(key, 10)

    def lin_w(k, out_f, in_f):
        b = 1.0 / np.sqrt(in_f)
        return jax.random.uniform(k, (out_f, in_f), jnp.float32, -b, b)

    def lin_b(k, out_f, in_f):
        b = 1.0 / np.sqrt(in_f)
        return jax.random.uniform(k, (out_f,), jnp.float32, -b, b)

    w2 = lin_w(ks[0], rank, in_ch * in_ch)          # proj['2'].weight
    w3 = lin_w(ks[1], rank, in_ch)                  # proj['3'].weight
    w4 = lin_w(ks[2], rank, in_ch)                  # proj['4'].weight
    wf = lin_w(ks[3], out_dim, rank * 3)            # fuse[0].weight
    bf = lin_b(ks[4], out_dim, rank * 3)            # fuse[0].bias
    wc1 = lin_w(ks[5], hidden, out_dim)             # fc[0].weight
    bc1 = lin_b(ks[6], hidden, out_dim)             # fc[0].bias
    wc2 = lin_w(ks[7], in_ch, hidden)               # fc[2].weight
    bc2 = lin_b(ks[8], in_ch, hidden)               # fc[2].bias
    rand = jax.random.normal(ks[9], (in_ch,), jnp.float32)
    rand = rand / jnp.sqrt(jnp.sum(rand * rand))    # random_tensor / ||.||_2

    return dict(
        # kernel-friendly layouts (pre-transposed / split / row & column vecs)
        rand_col=rand[:, None],                               # (C, 1)
        w2_3=w2.T.reshape(in_ch, in_ch, rank),                # (C, C, rank)
        w3t=w3.T, w4t=w4.T,                                   # (C, rank)
        wfa_t=wf[:, 0:rank].T,                                # (rank, out_dim)
        wfb_t=wf[:, rank:2 * rank].T,                         # (rank, out_dim)
        wfc_t=wf[:, 2 * rank:3 * rank].T,                     # (rank, out_dim)
        bf_row=bf[None, :],                                   # (1, out_dim)
        wc1=wc1,                                              # (hidden, out_dim)
        bc1_col=bc1[:, None],                                 # (hidden, 1)
        wc2=wc2,                                              # (C, hidden)
        bc2_col=bc2[:, None],                                 # (C, 1)
        # originals for the pure-JAX reference
        _w2=w2, _w3=w3, _w4=w4, _wf=wf, _bf=bf,
        _wc1=wc1, _bc1=bc1, _wc2=wc2, _bc2=bc2, rand=rand,
    )


# -------------- pure-JAX reference (mirrors the PyTorch forward) --------------
def reference(x, p):
    B, C, H, W = x.shape
    xn = x - x.mean(axis=(-1, -2), keepdims=True)
    xf = xn.reshape(B, C, -1)
    N = xf.shape[-1]
    cov = jnp.einsum("bck,bdk->bcd", xf, xf) / N
    f2 = cov.reshape(B, -1) @ p["_w2"].T
    m3 = jnp.sum(xn * p["rand"].reshape(1, C, 1, 1), axis=(-1, -2))
    f3 = m3 @ p["_w3"].T
    xm = xn.mean(axis=(-1, -2))
    c4 = (xn ** 2).mean(axis=(-1, -2)) - 3.0 * xm ** 2
    f4 = c4 @ p["_w4"].T
    fused = jnp.concatenate([f2, f3, f4], axis=-1)
    mu = fused.mean(-1, keepdims=True)
    var = ((fused - mu) ** 2).mean(-1, keepdims=True)
    fused = (fused - mu) / jnp.sqrt(var + 1e-5)
    h = fused @ p["_wf"].T + p["_bf"]
    h = h * jnp.tanh(jax.nn.softplus(h))
    t = jax.nn.relu(h @ p["_wc1"].T + p["_bc1"])
    s = jax.nn.sigmoid(t @ p["_wc2"].T + p["_bc2"])
    return x * s[:, :, None, None]


if __name__ == "__main__":
    key = jax.random.PRNGKey(0)
    kx, kp = jax.random.split(key)
    B, C, H, W = 2, 4, 16, 16
    x = jax.random.normal(kx, (B, C, H, W), jnp.float32)
    params = init_params(kp, in_ch=C, out_dim=128, rank=32, reduction=16)

    out = jax.block_until_ready(homa_channel_gate(x, params))
    ref = jax.block_until_ready(reference(x, params))

    assert out.shape == (B, C, H, W)
    np.testing.assert_allclose(np.asarray(out), np.asarray(ref),
                               rtol=2e-3, atol=2e-4)
    print("KERNEL_OK")
</pallas_src>

<mosaic_0001>
module attributes {stable_mosaic.version = 11 : i64} {
  func.func @_fused_kernel(%arg0: i32, %arg1: memref<1x4x256xf32, #tpu.memory_space<vmem>>, %arg2: memref<4x1xf32, #tpu.memory_space<vmem>>, %arg3: memref<4x4x32xf32, #tpu.memory_space<vmem>>, %arg4: memref<4x32xf32, #tpu.memory_space<vmem>>, %arg5: memref<4x32xf32, #tpu.memory_space<vmem>>, %arg6: memref<32x128xf32, #tpu.memory_space<vmem>>, %arg7: memref<32x128xf32, #tpu.memory_space<vmem>>, %arg8: memref<32x128xf32, #tpu.memory_space<vmem>>, %arg9: memref<1x128xf32, #tpu.memory_space<vmem>>, %arg10: memref<4x128xf32, #tpu.memory_space<vmem>>, %arg11: memref<4x1xf32, #tpu.memory_space<vmem>>, %arg12: memref<4x4xf32, #tpu.memory_space<vmem>>, %arg13: memref<4x1xf32, #tpu.memory_space<vmem>>, %arg14: memref<1x4x256xf32, #tpu.memory_space<vmem>>) attributes {dimension_semantics = [#tpu.dimension_semantics<parallel>], iteration_bounds = array<i64: 2>, scalar_prefetch = 0 : i64, scratch_operands = 0 : i64, tpu.core_type = #tpu.core_type<tc>, window_params = [{transform_indices = @transform_0, window_bounds = array<i64: 1, 4, 256>}, {pipeline_mode = #tpu.pipeline_mode<synchronous>, transform_indices = @transform_1, window_bounds = array<i64: 4, 1>}, {pipeline_mode = #tpu.pipeline_mode<synchronous>, transform_indices = @transform_2, window_bounds = array<i64: 4, 4, 32>}, {pipeline_mode = #tpu.pipeline_mode<synchronous>, transform_indices = @transform_3, window_bounds = array<i64: 4, 32>}, {pipeline_mode = #tpu.pipeline_mode<synchronous>, transform_indices = @transform_4, window_bounds = array<i64: 4, 32>}, {pipeline_mode = #tpu.pipeline_mode<synchronous>, transform_indices = @transform_5, window_bounds = array<i64: 32, 128>}, {pipeline_mode = #tpu.pipeline_mode<synchronous>, transform_indices = @transform_6, window_bounds = array<i64: 32, 128>}, {pipeline_mode = #tpu.pipeline_mode<synchronous>, transform_indices = @transform_7, window_bounds = array<i64: 32, 128>}, {pipeline_mode = #tpu.pipeline_mode<synchronous>, transform_indices = @transform_8, window_bounds = array<i64: 1, 128>}, {pipeline_mode = #tpu.pipeline_mode<synchronous>, transform_indices = @transform_9, window_bounds = array<i64: 4, 128>}, {pipeline_mode = #tpu.pipeline_mode<synchronous>, transform_indices = @transform_10, window_bounds = array<i64: 4, 1>}, {pipeline_mode = #tpu.pipeline_mode<synchronous>, transform_indices = @transform_11, window_bounds = array<i64: 4, 4>}, {pipeline_mode = #tpu.pipeline_mode<synchronous>, transform_indices = @transform_12, window_bounds = array<i64: 4, 1>}, {transform_indices = @transform_13, window_bounds = array<i64: 1, 4, 256>}]} {
    %c0 = arith.constant 0 : index
    %c0_0 = arith.constant 0 : index
    %c0_1 = arith.constant 0 : index
    %0 = vector.load %arg1[%c0, %c0_0, %c0_1] : memref<1x4x256xf32, #tpu.memory_space<vmem>>, vector<1x4x256xf32>
    %cst = arith.constant dense<0.000000e+00> : vector<1x4xf32>
    %1 = vector.multi_reduction <add>, %0, %cst [2] : vector<1x4x256xf32> to vector<1x4xf32>
    %2 = vector.shape_cast %1 : vector<1x4xf32> to vector<1x4x1xf32>
    %cst_2 = arith.constant 3.906250e-03 : f32
    %3 = vector.broadcast %cst_2 : f32 to vector<1x4x1xf32>
    %4 = arith.mulf %2, %3 : vector<1x4x1xf32>
    %5 = vector.broadcast %4 : vector<1x4x1xf32> to vector<1x4x256xf32>
    %6 = arith.subf %0, %5 : vector<1x4x256xf32>
    "tpu.trace_start"() <{level = 10 : i32, message = "bik,bjk->bij"}> : () -> ()
    %cst_3 = arith.constant dense<0.000000e+00> : vector<1x4x4xf32>
    %7 = tpu.matmul %6, %6, %cst_3 {dimension_numbers = #tpu.dot_dimension_numbers<[2], [2], [1], [1], [0, 0, 0, 1, 1, 1], [0], [0]>, precision = #tpu.contract_precision<fp32>} : vector<1x4x256xf32>, vector<1x4x256xf32>, vector<1x4x4xf32> -> vector<1x4x4xf32>
    "tpu.trace_stop"() : () -> ()
    %cst_4 = arith.constant 3.906250e-03 : f32
    %8 = vector.broadcast %cst_4 : f32 to vector<1x4x4xf32>
    %9 = arith.mulf %7, %8 : vector<1x4x4xf32>
    %c0_5 = arith.constant 0 : index
    %c0_6 = arith.constant 0 : index
    %10 = vector.load %arg2[%c0_5, %c0_6] : memref<4x1xf32, #tpu.memory_space<vmem>>, vector<4x1xf32>
    %11 = vector.shape_cast %10 : vector<4x1xf32> to vector<1x4x1xf32>
    %12 = vector.broadcast %11 : vector<1x4x1xf32> to vector<1x4x256xf32>
    %13 = arith.mulf %6, %12 : vector<1x4x256xf32>
    %cst_7 = arith.constant dense<0.000000e+00> : vector<1x4xf32>
    %14 = vector.multi_reduction <add>, %13, %cst_7 [2] : vector<1x4x256xf32> to vector<1x4xf32>
    %15 = vector.shape_cast %14 : vector<1x4xf32> to vector<1x4x1xf32>
    %16 = tpu.iota {dimensions = array<i32: 0>} : vector<4x4xi32>
    %17 = tpu.iota {dimensions = array<i32: 1>} : vector<4x4xi32>
    %18 = arith.cmpi eq, %16, %17 : vector<4x4xi32>
    %19 = arith.extui %18 : vector<4x4xi1> to vector<4x4xi32>
    %20 = arith.sitofp %19 : vector<4x4xi32> to vector<4x4xf32>
    %21 = vector.shape_cast %9 : vector<1x4x4xf32> to vector<4x4xf32>
    %c0_8 = arith.constant 0 : index
    %c0_9 = arith.constant 0 : index
    %c0_10 = arith.constant 0 : index
    %22 = vector.load %arg3[%c0_8, %c0_9, %c0_10] : memref<4x4x32xf32, #tpu.memory_space<vmem>>, vector<1x4x32xf32>
    %23 = vector.shape_cast %22 : vector<1x4x32xf32> to vector<4x32xf32>
    %24 = vector.extract_strided_slice %21 {offsets = [0, 0], sizes = [4, 1], strides = [1, 1]} : vector<4x4xf32> to vector<4x1xf32>
    %25 = vector.broadcast %24 : vector<4x1xf32> to vector<4x32xf32>
    %26 = arith.mulf %23, %25 : vector<4x32xf32>
    %cst_11 = arith.constant dense<0.000000e+00> : vector<32xf32>
    %27 = vector.multi_reduction <add>, %26, %cst_11 [0] : vector<4x32xf32> to vector<32xf32>
    %28 = vector.shape_cast %27 : vector<32xf32> to vector<1x32xf32>
    %c1 = arith.constant 1 : index
    %c0_12 = arith.constant 0 : index
    %c0_13 = arith.constant 0 : index
    %29 = vector.load %arg3[%c1, %c0_12, %c0_13] : memref<4x4x32xf32, #tpu.memory_space<vmem>>, vector<1x4x32xf32>
    %30 = vector.shape_cast %29 : vector<1x4x32xf32> to vector<4x32xf32>
    %31 = vector.extract_strided_slice %21 {offsets = [0, 1], sizes = [4, 1], strides = [1, 1]} : vector<4x4xf32> to vector<4x1xf32>
    %32 = vector.broadcast %31 : vector<4x1xf32> to vector<4x32xf32>
    %33 = arith.mulf %30, %32 : vector<4x32xf32>
    %cst_14 = arith.constant dense<0.000000e+00> : vector<32xf32>
    %34 = vector.multi_reduction <add>, %33, %cst_14 [0] : vector<4x32xf32> to vector<32xf32>
    %35 = vector.shape_cast %34 : vector<32xf32> to vector<1x32xf32>
    %36 = arith.addf %28, %35 : vector<1x32xf32>
    %c2 = arith.constant 2 : index
    %c0_15 = arith.constant 0 : index
    %c0_16 = arith.constant 0 : index
    %37 = vector.load %arg3[%c2, %c0_15, %c0_16] : memref<4x4x32xf32, #tpu.memory_space<vmem>>, vector<1x4x32xf32>
    %38 = vector.shape_cast %37 : vector<1x4x32xf32> to vector<4x32xf32>
    %39 = vector.extract_strided_slice %21 {offsets = [0, 2], sizes = [4, 1], strides = [1, 1]} : vector<4x4xf32> to vector<4x1xf32>
    %40 = vector.broadcast %39 : vector<4x1xf32> to vector<4x32xf32>
    %41 = arith.mulf %38, %40 : vector<4x32xf32>
    %cst_17 = arith.constant dense<0.000000e+00> : vector<32xf32>
    %42 = vector.multi_reduction <add>, %41, %cst_17 [0] : vector<4x32xf32> to vector<32xf32>
    %43 = vector.shape_cast %42 : vector<32xf32> to vector<1x32xf32>
    %44 = arith.addf %36, %43 : vector<1x32xf32>
    %c3 = arith.constant 3 : index
    %c0_18 = arith.constant 0 : index
    %c0_19 = arith.constant 0 : index
    %45 = vector.load %arg3[%c3, %c0_18, %c0_19] : memref<4x4x32xf32, #tpu.memory_space<vmem>>, vector<1x4x32xf32>
    %46 = vector.shape_cast %45 : vector<1x4x32xf32> to vector<4x32xf32>
    %47 = vector.extract_strided_slice %21 {offsets = [0, 3], sizes = [4, 1], strides = [1, 1]} : vector<4x4xf32> to vector<4x1xf32>
    %48 = vector.broadcast %47 : vector<4x1xf32> to vector<4x32xf32>
    %49 = arith.mulf %46, %48 : vector<4x32xf32>
    %cst_20 = arith.constant dense<0.000000e+00> : vector<32xf32>
    %50 = vector.multi_reduction <add>, %49, %cst_20 [0] : vector<4x32xf32> to vector<32xf32>
    %51 = vector.shape_cast %50 : vector<32xf32> to vector<1x32xf32>
    %52 = arith.addf %44, %51 : vector<1x32xf32>
    %c0_21 = arith.constant 0 : index
    %c0_22 = arith.constant 0 : index
    %53 = vector.load %arg4[%c0_21, %c0_22] : memref<4x32xf32, #tpu.memory_space<vmem>>, vector<4x32xf32>
    %54 = vector.shape_cast %15 : vector<1x4x1xf32> to vector<4x1xf32>
    %55 = vector.broadcast %54 : vector<4x1xf32> to vector<4x32xf32>
    %56 = arith.mulf %53, %55 : vector<4x32xf32>
    %cst_23 = arith.constant dense<0.000000e+00> : vector<32xf32>
    %57 = vector.multi_reduction <add>, %56, %cst_23 [0] : vector<4x32xf32> to vector<32xf32>
    %58 = vector.shape_cast %57 : vector<32xf32> to vector<1x32xf32>
    %59 = arith.mulf %21, %20 : vector<4x4xf32>
    %cst_24 = arith.constant dense<0.000000e+00> : vector<4xf32>
    %60 = vector.multi_reduction <add>, %59, %cst_24 [1] : vector<4x4xf32> to vector<4xf32>
    %61 = vector.shape_cast %60 : vector<4xf32> to vector<4x1xf32>
    %c0_25 = arith.constant 0 : index
    %c0_26 = arith.constant 0 : index
    %62 = vector.load %arg5[%c0_25, %c0_26] : memref<4x32xf32, #tpu.memory_space<vmem>>, vector<4x32xf32>
    %63 = vector.broadcast %61 : vector<4x1xf32> to vector<4x32xf32>
    %64 = arith.mulf %62, %63 : vector<4x32xf32>
    %cst_27 = arith.constant dense<0.000000e+00> : vector<32xf32>
    %65 = vector.multi_reduction <add>, %64, %cst_27 [0] : vector<4x32xf32> to vector<32xf32>
    %66 = vector.shape_cast %65 : vector<32xf32> to vector<1x32xf32>
    %cst_28 = arith.constant dense<0.000000e+00> : vector<1xf32>
    %67 = vector.multi_reduction <add>, %52, %cst_28 [1] : vector<1x32xf32> to vector<1xf32>
    %68 = vector.shape_cast %67 : vector<1xf32> to vector<1x1xf32>
    %cst_29 = arith.constant dense<0.000000e+00> : vector<1xf32>
    %69 = vector.multi_reduction <add>, %58, %cst_29 [1] : vector<1x32xf32> to vector<1xf32>
    %70 = vector.shape_cast %69 : vector<1xf32> to vector<1x1xf32>
    %71 = arith.addf %68, %70 : vector<1x1xf32>
    %cst_30 = arith.constant dense<0.000000e+00> : vector<1xf32>
    %72 = vector.multi_reduction <add>, %66, %cst_30 [1] : vector<1x32xf32> to vector<1xf32>
    %73 = vector.shape_cast %72 : vector<1xf32> to vector<1x1xf32>
    %74 = arith.addf %71, %73 : vector<1x1xf32>
    %cst_31 = arith.constant 9.600000e+01 : f32
    %75 = vector.broadcast %cst_31 : f32 to vector<1x1xf32>
    %76 = arith.divf %74, %75 : vector<1x1xf32>
    %77 = vector.broadcast %76 : vector<1x1xf32> to vector<1x32xf32>
    %78 = arith.subf %52, %77 : vector<1x32xf32>
    %79 = arith.mulf %78, %78 : vector<1x32xf32>
    %cst_32 = arith.constant dense<0.000000e+00> : vector<1xf32>
    %80 = vector.multi_reduction <add>, %79, %cst_32 [1] : vector<1x32xf32> to vector<1xf32>
    %81 = vector.shape_cast %80 : vector<1xf32> to vector<1x1xf32>
    %82 = vector.broadcast %76 : vector<1x1xf32> to vector<1x32xf32>
    %83 = arith.subf %58, %82 : vector<1x32xf32>
    %84 = arith.mulf %83, %83 : vector<1x32xf32>
    %cst_33 = arith.constant dense<0.000000e+00> : vector<1xf32>
    %85 = vector.multi_reduction <add>, %84, %cst_33 [1] : vector<1x32xf32> to vector<1xf32>
    %86 = vector.shape_cast %85 : vector<1xf32> to vector<1x1xf32>
    %87 = arith.addf %81, %86 : vector<1x1xf32>
    %88 = vector.broadcast %76 : vector<1x1xf32> to vector<1x32xf32>
    %89 = arith.subf %66, %88 : vector<1x32xf32>
    %90 = arith.mulf %89, %89 : vector<1x32xf32>
    %cst_34 = arith.constant dense<0.000000e+00> : vector<1xf32>
    %91 = vector.multi_reduction <add>, %90, %cst_34 [1] : vector<1x32xf32> to vector<1xf32>
    %92 = vector.shape_cast %91 : vector<1xf32> to vector<1x1xf32>
    %93 = arith.addf %87, %92 : vector<1x1xf32>
    %cst_35 = arith.constant 9.600000e+01 : f32
    %94 = vector.broadcast %cst_35 : f32 to vector<1x1xf32>
    %95 = arith.divf %93, %94 : vector<1x1xf32>
    %cst_36 = arith.constant 9.99999974E-6 : f32
    %96 = vector.broadcast %cst_36 : f32 to vector<1x1xf32>
    %97 = arith.addf %95, %96 : vector<1x1xf32>
    %98 = math.rsqrt %97 : vector<1x1xf32>
    %99 = vector.broadcast %76 : vector<1x1xf32> to vector<1x32xf32>
    %100 = arith.subf %52, %99 : vector<1x32xf32>
    %101 = vector.broadcast %98 : vector<1x1xf32> to vector<1x32xf32>
    %102 = arith.mulf %100, %101 : vector<1x32xf32>
    %103 = vector.broadcast %76 : vector<1x1xf32> to vector<1x32xf32>
    %104 = arith.subf %58, %103 : vector<1x32xf32>
    %105 = vector.broadcast %98 : vector<1x1xf32> to vector<1x32xf32>
    %106 = arith.mulf %104, %105 : vector<1x32xf32>
    %107 = vector.broadcast %76 : vector<1x1xf32> to vector<1x32xf32>
    %108 = arith.subf %66, %107 : vector<1x32xf32>
    %109 = vector.broadcast %98 : vector<1x1xf32> to vector<1x32xf32>
    %110 = arith.mulf %108, %109 : vector<1x32xf32>
    %c0_37 = arith.constant 0 : index
    %c0_38 = arith.constant 0 : index
    %111 = vector.load %arg6[%c0_37, %c0_38] : memref<32x128xf32, #tpu.memory_space<vmem>>, vector<32x128xf32>
    %cst_39 = arith.constant dense<0.000000e+00> : vector<1x128xf32>
    %112 = tpu.matmul %102, %111, %cst_39 {dimension_numbers = #tpu.dot_dimension_numbers<[1], [0], [0], [1], [0, 0, 1, 1], [], []>, precision = #tpu.contract_precision<fp32>} : vector<1x32xf32>, vector<32x128xf32>, vector<1x128xf32> -> vector<1x128xf32>
    %c0_40 = arith.constant 0 : index
    %c0_41 = arith.constant 0 : index
    %113 = vector.load %arg7[%c0_40, %c0_41] : memref<32x128xf32, #tpu.memory_space<vmem>>, vector<32x128xf32>
    %cst_42 = arith.constant dense<0.000000e+00> : vector<1x128xf32>
    %114 = tpu.matmul %106, %113, %cst_42 {dimension_numbers = #tpu.dot_dimension_numbers<[1], [0], [0], [1], [0, 0, 1, 1], [], []>, precision = #tpu.contract_precision<fp32>} : vector<1x32xf32>, vector<32x128xf32>, vector<1x128xf32> -> vector<1x128xf32>
    %115 = arith.addf %112, %114 : vector<1x128xf32>
    %c0_43 = arith.constant 0 : index
    %c0_44 = arith.constant 0 : index
    %116 = vector.load %arg8[%c0_43, %c0_44] : memref<32x128xf32, #tpu.memory_space<vmem>>, vector<32x128xf32>
    %cst_45 = arith.constant dense<0.000000e+00> : vector<1x128xf32>
    %117 = tpu.matmul %110, %116, %cst_45 {dimension_numbers = #tpu.dot_dimension_numbers<[1], [0], [0], [1], [0, 0, 1, 1], [], []>, precision = #tpu.contract_precision<fp32>} : vector<1x32xf32>, vector<32x128xf32>, vector<1x128xf32> -> vector<1x128xf32>
    %118 = arith.addf %115, %117 : vector<1x128xf32>
    %c0_46 = arith.constant 0 : index
    %c0_47 = arith.constant 0 : index
    %119 = vector.load %arg9[%c0_46, %c0_47] : memref<1x128xf32, #tpu.memory_space<vmem>>, vector<1x128xf32>
    %120 = arith.addf %118, %119 : vector<1x128xf32>
    %cst_48 = arith.constant 0.000000e+00 : f32
    %121 = vector.broadcast %cst_48 : f32 to vector<1x128xf32>
    %122 = arith.maximumf %120, %121 : vector<1x128xf32>
    %123 = math.absf %120 : vector<1x128xf32>
    %cst_49 = arith.constant 0.000000e+00 : f32
    %124 = vector.broadcast %cst_49 : f32 to vector<1x128xf32>
    %125 = arith.subf %124, %123 : vector<1x128xf32>
    %126 = math.exp %125 : vector<1x128xf32>
    %127 = math.log1p %126 : vector<1x128xf32>
    %128 = arith.addf %122, %127 : vector<1x128xf32>
    %129 = math.tanh %128 : vector<1x128xf32>
    %130 = arith.mulf %120, %129 : vector<1x128xf32>
    %c0_50 = arith.constant 0 : index
    %c0_51 = arith.constant 0 : index
    %131 = vector.load %arg10[%c0_50, %c0_51] : memref<4x128xf32, #tpu.memory_space<vmem>>, vector<4x128xf32>
    %132 = vector.broadcast %130 : vector<1x128xf32> to vector<4x128xf32>
    %133 = arith.mulf %131, %132 : vector<4x128xf32>
    %cst_52 = arith.constant dense<0.000000e+00> : vector<4xf32>
    %134 = vector.multi_reduction <add>, %133, %cst_52 [1] : vector<4x128xf32> to vector<4xf32>
    %135 = vector.shape_cast %134 : vector<4xf32> to vector<4x1xf32>
    %c0_53 = arith.constant 0 : index
    %c0_54 = arith.constant 0 : index
    %136 = vector.load %arg11[%c0_53, %c0_54] : memref<4x1xf32, #tpu.memory_space<vmem>>, vector<4x1xf32>
    %137 = arith.addf %135, %136 : vector<4x1xf32>
    %cst_55 = arith.constant 0.000000e+00 : f32
    %138 = vector.broadcast %cst_55 : f32 to vector<4x1xf32>
    %139 = arith.maximumf %137, %138 : vector<4x1xf32>
    %c0_56 = arith.constant 0 : index
    %c0_57 = arith.constant 0 : index
    %140 = vector.load %arg12[%c0_56, %c0_57] : memref<4x4xf32, #tpu.memory_space<vmem>>, vector<4x4xf32>
    %cst_58 = arith.constant dense<0.000000e+00> : vector<4x1xf32>
    %141 = tpu.matmul %140, %139, %cst_58 {dimension_numbers = #tpu.dot_dimension_numbers<[1], [0], [0], [1], [0, 0, 1, 1], [], []>, precision = #tpu.contract_precision<fp32>} : vector<4x4xf32>, vector<4x1xf32>, vector<4x1xf32> -> vector<4x1xf32>
    %c0_59 = arith.constant 0 : index
    %c0_60 = arith.constant 0 : index
    %142 = vector.load %arg13[%c0_59, %c0_60] : memref<4x1xf32, #tpu.memory_space<vmem>>, vector<4x1xf32>
    %143 = arith.addf %141, %142 : vector<4x1xf32>
    %cst_61 = arith.constant 5.000000e-01 : f32
    %144 = vector.broadcast %cst_61 : f32 to vector<4x1xf32>
    %145 = arith.mulf %144, %143 : vector<4x1xf32>
    %146 = math.tanh %145 : vector<4x1xf32>
    %cst_62 = arith.constant 1.000000e+00 : f32
    %147 = vector.broadcast %cst_62 : f32 to vector<4x1xf32>
    %148 = arith.addf %146, %147 : vector<4x1xf32>
    %cst_63 = arith.constant 5.000000e-01 : f32
    %149 = vector.broadcast %cst_63 : f32 to vector<4x1xf32>
    %150 = arith.mulf %149, %148 : vector<4x1xf32>
    %151 = vector.shape_cast %0 : vector<1x4x256xf32> to vector<4x256xf32>
    %152 = vector.broadcast %150 : vector<4x1xf32> to vector<4x256xf32>
    %153 = arith.mulf %151, %152 : vector<4x256xf32>
    %c0_64 = arith.constant 0 : index
    %c0_65 = arith.constant 0 : index
    %c0_66 = arith.constant 0 : index
    %154 = vector.load %arg14[%c0_64, %c0_65, %c0_66] : memref<1x4x256xf32, #tpu.memory_space<vmem>>, vector<1x4x256xf32>
    %155 = vector.shape_cast %154 : vector<1x4x256xf32> to vector<4x256xf32>
    %156 = vector.shape_cast %153 : vector<4x256xf32> to vector<1x4x256xf32>
    tpu.vector_store %arg14[%c0_64, %c0_65, %c0_66], %156 {strides = array<i32>} : memref<1x4x256xf32, #tpu.memory_space<vmem>>, vector<1x4x256xf32>,
    return
  }
  func.func @transform_0(%arg0: i32) -> (i32, i32, i32) {
    %c0_i32 = arith.constant 0 : i32
    %c0_i32_0 = arith.constant 0 : i32
    %c0_i32_1 = arith.constant 0 : i32
    return %arg0, %c0_i32, %c0_i32_0 : i32, i32, i32
  }
  func.func @transform_1(%arg0: i32) -> (i32, i32) {
    %c0_i32 = arith.constant 0 : i32
    %c0_i32_0 = arith.constant 0 : i32
    %c0_i32_1 = arith.constant 0 : i32
    return %c0_i32, %c0_i32_0 : i32, i32
  }
  func.func @transform_2(%arg0: i32) -> (i32, i32, i32) {
    %c0_i32 = arith.constant 0 : i32
    %c0_i32_0 = arith.constant 0 : i32
    %c0_i32_1 = arith.constant 0 : i32
    %c0_i32_2 = arith.constant 0 : i32
    return %c0_i32, %c0_i32_0, %c0_i32_1 : i32, i32, i32
  }
  func.func @transform_3(%arg0: i32) -> (i32, i32) {
    %c0_i32 = arith.constant 0 : i32
    %c0_i32_0 = arith.constant 0 : i32
    %c0_i32_1 = arith.constant 0 : i32
    return %c0_i32, %c0_i32_0 : i32, i32
  }
  func.func @transform_4(%arg0: i32) -> (i32, i32) {
    %c0_i32 = arith.constant 0 : i32
    %c0_i32_0 = arith.constant 0 : i32
    %c0_i32_1 = arith.constant 0 : i32
    return %c0_i32, %c0_i32_0 : i32, i32
  }
  func.func @transform_5(%arg0: i32) -> (i32, i32) {
    %c0_i32 = arith.constant 0 : i32
    %c0_i32_0 = arith.constant 0 : i32
    %c0_i32_1 = arith.constant 0 : i32
    return %c0_i32, %c0_i32_0 : i32, i32
  }
  func.func @transform_6(%arg0: i32) -> (i32, i32) {
    %c0_i32 = arith.constant 0 : i32
    %c0_i32_0 = arith.constant 0 : i32
    %c0_i32_1 = arith.constant 0 : i32
    return %c0_i32, %c0_i32_0 : i32, i32
  }
  func.func @transform_7(%arg0: i32) -> (i32, i32) {
    %c0_i32 = arith.constant 0 : i32
    %c0_i32_0 = arith.constant 0 : i32
    %c0_i32_1 = arith.constant 0 : i32
    return %c0_i32, %c0_i32_0 : i32, i32
  }
  func.func @transform_8(%arg0: i32) -> (i32, i32) {
    %c0_i32 = arith.constant 0 : i32
    %c0_i32_0 = arith.constant 0 : i32
    %c0_i32_1 = arith.constant 0 : i32
    return %c0_i32, %c0_i32_0 : i32, i32
  }
  func.func @transform_9(%arg0: i32) -> (i32, i32) {
    %c0_i32 = arith.constant 0 : i32
    %c0_i32_0 = arith.constant 0 : i32
    %c0_i32_1 = arith.constant 0 : i32
    return %c0_i32, %c0_i32_0 : i32, i32
  }
  func.func @transform_10(%arg0: i32) -> (i32, i32) {
    %c0_i32 = arith.constant 0 : i32
    %c0_i32_0 = arith.constant 0 : i32
    %c0_i32_1 = arith.constant 0 : i32
    return %c0_i32, %c0_i32_0 : i32, i32
  }
  func.func @transform_11(%arg0: i32) -> (i32, i32) {
    %c0_i32 = arith.constant 0 : i32
    %c0_i32_0 = arith.constant 0 : i32
    %c0_i32_1 = arith.constant 0 : i32
    return %c0_i32, %c0_i32_0 : i32, i32
  }
  func.func @transform_12(%arg0: i32) -> (i32, i32) {
    %c0_i32 = arith.constant 0 : i32
    %c0_i32_0 = arith.constant 0 : i32
    %c0_i32_1 = arith.constant 0 : i32
    return %c0_i32, %c0_i32_0 : i32, i32
  }
  func.func @transform_13(%arg0: i32) -> (i32, i32, i32) {
    %c0_i32 = arith.constant 0 : i32
    %c0_i32_0 = arith.constant 0 : i32
    %c0_i32_1 = arith.constant 0 : i32
    return %arg0, %c0_i32, %c0_i32_0 : i32, i32, i32
  }
}

</mosaic_0001>

<llo_original>
// kernel: tpu_custom_call.1
$region0: #{tpu_custom_call.1}
  #allocation0 [shape = 'u32[]', space=smem, size = 0x4, offset = 0x4, fixed_abs, tag = 'smem constant byte address 0x4 - core index']
  #allocation1 [shape = 'u32[144,128]{1,0:T(1,128)}', space=vmem, size = 0x12000, scoped, tag = 'internal scratch']
  %s0 = inlined_call_operand.hbm [shape: f32[2,4,256], index: 0, kind: input, shape index: {}]
  %s1 = inlined_call_operand.vmem [shape: f32[4,1], index: 1, kind: input, shape index: {}]
  %s2 = inlined_call_operand.vmem [shape: f32[4,4,32], index: 2, kind: input, shape index: {}]
  %s3 = inlined_call_operand.vmem [shape: f32[4,32], index: 3, kind: input, shape index: {}]
  %s4 = inlined_call_operand.hbm [shape: f32[4,32], index: 4, kind: input, shape index: {}]
  %s5 = inlined_call_operand.hbm [shape: f32[32,128], index: 5, kind: input, shape index: {}]
  %s6 = inlined_call_operand.hbm [shape: f32[32,128], index: 6, kind: input, shape index: {}]
  %s7 = inlined_call_operand.hbm [shape: f32[32,128], index: 7, kind: input, shape index: {}]
  %s8 = inlined_call_operand.hbm [shape: f32[1,128], index: 8, kind: input, shape index: {}]
  %s9 = inlined_call_operand.vmem [shape: f32[4,128], index: 9, kind: input, shape index: {}]
  %s10 = inlined_call_operand.vmem [shape: f32[4,1], index: 10, kind: input, shape index: {}]
  %s11 = inlined_call_operand.vmem [shape: f32[4,4], index: 11, kind: input, shape index: {}]
  %s12 = inlined_call_operand.vmem [shape: f32[4,1], index: 12, kind: input, shape index: {}]
  %s13 = inlined_call_operand.hbm [shape: f32[2,4,256], index: 13, kind: output, shape index: {}]
  %s14 = sld [smem:[#allocation0]]
  $region109: #{tpu_custom_call.1} parent=0
    _
  %s16 = ssub.s32 1, %s14
  %s17 = scalar_select 0, %s16, %s14
  $region1: #{tpu_custom_call.1} parent=0
    #allocation2 [shape = 'u8[8192]{0}', space=vmem, size = 0x2000, scoped, tag = 'input window, operand 0']
    #allocation3 [shape = 's32[2]{0}', space=sflag, size = 0x8, scoped, tag = 'scoped memory for tpu_custom_call.1']
    #allocation4 [shape = 's32[2]{0}', space=sflag, size = 0x8, scoped, tag = 'scoped memory for tpu_custom_call.1']
    #allocation5 [shape = 'u8[2048]{0}', space=vmem, size = 0x800, scoped, tag = 'input window, operand 4, single buffered']
    #allocation6 [shape = 's32[1]{0}', space=sflag, size = 0x4, scoped, tag = 'scoped memory for tpu_custom_call.1']
    #allocation7 [shape = 'u8[16384]{0}', space=vmem, size = 0x4000, scoped, tag = 'input window, operand 5, single buffered']
    #allocation8 [shape = 'u8[16384]{0}', space=vmem, size = 0x4000, scoped, tag = 'input window, operand 6, single buffered']
    #allocation9 [shape = 's32[1]{0}', space=sflag, size = 0x4, scoped, tag = 'scoped memory for tpu_custom_call.1']
    #allocation10 [shape = 'u8[16384]{0}', space=vmem, size = 0x4000, scoped, tag = 'input window, operand 7, single buffered']
    #allocation11 [shape = 'u8[512]{0}', space=vmem, size = 0x400, scoped, tag = 'input window, operand 8, single buffered']
    #allocation12 [shape = 's32[1]{0}', space=sflag, size = 0x4, scoped, tag = 'scoped memory for tpu_custom_call.1']
    #allocation13 [shape = 'u8[8192]{0}', space=vmem, size = 0x2000, scoped, tag = 'output window, operand 0']
    %18 = vsyncpa [#allocation3], 0
    %s19 = scalar_lea.sflag [#allocation3], 1
    %20 = vsyncpa %s19, 0
    %21 = vsyncpa [#allocation6], 0
    %22 = vsyncpa [#allocation9], 0
    %23 = vsyncpa [#allocation12], 0
    %24 = vsyncpa [#allocation4], 0
    %s25 = scalar_lea.sflag [#allocation4], 1
    %26 = vsyncpa %s25, 0
    loop: start=0, step=1, limit=4
    $region2: #{tpu_custom_call.1} parent=1 // loop_pre_header
      _
    $region3: #{tpu_custom_call.1} parent=1 // loop_header
      %s28 = sphi 0, %s32
      %p29 = scmp.ge.s32.totalorder %s28, 4
      %s38 = sphi 0, %s40
      %s41 = sphi 0, %s38
      %s42 = sphi 0, %s41
      %s58 = sphi 0, %s42
      %s62 = sphi 0, %s62
      %s64 = sphi 0, %s62
      %s65 = sphi 0, %s64
      %s79 = sphi 0, %s65
      %s83 = sphi 0, %s83
      %s85 = sphi 0, %s83
      %s86 = sphi 0, %s85
      %s100 = sphi 0, %s86
      %s104 = sphi 0, %s104
      %s106 = sphi 0, %s104
      %s107 = sphi 0, %s106
      %s121 = sphi 0, %s107
      %s125 = sphi 0, %s125
      %s127 = sphi 0, %s125
      %s128 = sphi 0, %s127
      %s142 = sphi 0, %s128
      %s146 = sphi 0, %s146
      %s148 = sphi 0, %s146
      %s149 = sphi 0, %s148
      %s163 = sphi 0, %s149
      %s167 = sphi 0, %s167
      %s169 = sphi 0, %s167
      %s170 = sphi 0, %s169
      %s184 = sphi 0, %s170
      %s188 = sphi 0, %s188
      %s190 = sphi 0, %s188
      %s191 = sphi 0, %s190
      %s205 = sphi 0, %s191
      %s209 = sphi 0, %s209
      %s211 = sphi 0, %s209
      %s212 = sphi 0, %s211
      %s226 = sphi 0, %s212
      %s230 = sphi 0, %s230
      %s232 = sphi 0, %s230
      %s233 = sphi 0, %s232
      %s247 = sphi 0, %s233
      %s251 = sphi 0, %s251
      %s253 = sphi 0, %s251
      %s254 = sphi 0, %s253
      %s268 = sphi 0, %s254
      %s272 = sphi 0, %s272
      %s274 = sphi 0, %s272
      %s275 = sphi 0, %s274
      %s289 = sphi 0, %s275
      %s293 = sphi 0, %s293
      %s295 = sphi 0, %s293
      %s296 = sphi 0, %s295
      %s310 = sphi 0, %s296
      %s316 = sphi 0, %s318
      %s319 = sphi 0, %s316
      %s320 = sphi 0, %s319
      %s336 = sphi 0, %s320
    $region4: #{tpu_custom_call.1} parent=1 // loop_header_branch
      %31 = sbr.rel (%p29) target = $region8
    $region5: #{tpu_custom_call.1} parent=1 // loop_body
      %s33 = ssub.s32 %s28, 1
      %s34 = ssub.s32 %s28, 2
      %s35 = sadd.s32 %s28, 1
      %s36 = ssub.s32 %s28, %s35
      %p37 = scmp.eq.s32.totalorder %s36, 0
      %s39 = sadd.s32 %s38, 1
      %s40 = scalar_select %p37, %s38, %s39
      %p43 = pneg %p37
      %p44 = scmp.eq.s32.totalorder %s28, 1
      %p45 = por %p43, %p44
      %p46 = scmp.ne.s32.totalorder %s38, %s41
      %p47 = scmp.eq.s32.totalorder %s28, 0
      %p48 = por %p46, %p47
      %p49 = scmp.ne.s32.totalorder %s38, %s41
      %p50 = scmp.eq.s32.totalorder %s33, 1
      %p51 = por %p49, %p50
      %p52 = scmp.ne.s32.totalorder %s41, %s42
      %p53 = scmp.eq.s32.totalorder %s33, 0
      %p54 = por %p52, %p53
      %p55 = scmp.ne.s32.totalorder %s41, %s42
      %p56 = scmp.eq.s32.totalorder %s34, 1
      %p57 = por %p55, %p56
      %p59 = scmp.ne.s32.totalorder %s42, %s58
      %p60 = scmp.eq.s32.totalorder %s34, 0
      %p61 = por %p59, %p60
      %s63 = sadd.s32 %s62, 1
      %p66 = scmp.eq.s32.totalorder %s28, 1
      %p67 = scmp.ne.s32.totalorder %s62, %s64
      %p68 = scmp.eq.s32.totalorder %s28, 0
      %p69 = por %p67, %p68
      %p70 = scmp.ne.s32.totalorder %s62, %s64
      %p71 = scmp.eq.s32.totalorder %s33, 1
      %p72 = por %p70, %p71
      %p73 = scmp.ne.s32.totalorder %s64, %s65
      %p74 = scmp.eq.s32.totalorder %s33, 0
      %p75 = por %p73, %p74
      %p76 = scmp.ne.s32.totalorder %s64, %s65
      %p77 = scmp.eq.s32.totalorder %s34, 1
      %p78 = por %p76, %p77
      %p80 = scmp.ne.s32.totalorder %s65, %s79
      %p81 = scmp.eq.s32.totalorder %s34, 0
      %p82 = por %p80, %p81
      %s84 = sadd.s32 %s83, 1
      %p87 = scmp.eq.s32.totalorder %s28, 1
      %p88 = scmp.ne.s32.totalorder %s83, %s85
      %p89 = scmp.eq.s32.totalorder %s28, 0
      %p90 = por %p88, %p89
      %p91 = scmp.ne.s32.totalorder %s83, %s85
      %p92 = scmp.eq.s32.totalorder %s33, 1
      %p93 = por %p91, %p92
      %p94 = scmp.ne.s32.totalorder %s85, %s86
      %p95 = scmp.eq.s32.totalorder %s33, 0
      %p96 = por %p94, %p95
      %p97 = scmp.ne.s32.totalorder %s85, %s86
      %p98 = scmp.eq.s32.totalorder %s34, 1
      %p99 = por %p97, %p98
      %p101 = scmp.ne.s32.totalorder %s86, %s100
      %p102 = scmp.eq.s32.totalorder %s34, 0
      %p103 = por %p101, %p102
      %s105 = sadd.s32 %s104, 1
      %p108 = scmp.eq.s32.totalorder %s28, 1
      %p109 = scmp.ne.s32.totalorder %s104, %s106
      %p110 = scmp.eq.s32.totalorder %s28, 0
      %p111 = por %p109, %p110
      %p112 = scmp.ne.s32.totalorder %s104, %s106
      %p113 = scmp.eq.s32.totalorder %s33, 1
      %p114 = por %p112, %p113
      %p115 = scmp.ne.s32.totalorder %s106, %s107
      %p116 = scmp.eq.s32.totalorder %s33, 0
      %p117 = por %p115, %p116
      %p118 = scmp.ne.s32.totalorder %s106, %s107
      %p119 = scmp.eq.s32.totalorder %s34, 1
      %p120 = por %p118, %p119
      %p122 = scmp.ne.s32.totalorder %s107, %s121
      %p123 = scmp.eq.s32.totalorder %s34, 0
      %p124 = por %p122, %p123
      %s126 = sadd.s32 %s125, 1
      %p129 = scmp.eq.s32.totalorder %s28, 1
      %p130 = scmp.ne.s32.totalorder %s125, %s127
      %p131 = scmp.eq.s32.totalorder %s28, 0
      %p132 = por %p130, %p131
      %p133 = scmp.ne.s32.totalorder %s125, %s127
      %p134 = scmp.eq.s32.totalorder %s33, 1
      %p135 = por %p133, %p134
      %p136 = scmp.ne.s32.totalorder %s127, %s128
      %p137 = scmp.eq.s32.totalorder %s33, 0
      %p138 = por %p136, %p137
      %p139 = scmp.ne.s32.totalorder %s127, %s128
      %p140 = scmp.eq.s32.totalorder %s34, 1
      %p141 = por %p139, %p140
      %p143 = scmp.ne.s32.totalorder %s128, %s142
      %p144 = scmp.eq.s32.totalorder %s34, 0
      %p145 = por %p143, %p144
      %s147 = sadd.s32 %s146, 1
      %p150 = scmp.eq.s32.totalorder %s28, 1
      %p151 = scmp.ne.s32.totalorder %s146, %s148
      %p152 = scmp.eq.s32.totalorder %s28, 0
      %p153 = por %p151, %p152
      %p154 = scmp.ne.s32.totalorder %s146, %s148
      %p155 = scmp.eq.s32.totalorder %s33, 1
      %p156 = por %p154, %p155
      %p157 = scmp.ne.s32.totalorder %s148, %s149
      %p158 = scmp.eq.s32.totalorder %s33, 0
      %p159 = por %p157, %p158
      %p160 = scmp.ne.s32.totalorder %s148, %s149
      %p161 = scmp.eq.s32.totalorder %s34, 1
      %p162 = por %p160, %p161
      %p164 = scmp.ne.s32.totalorder %s149, %s163
      %p165 = scmp.eq.s32.totalorder %s34, 0
      %p166 = por %p164, %p165
      %s168 = sadd.s32 %s167, 1
      %p171 = scmp.eq.s32.totalorder %s28, 1
      %p172 = scmp.ne.s32.totalorder %s167, %s169
      %p173 = scmp.eq.s32.totalorder %s28, 0
      %p174 = por %p172, %p173
      %p175 = scmp.ne.s32.totalorder %s167, %s169
      %p176 = scmp.eq.s32.totalorder %s33, 1
      %p177 = por %p175, %p176
      %p178 = scmp.ne.s32.totalorder %s169, %s170
      %p179 = scmp.eq.s32.totalorder %s33, 0
      %p180 = por %p178, %p179
      %p181 = scmp.ne.s32.totalorder %s169, %s170
      %p182 = scmp.eq.s32.totalorder %s34, 1
      %p183 = por %p181, %p182
      %p185 = scmp.ne.s32.totalorder %s170, %s184
      %p186 = scmp.eq.s32.totalorder %s34, 0
      %p187 = por %p185, %p186
      %s189 = sadd.s32 %s188, 1
      %p192 = scmp.eq.s32.totalorder %s28, 1
      %p193 = scmp.ne.s32.totalorder %s188, %s190
      %p194 = scmp.eq.s32.totalorder %s28, 0
      %p195 = por %p193, %p194
      %p196 = scmp.ne.s32.totalorder %s188, %s190
      %p197 = scmp.eq.s32.totalorder %s33, 1
      %p198 = por %p196, %p197
      %p199 = scmp.ne.s32.totalorder %s190, %s191
      %p200 = scmp.eq.s32.totalorder %s33, 0
      %p201 = por %p199, %p200
      %p202 = scmp.ne.s32.totalorder %s190, %s191
      %p203 = scmp.eq.s32.totalorder %s34, 1
      %p204 = por %p202, %p203
      %p206 = scmp.ne.s32.totalorder %s191, %s205
      %p207 = scmp.eq.s32.totalorder %s34, 0
      %p208 = por %p206, %p207
      %s210 = sadd.s32 %s209, 1
      %p213 = scmp.eq.s32.totalorder %s28, 1
      %p214 = scmp.ne.s32.totalorder %s209, %s211
      %p215 = scmp.eq.s32.totalorder %s28, 0
      %p216 = por %p214, %p215
      %p217 = scmp.ne.s32.totalorder %s209, %s211
      %p218 = scmp.eq.s32.totalorder %s33, 1
      %p219 = por %p217, %p218
      %p220 = scmp.ne.s32.totalorder %s211, %s212
      %p221 = scmp.eq.s32.totalorder %s33, 0
      %p222 = por %p220, %p221
      %p223 = scmp.ne.s32.totalorder %s211, %s212
      %p224 = scmp.eq.s32.totalorder %s34, 1
      %p225 = por %p223, %p224
      %p227 = scmp.ne.s32.totalorder %s212, %s226
      %p228 = scmp.eq.s32.totalorder %s34, 0
      %p229 = por %p227, %p228
      %s231 = sadd.s32 %s230, 1
      %p234 = scmp.eq.s32.totalorder %s28, 1
      %p235 = scmp.ne.s32.totalorder %s230, %s232
      %p236 = scmp.eq.s32.totalorder %s28, 0
      %p237 = por %p235, %p236
      %p238 = scmp.ne.s32.totalorder %s230, %s232
      %p239 = scmp.eq.s32.totalorder %s33, 1
      %p240 = por %p238, %p239
      %p241 = scmp.ne.s32.totalorder %s232, %s233
      %p242 = scmp.eq.s32.totalorder %s33, 0
      %p243 = por %p241, %p242
      %p244 = scmp.ne.s32.totalorder %s232, %s233
      %p245 = scmp.eq.s32.totalorder %s34, 1
      %p246 = por %p244, %p245
      %p248 = scmp.ne.s32.totalorder %s233, %s247
      %p249 = scmp.eq.s32.totalorder %s34, 0
      %p250 = por %p248, %p249
      %s252 = sadd.s32 %s251, 1
      %p255 = scmp.eq.s32.totalorder %s28, 1
      %p256 = scmp.ne.s32.totalorder %s251, %s253
      %p257 = scmp.eq.s32.totalorder %s28, 0
      %p258 = por %p256, %p257
      %p259 = scmp.ne.s32.totalorder %s251, %s253
      %p260 = scmp.eq.s32.totalorder %s33, 1
      %p261 = por %p259, %p260
      %p262 = scmp.ne.s32.totalorder %s253, %s254
      %p263 = scmp.eq.s32.totalorder %s33, 0
      %p264 = por %p262, %p263
      %p265 = scmp.ne.s32.totalorder %s253, %s254
      %p266 = scmp.eq.s32.totalorder %s34, 1
      %p267 = por %p265, %p266
      %p269 = scmp.ne.s32.totalorder %s254, %s268
      %p270 = scmp.eq.s32.totalorder %s34, 0
      %p271 = por %p269, %p270
      %s273 = sadd.s32 %s272, 1
      %p276 = scmp.eq.s32.totalorder %s28, 1
      %p277 = scmp.ne.s32.totalorder %s272, %s274
      %p278 = scmp.eq.s32.totalorder %s28, 0
      %p279 = por %p277, %p278
      %p280 = scmp.ne.s32.totalorder %s272, %s274
      %p281 = scmp.eq.s32.totalorder %s33, 1
      %p282 = por %p280, %p281
      %p283 = scmp.ne.s32.totalorder %s274, %s275
      %p284 = scmp.eq.s32.totalorder %s33, 0
      %p285 = por %p283, %p284
      %p286 = scmp.ne.s32.totalorder %s274, %s275
      %p287 = scmp.eq.s32.totalorder %s34, 1
      %p288 = por %p286, %p287
      %p290 = scmp.ne.s32.totalorder %s275, %s289
      %p291 = scmp.eq.s32.totalorder %s34, 0
      %p292 = por %p290, %p291
      %s294 = sadd.s32 %s293, 1
      %p297 = scmp.eq.s32.totalorder %s28, 1
      %p298 = scmp.ne.s32.totalorder %s293, %s295
      %p299 = scmp.eq.s32.totalorder %s28, 0
      %p300 = por %p298, %p299
      %p301 = scmp.ne.s32.totalorder %s293, %s295
      %p302 = scmp.eq.s32.totalorder %s33, 1
      %p303 = por %p301, %p302
      %p304 = scmp.ne.s32.totalorder %s295, %s296
      %p305 = scmp.eq.s32.totalorder %s33, 0
      %p306 = por %p304, %p305
      %p307 = scmp.ne.s32.totalorder %s295, %s296
      %p308 = scmp.eq.s32.totalorder %s34, 1
      %p309 = por %p307, %p308
      %p311 = scmp.ne.s32.totalorder %s296, %s310
      %p312 = scmp.eq.s32.totalorder %s34, 0
      %p313 = por %p311, %p312
      %s314 = ssub.s32 %s28, %s35
      %p315 = scmp.eq.s32.totalorder %s314, 0
      %s317 = sadd.s32 %s316, 1
      %s318 = scalar_select %p315, %s316, %s317
      %p321 = pneg %p315
      %p322 = scmp.eq.s32.totalorder %s28, 1
      %p323 = por %p321, %p322
      %p324 = scmp.ne.s32.totalorder %s316, %s319
      %p325 = scmp.eq.s32.totalorder %s28, 0
      %p326 = por %p324, %p325
      %p327 = scmp.ne.s32.totalorder %s316, %s319
      %p328 = scmp.eq.s32.totalorder %s33, 1
      %p329 = por %p327, %p328
      %p330 = scmp.ne.s32.totalorder %s319, %s320
      %p331 = scmp.eq.s32.totalorder %s33, 0
      %p332 = por %p330, %p331
      %p333 = scmp.ne.s32.totalorder %s319, %s320
      %p334 = scmp.eq.s32.totalorder %s34, 1
      %p335 = por %p333, %p334
      %p337 = scmp.ne.s32.totalorder %s320, %s336
      %p338 = scmp.eq.s32.totalorder %s34, 0
      %p339 = por %p337, %p338
      %p340 = scmp.le.s32.totalorder 1, %s28
      %p341 = scmp.lt.s32.totalorder %s28, 3
      %p342 = pnand %p340, %p341
      %p343 = pneg %p342
      // Predicated region
      $region9: #{tpu_custom_call.1} parent=5 // pred_check
        _
      $region10: #{tpu_custom_call.1} parent=5 // pred_check_branch
        %345 = sbr.rel (%p342) target = $region12
      $region11: #{tpu_custom_call.1} parent=5 // pred_region
        %s346 = ssub.s32 %s28, 1
        // Predicated region
        $region13: #{tpu_custom_call.1} parent=11 // pred_check
          %p347 = pneg %p75
        $region14: #{tpu_custom_call.1} parent=11 // pred_check_branch
          %349 = sbr.rel (%p347) target = $region16
        $region15: #{tpu_custom_call.1} parent=11 // pred_region
          _
        $region16: #{tpu_custom_call.1} parent=11 // pred_fallthru
          _
        // Predicated region
        $region17: #{tpu_custom_call.1} parent=11 // pred_check
          %p350 = pneg %p96
        $region18: #{tpu_custom_call.1} parent=11 // pred_check_branch
          %352 = sbr.rel (%p350) target = $region20
        $region19: #{tpu_custom_call.1} parent=11 // pred_region
          _
        $region20: #{tpu_custom_call.1} parent=11 // pred_fallthru
          _
        // Predicated region
        $region21: #{tpu_custom_call.1} parent=11 // pred_check
          %p353 = pneg %p117
        $region22: #{tpu_custom_call.1} parent=11 // pred_check_branch
          %355 = sbr.rel (%p353) target = $region24
        $region23: #{tpu_custom_call.1} parent=11 // pred_region
          _
        $region24: #{tpu_custom_call.1} parent=11 // pred_fallthru
          _
        // Predicated region
        $region25: #{tpu_custom_call.1} parent=11 // pred_check
          %p356 = pneg %p138
        $region26: #{tpu_custom_call.1} parent=11 // pred_check_branch
          %358 = sbr.rel (%p356) target = $region28
        $region27: #{tpu_custom_call.1} parent=11 // pred_region
          %s360 = ssub.s32 64, 64
          %361 = vsyncadd [#allocation6], %s360
          %s363 = sshll.u32 [#allocation5], 4
          %s364 = int_to_ptr.vmem [resolvable:$true] %s363
          %366 = dma.hbm_to_vmem [thread:$0]  %s4, 64, %s364, [#allocation6]
        $region28: #{tpu_custom_call.1} parent=11 // pred_fallthru
          _
        // Predicated region
        $region29: #{tpu_custom_call.1} parent=11 // pred_check
          %p367 = pneg %p159
        $region30: #{tpu_custom_call.1} parent=11 // pred_check_branch
          %369 = sbr.rel (%p367) target = $region32
        $region31: #{tpu_custom_call.1} parent=11 // pred_region
          %s371 = ssub.s32 512, 512
          %372 = vsyncadd [#allocation6], %s371
          %s373 = sshll.u32 [#allocation7], 4
          %s374 = int_to_ptr.vmem [resolvable:$true] %s373
          %379 = dma.hbm_to_vmem [thread:$0]  %s5, 512, %s374, [#allocation6], 128, 128, 8
        $region32: #{tpu_custom_call.1} parent=11 // pred_fallthru
          _
        // Predicated region
        $region33: #{tpu_custom_call.1} parent=11 // pred_check
          %p380 = pneg %p180
        $region34: #{tpu_custom_call.1} parent=11 // pred_check_branch
          %382 = sbr.rel (%p380) target = $region36
        $region35: #{tpu_custom_call.1} parent=11 // pred_region
          %s384 = ssub.s32 512, 512
          %385 = vsyncadd [#allocation9], %s384
          %s386 = sshll.u32 [#allocation8], 4
          %s387 = int_to_ptr.vmem [resolvable:$true] %s386
          %392 = dma.hbm_to_vmem [thread:$0]  %s6, 512, %s387, [#allocation9], 128, 128, 8
        $region36: #{tpu_custom_call.1} parent=11 // pred_fallthru
          _
        // Predicated region
        $region37: #{tpu_custom_call.1} parent=11 // pred_check
          %p393 = pneg %p201
        $region38: #{tpu_custom_call.1} parent=11 // pred_check_branch
          %395 = sbr.rel (%p393) target = $region40
        $region39: #{tpu_custom_call.1} parent=11 // pred_region
          %s397 = ssub.s32 512, 512
          %398 = vsyncadd [#allocation9], %s397
          %s399 = sshll.u32 [#allocation10], 4
          %s400 = int_to_ptr.vmem [resolvable:$true] %s399
          %405 = dma.hbm_to_vmem [thread:$0]  %s7, 512, %s400, [#allocation9], 128, 128, 8
        $region40: #{tpu_custom_call.1} parent=11 // pred_fallthru
          _
        // Predicated region
        $region41: #{tpu_custom_call.1} parent=11 // pred_check
          %p406 = pneg %p222
        $region42: #{tpu_custom_call.1} parent=11 // pred_check_branch
          %408 = sbr.rel (%p406) target = $region44
        $region43: #{tpu_custom_call.1} parent=11 // pred_region
          %s410 = ssub.s32 16, 16
          %411 = vsyncadd [#allocation12], %s410
          %s413 = sshll.u32 [#allocation11], 4
          %s414 = int_to_ptr.vmem [resolvable:$true] %s413
          %416 = dma.hbm_to_vmem [thread:$0]  %s8, 16, %s414, [#allocation12]
        $region44: #{tpu_custom_call.1} parent=11 // pred_fallthru
          _
        // Predicated region
        $region45: #{tpu_custom_call.1} parent=11 // pred_check
          %p417 = pneg %p243
        $region46: #{tpu_custom_call.1} parent=11 // pred_check_branch
          %419 = sbr.rel (%p417) target = $region48
        $region47: #{tpu_custom_call.1} parent=11 // pred_region
          _
        $region48: #{tpu_custom_call.1} parent=11 // pred_fallthru
          _
        // Predicated region
        $region49: #{tpu_custom_call.1} parent=11 // pred_check
          %p420 = pneg %p264
        $region50: #{tpu_custom_call.1} parent=11 // pred_check_branch
          %422 = sbr.rel (%p420) target = $region52
        $region51: #{tpu_custom_call.1} parent=11 // pred_region
          _
        $region52: #{tpu_custom_call.1} parent=11 // pred_fallthru
          _
        // Predicated region
        $region53: #{tpu_custom_call.1} parent=11 // pred_check
          %p423 = pneg %p285
        $region54: #{tpu_custom_call.1} parent=11 // pred_check_branch
          %425 = sbr.rel (%p423) target = $region56
        $region55: #{tpu_custom_call.1} parent=11 // pred_region
          _
        $region56: #{tpu_custom_call.1} parent=11 // pred_fallthru
          _
        // Predicated region
        $region57: #{tpu_custom_call.1} parent=11 // pred_check
          %p426 = pneg %p306
        $region58: #{tpu_custom_call.1} parent=11 // pred_check_branch
          %428 = sbr.rel (%p426) target = $region60
        $region59: #{tpu_custom_call.1} parent=11 // pred_region
          _
        $region60: #{tpu_custom_call.1} parent=11 // pred_fallthru
          _
      $region12: #{tpu_custom_call.1} parent=5 // pred_fallthru
        _
      %p429 = scmp.lt.s32.totalorder %s28, 2
      // Predicated region
      $region61: #{tpu_custom_call.1} parent=5 // pred_check
        %p430 = pneg %p429
      $region62: #{tpu_custom_call.1} parent=5 // pred_check_branch
        %432 = sbr.rel (%p430) target = $region64
      $region63: #{tpu_custom_call.1} parent=5 // pred_region
        // Predicated region
        $region65: #{tpu_custom_call.1} parent=63 // pred_check
          %p433 = pneg %p48
        $region66: #{tpu_custom_call.1} parent=63 // pred_check_branch
          %435 = sbr.rel (%p433) target = $region68
        $region67: #{tpu_custom_call.1} parent=63 // pred_region
          %s436 = sand.u32 %s38, 1
          %s437 = scalar_lea.sflag [#allocation3], %s436
          %s438 = sand.u32 %s38, 1
          %s439 = smul.addr %s438, 8
          %s440 = scalar_lea.vmem [#allocation2], %s439
          %s442 = ssub.s32 128, 128
          %443 = vsyncadd %s437, %s442
          %s444 = smul.addr %s28, 2
          %s445 = smul.addr %s444, 64
          %s446 = scalar_lea.hbm %s0, %s445
          %s448 = sshll.u32 %s440, 4
          %s449 = int_to_ptr.vmem [resolvable:$true] %s448
          %451 = dma.hbm_to_vmem [thread:$0]  %s446, 128, %s449, %s437
        $region68: #{tpu_custom_call.1} parent=63 // pred_fallthru
          _
      $region64: #{tpu_custom_call.1} parent=5 // pred_fallthru
        _
      %p452 = scmp.le.s32.totalorder 1, %s28
      %p453 = scmp.lt.s32.totalorder %s28, 3
      %p454 = pnand %p452, %p453
      %p455 = pneg %p454
      // Predicated region
      $region69: #{tpu_custom_call.1} parent=5 // pred_check
        _
      $region70: #{tpu_custom_call.1} parent=5 // pred_check_branch
        %457 = sbr.rel (%p454) target = $region72
      $region71: #{tpu_custom_call.1} parent=5 // pred_region
        %s458 = ssub.s32 %s28, 1
        %s459 = sand.u32 %s41, 1
        %s460 = scalar_lea.sflag [#allocation3], %s459
        %s461 = sand.u32 %s41, 1
        %s462 = smul.addr %s461, 8
        %s463 = scalar_lea.vmem [#allocation2], %s462
        // Predicated region
        $region73: #{tpu_custom_call.1} parent=71 // pred_check
          %p464 = pneg %p54
        $region74: #{tpu_custom_call.1} parent=71 // pred_check_branch
          %466 = sbr.rel (%p464) target = $region76
        $region75: #{tpu_custom_call.1} parent=71 // pred_region
          %467 = dma.done %s460, 128
        $region76: #{tpu_custom_call.1} parent=71 // pred_fallthru
          _
        // Predicated region
        $region77: #{tpu_custom_call.1} parent=71 // pred_check
          %p468 = pneg %p138
        $region78: #{tpu_custom_call.1} parent=71 // pred_check_branch
          %470 = sbr.rel (%p468) target = $region80
        $region79: #{tpu_custom_call.1} parent=71 // pred_region
          %471 = dma.done [#allocation6], 64
        $region80: #{tpu_custom_call.1} parent=71 // pred_fallthru
          _
        // Predicated region
        $region81: #{tpu_custom_call.1} parent=71 // pred_check
          %p472 = pneg %p159
        $region82: #{tpu_custom_call.1} parent=71 // pred_check_branch
          %474 = sbr.rel (%p472) target = $region84
        $region83: #{tpu_custom_call.1} parent=71 // pred_region
          %475 = dma.done [#allocation6], 512
        $region84: #{tpu_custom_call.1} parent=71 // pred_fallthru
          _
        // Predicated region
        $region85: #{tpu_custom_call.1} parent=71 // pred_check
          %p476 = pneg %p180
        $region86: #{tpu_custom_call.1} parent=71 // pred_check_branch
          %478 = sbr.rel (%p476) target = $region88
        $region87: #{tpu_custom_call.1} parent=71 // pred_region
          %479 = dma.done [#allocation9], 512
        $region88: #{tpu_custom_call.1} parent=71 // pred_fallthru
          _
        // Predicated region
        $region89: #{tpu_custom_call.1} parent=71 // pred_check
          %p480 = pneg %p201
        $region90: #{tpu_custom_call.1} parent=71 // pred_check_branch
          %482 = sbr.rel (%p480) target = $region92
        $region91: #{tpu_custom_call.1} parent=71 // pred_region
          %483 = dma.done [#allocation9], 512
        $region92: #{tpu_custom_call.1} parent=71 // pred_fallthru
          _
        // Predicated region
        $region93: #{tpu_custom_call.1} parent=71 // pred_check
          %p484 = pneg %p222
        $region94: #{tpu_custom_call.1} parent=71 // pred_check_branch
          %486 = sbr.rel (%p484) target = $region96
        $region95: #{tpu_custom_call.1} parent=71 // pred_region
          %487 = dma.done [#allocation12], 16
        $region96: #{tpu_custom_call.1} parent=71 // pred_fallthru
          _
        %s488 = sand.u32 %s41, 1
        %s489 = scalar_lea.sflag [#allocation3], %s488
        %s490 = sand.u32 %s41, 1
        %s491 = smul.addr %s490, 8
        %s492 = scalar_lea.vmem [#allocation2], %s491
        %p493 = pneg %p54
        %p494 = pneg %p51
        %p495 = pneg %p75
        %p496 = pneg %p72
        %p497 = pneg %p96
        %p498 = pneg %p93
        %p499 = pneg %p117
        %p500 = pneg %p114
        %p501 = pneg %p138
        %p502 = pneg %p135
        %p503 = pneg %p159
        %p504 = pneg %p156
        %p505 = pneg %p180
        %p506 = pneg %p177
        %p507 = pneg %p201
        %p508 = pneg %p198
        %p509 = pneg %p222
        %p510 = pneg %p219
        %p511 = pneg %p243
        %p512 = pneg %p240
        %p513 = pneg %p264
        %p514 = pneg %p261
        %p515 = pneg %p285
        %p516 = pneg %p282
        %p517 = pneg %p306
        %p518 = pneg %p303
        %p519 = pneg %p332
        %p520 = pneg %p329
        %s521 = sand.u32 %s319, 1
        %s522 = scalar_lea.sflag [#allocation4], %s521
        %s523 = sand.u32 %s319, 1
        %s524 = smul.addr %s523, 8
        %s525 = scalar_lea.vmem [#allocation13], %s524
        %v526 = vld [vmem:[%s463] sm:$0xff]
        %v528 = vcombine.high %v526, %v526
        %vm530 = vcmask 1043456
        %v531 = vsel %vm530, %v526, 0.0
        %v532 = vsel %vm530, %v528, 0.0
        %v533 = vadd.f32 %v531, %v532
        %534 = vadd.xlane.f32.xlu0 %v533
        %v535 = vpop.xlane.xlu0 %534
        %v536 = vmul.f32 %v535, 0.00390625
        %v539 = vunpack.c.l.s4 839922192
        %v540 = vunpack.c.0.s8 %v539
        %v541 = vlaneseq
        %v542 = vshrl.u32 %v541, 7
        %v543 = vsub.s32 %v540, %v542
        %v544 = vrot.slane %v536, %v543
        %v546 = vsub.f32 %v526, %v544
        %v548 = vcombine.high %v546, %v546
        %550 = vmatprep.subr.mxu0 0.0
        %551 = vmatpush1.xpose.msra.mxu0 0.0
        %552 = vmatprep.subr.mxu0 0.0
        %553 = vmatpush1.xpose.msra.mxu0 0.0
        %554 = vmatprep.subr.mxu0 0.0
        %555 = vmatpush1.xpose.msra.mxu0 0.0
        %556 = vmatprep.subr.mxu0 0.0
        %557 = vmatpush1.xpose.msra.mxu0 0.0
        %558 = vmatprep.subr.mxu0 0.0
        %559 = vmatpush1.xpose.msra.mxu0 0.0
        %560 = vmatprep.subr.mxu0 0.0
        %561 = vmatpush1.xpose.msra.mxu0 0.0
        %562 = vmatprep.subr.mxu0 0.0
        %563 = vmatpush1.xpose.msra.mxu0 0.0
        %564 = vmatprep.subr.mxu0 0.0
        %565 = vmatpush1.xpose.msra.mxu0 0.0
        %566 = vmatprep.subr.mxu0 0.0
        %567 = vmatpush1.xpose.msra.mxu0 0.0
        %568 = vmatprep.subr.mxu0 0.0
        %569 = vmatpush1.xpose.msra.mxu0 0.0
        %570 = vmatprep.subr.mxu0 0.0
        %571 = vmatpush1.xpose.msra.mxu0 0.0
        %572 = vmatprep.subr.mxu0 0.0
        %573 = vmatpush1.xpose.msra.mxu0 0.0
        %574 = vmatprep.subr.mxu0 0.0
        %575 = vmatpush1.xpose.msra.mxu0 0.0
        %576 = vmatprep.subr.mxu0 0.0
        %577 = vmatpush1.xpose.msra.mxu0 0.0
        %578 = vmatprep.subr.mxu0 0.0
        %579 = vmatpush1.xpose.msra.mxu0 0.0
        %v580 = vand.u32 %v548, 4294901760
        %581 = vmatprep.subr.mxu0 %v580
        %v582 = vand.u32 %v546, 4294901760
        %583 = vmatpush1.xpose.msra.mxu0 %v582
        %584 = vmatprep.subr.mxu0 0.0
        %585 = vmatpush2.xpose.msra.mxu0 0.0
        %586 = vmatprep.subr.mxu0 0.0
        %587 = vmatpush2.xpose.msra.mxu0 0.0
        %588 = vmatprep.subr.mxu0 0.0
        %589 = vmatpush2.xpose.msra.mxu0 0.0
        %590 = vmatprep.subr.mxu0 0.0
        %591 = vmatpush2.xpose.msra.mxu0 0.0
        %592 = vmatprep.subr.mxu0 0.0
        %593 = vmatpush2.xpose.msra.mxu0 0.0
        %594 = vmatprep.subr.mxu0 0.0
        %595 = vmatpush2.xpose.msra.mxu0 0.0
        %596 = vmatprep.subr.mxu0 0.0
        %597 = vmatpush2.xpose.msra.mxu0 0.0
        %598 = vmatprep.subr.mxu0 0.0
        %599 = vmatpush2.xpose.msra.mxu0 0.0
        %600 = vmatprep.subr.mxu0 0.0
        %601 = vmatpush2.xpose.msra.mxu0 0.0
        %602 = vmatprep.subr.mxu0 0.0
        %603 = vmatpush2.xpose.msra.mxu0 0.0
        %604 = vmatprep.subr.mxu0 0.0
        %605 = vmatpush2.xpose.msra.mxu0 0.0
        %606 = vmatprep.subr.mxu0 0.0
        %607 = vmatpush2.xpose.msra.mxu0 0.0
        %608 = vmatprep.subr.mxu0 0.0
        %609 = vmatpush2.xpose.msra.mxu0 0.0
        %610 = vmatprep.subr.mxu0 0.0
        %611 = vmatpush2.xpose.msra.mxu0 0.0
        %612 = vmatprep.subr.mxu0 0.0
        %613 = vmatpush2.xpose.msra.mxu0 0.0
        %614 = vmatprep.subr.mxu0 0.0
        %615 = vmatpush2.xpose.msra.mxu0 0.0
        %v616 = vand.u32 %v548, 4294901760
        %v617 = vsub.f32 %v548, %v616
        %v618 = vand.u32 %v617, 4294901760
        %v619 = vsub.f32 %v617, %v618
        %v620 = vand.u32 %v619, 4294901760
        %621 = vmatprep.mubr.f32.mxu0 %v620
        %v622 = vand.u32 %v546, 4294901760
        %v623 = vsub.f32 %v546, %v622
        %v624 = vand.u32 %v623, 4294901760
        %v625 = vsub.f32 %v623, %v624
        %v626 = vand.u32 %v625, 4294901760
        %627 = vmatmul.mubr.f32.gmra.mxu0 %v626
        %v628 = vpop.f32.mrf.mxu0
        %v629 = vadd.f32 0.0, %v628
        %v630 = vpop.f32.mrf.mxu0
        %631 = vdwg.mxu0
        %632 = vmatprep.subr.mxu0 0.0
        %633 = vmatpush1.xpose.msra.mxu0 0.0
        %634 = vmatprep.subr.mxu0 0.0
        %635 = vmatpush1.xpose.msra.mxu0 0.0
        %636 = vmatprep.subr.mxu0 0.0
        %637 = vmatpush1.xpose.msra.mxu0 0.0
        %638 = vmatprep.subr.mxu0 0.0
        %639 = vmatpush1.xpose.msra.mxu0 0.0
        %640 = vmatprep.subr.mxu0 0.0
        %641 = vmatpush1.xpose.msra.mxu0 0.0
        %642 = vmatprep.subr.mxu0 0.0
        %643 = vmatpush1.xpose.msra.mxu0 0.0
        %644 = vmatprep.subr.mxu0 0.0
        %645 = vmatpush1.xpose.msra.mxu0 0.0
        %646 = vmatprep.subr.mxu0 0.0
        %647 = vmatpush1.xpose.msra.mxu0 0.0
        %648 = vmatprep.subr.mxu0 0.0
        %649 = vmatpush1.xpose.msra.mxu0 0.0
        %650 = vmatprep.subr.mxu0 0.0
        %651 = vmatpush1.xpose.msra.mxu0 0.0
        %652 = vmatprep.subr.mxu0 0.0
        %653 = vmatpush1.xpose.msra.mxu0 0.0
        %654 = vmatprep.subr.mxu0 0.0
        %655 = vmatpush1.xpose.msra.mxu0 0.0
        %656 = vmatprep.subr.mxu0 0.0
        %657 = vmatpush1.xpose.msra.mxu0 0.0
        %658 = vmatprep.subr.mxu0 0.0
        %659 = vmatpush1.xpose.msra.mxu0 0.0
        %660 = vmatprep.subr.mxu0 0.0
        %661 = vmatpush1.xpose.msra.mxu0 0.0
        %v662 = vand.u32 %v548, 4294901760
        %v663 = vsub.f32 %v548, %v662
        %v664 = vand.u32 %v663, 4294901760
        %v665 = vsub.f32 %v663, %v664
        %v666 = vand.u32 %v665, 4294901760
        %667 = vmatprep.subr.mxu0 %v666
        %v668 = vand.u32 %v546, 4294901760
        %v669 = vsub.f32 %v546, %v668
        %v670 = vand.u32 %v669, 4294901760
        %v671 = vsub.f32 %v669, %v670
        %v672 = vand.u32 %v671, 4294901760
        %673 = vmatpush1.xpose.msra.mxu0 %v672
        %674 = vmatprep.subr.mxu0 0.0
        %675 = vmatpush2.xpose.msra.mxu0 0.0
        %676 = vmatprep.subr.mxu0 0.0
        %677 = vmatpush2.xpose.msra.mxu0 0.0
        %678 = vmatprep.subr.mxu0 0.0
        %679 = vmatpush2.xpose.msra.mxu0 0.0
        %680 = vmatprep.subr.mxu0 0.0
        %681 = vmatpush2.xpose.msra.mxu0 0.0
        %682 = vmatprep.subr.mxu0 0.0
        %683 = vmatpush2.xpose.msra.mxu0 0.0
        %684 = vmatprep.subr.mxu0 0.0
        %685 = vmatpush2.xpose.msra.mxu0 0.0
        %686 = vmatprep.subr.mxu0 0.0
        %687 = vmatpush2.xpose.msra.mxu0 0.0
        %688 = vmatprep.subr.mxu0 0.0
        %689 = vmatpush2.xpose.msra.mxu0 0.0
        %690 = vmatprep.subr.mxu0 0.0
        %691 = vmatpush2.xpose.msra.mxu0 0.0
        %692 = vmatprep.subr.mxu0 0.0
        %693 = vmatpush2.xpose.msra.mxu0 0.0
        %694 = vmatprep.subr.mxu0 0.0
        %695 = vmatpush2.xpose.msra.mxu0 0.0
        %696 = vmatprep.subr.mxu0 0.0
        %697 = vmatpush2.xpose.msra.mxu0 0.0
        %698 = vmatprep.subr.mxu0 0.0
        %699 = vmatpush2.xpose.msra.mxu0 0.0
        %700 = vmatprep.subr.mxu0 0.0
        %701 = vmatpush2.xpose.msra.mxu0 0.0
        %702 = vmatprep.subr.mxu0 0.0
        %703 = vmatpush2.xpose.msra.mxu0 0.0
        %704 = vmatprep.subr.mxu0 0.0
        %705 = vmatpush2.xpose.msra.mxu0 0.0
        %v706 = vand.u32 %v548, 4294901760
        %707 = vmatprep.mubr.f32.mxu0 %v706
        %v708 = vand.u32 %v546, 4294901760
        %709 = vmatmul.mubr.f32.gmra.mxu0 %v708
        %v710 = vpop.f32.mrf.mxu0
        %v711 = vadd.f32 %v629, %v710
        %v712 = vpop.f32.mrf.mxu0
        %713 = vdwg.mxu0
        %714 = vmatprep.subr.mxu0 0.0
        %715 = vmatpush1.xpose.msra.mxu0 0.0
        %716 = vmatprep.subr.mxu0 0.0
        %717 = vmatpush1.xpose.msra.mxu0 0.0
        %718 = vmatprep.subr.mxu0 0.0
        %719 = vmatpush1.xpose.msra.mxu0 0.0
        %720 = vmatprep.subr.mxu0 0.0
        %721 = vmatpush1.xpose.msra.mxu0 0.0
        %722 = vmatprep.subr.mxu0 0.0
        %723 = vmatpush1.xpose.msra.mxu0 0.0
        %724 = vmatprep.subr.mxu0 0.0
        %725 = vmatpush1.xpose.msra.mxu0 0.0
        %726 = vmatprep.subr.mxu0 0.0
        %727 = vmatpush1.xpose.msra.mxu0 0.0
        %728 = vmatprep.subr.mxu0 0.0
        %729 = vmatpush1.xpose.msra.mxu0 0.0
        %730 = vmatprep.subr.mxu0 0.0
        %731 = vmatpush1.xpose.msra.mxu0 0.0
        %732 = vmatprep.subr.mxu0 0.0
        %733 = vmatpush1.xpose.msra.mxu0 0.0
        %734 = vmatprep.subr.mxu0 0.0
        %735 = vmatpush1.xpose.msra.mxu0 0.0
        %736 = vmatprep.subr.mxu0 0.0
        %737 = vmatpush1.xpose.msra.mxu0 0.0
        %738 = vmatprep.subr.mxu0 0.0
        %739 = vmatpush1.xpose.msra.mxu0 0.0
        %740 = vmatprep.subr.mxu0 0.0
        %741 = vmatpush1.xpose.msra.mxu0 0.0
        %742 = vmatprep.subr.mxu0 0.0
        %743 = vmatpush1.xpose.msra.mxu0 0.0
        %v744 = vand.u32 %v548, 4294901760
        %v745 = vsub.f32 %v548, %v744
        %746 = vmatprep.subr.mxu0 %v745
        %v747 = vand.u32 %v546, 4294901760
        %v748 = vsub.f32 %v546, %v747
        %749 = vmatpush1.xpose.msra.mxu0 %v748
        %750 = vmatprep.subr.mxu0 0.0
        %751 = vmatpush2.xpose.msra.mxu0 0.0
        %752 = vmatprep.subr.mxu0 0.0
        %753 = vmatpush2.xpose.msra.mxu0 0.0
        %754 = vmatprep.subr.mxu0 0.0
        %755 = vmatpush2.xpose.msra.mxu0 0.0
        %756 = vmatprep.subr.mxu0 0.0
        %757 = vmatpush2.xpose.msra.mxu0 0.0
        %758 = vmatprep.subr.mxu0 0.0
        %759 = vmatpush2.xpose.msra.mxu0 0.0
        %760 = vmatprep.subr.mxu0 0.0
        %761 = vmatpush2.xpose.msra.mxu0 0.0
        %762 = vmatprep.subr.mxu0 0.0
        %763 = vmatpush2.xpose.msra.mxu0 0.0
        %764 = vmatprep.subr.mxu0 0.0
        %765 = vmatpush2.xpose.msra.mxu0 0.0
        %766 = vmatprep.subr.mxu0 0.0
        %767 = vmatpush2.xpose.msra.mxu0 0.0
        %768 = vmatprep.subr.mxu0 0.0
        %769 = vmatpush2.xpose.msra.mxu0 0.0
        %770 = vmatprep.subr.mxu0 0.0
        %771 = vmatpush2.xpose.msra.mxu0 0.0
        %772 = vmatprep.subr.mxu0 0.0
        %773 = vmatpush2.xpose.msra.mxu0 0.0
        %774 = vmatprep.subr.mxu0 0.0
        %775 = vmatpush2.xpose.msra.mxu0 0.0
        %776 = vmatprep.subr.mxu0 0.0
        %777 = vmatpush2.xpose.msra.mxu0 0.0
        %778 = vmatprep.subr.mxu0 0.0
        %779 = vmatpush2.xpose.msra.mxu0 0.0
        %780 = vmatprep.subr.mxu0 0.0
        %781 = vmatpush2.xpose.msra.mxu0 0.0
        %v782 = vand.u32 %v548, 4294901760
        %v783 = vsub.f32 %v548, %v782
        %784 = vmatprep.mubr.f32.mxu0 %v783
        %v785 = vand.u32 %v546, 4294901760
        %v786 = vsub.f32 %v546, %v785
        %787 = vmatmul.mubr.f32.gmra.mxu0 %v786
        %v788 = vpop.f32.mrf.mxu0
        %v789 = vadd.f32 %v711, %v788
        %v790 = vpop.f32.mrf.mxu0
        %791 = vdwg.mxu0
        %792 = vmatprep.subr.mxu0 0.0
        %793 = vmatpush1.xpose.msra.mxu0 0.0
        %794 = vmatprep.subr.mxu0 0.0
        %795 = vmatpush1.xpose.msra.mxu0 0.0
        %796 = vmatprep.subr.mxu0 0.0
        %797 = vmatpush1.xpose.msra.mxu0 0.0
        %798 = vmatprep.subr.mxu0 0.0
        %799 = vmatpush1.xpose.msra.mxu0 0.0
        %800 = vmatprep.subr.mxu0 0.0
        %801 = vmatpush1.xpose.msra.mxu0 0.0
        %802 = vmatprep.subr.mxu0 0.0
        %803 = vmatpush1.xpose.msra.mxu0 0.0
        %804 = vmatprep.subr.mxu0 0.0
        %805 = vmatpush1.xpose.msra.mxu0 0.0
        %806 = vmatprep.subr.mxu0 0.0
        %807 = vmatpush1.xpose.msra.mxu0 0.0
        %808 = vmatprep.subr.mxu0 0.0
        %809 = vmatpush1.xpose.msra.mxu0 0.0
        %810 = vmatprep.subr.mxu0 0.0
        %811 = vmatpush1.xpose.msra.mxu0 0.0
        %812 = vmatprep.subr.mxu0 0.0
        %813 = vmatpush1.xpose.msra.mxu0 0.0
        %814 = vmatprep.subr.mxu0 0.0
        %815 = vmatpush1.xpose.msra.mxu0 0.0
        %816 = vmatprep.subr.mxu0 0.0
        %817 = vmatpush1.xpose.msra.mxu0 0.0
        %818 = vmatprep.subr.mxu0 0.0
        %819 = vmatpush1.xpose.msra.mxu0 0.0
        %820 = vmatprep.subr.mxu0 0.0
        %821 = vmatpush1.xpose.msra.mxu0 0.0
        %v822 = vand.u32 %v548, 4294901760
        %823 = vmatprep.subr.mxu0 %v822
        %v824 = vand.u32 %v546, 4294901760
        %825 = vmatpush1.xpose.msra.mxu0 %v824
        %826 = vmatprep.subr.mxu0 0.0
        %827 = vmatpush2.xpose.msra.mxu0 0.0
        %828 = vmatprep.subr.mxu0 0.0
        %829 = vmatpush2.xpose.msra.mxu0 0.0
        %830 = vmatprep.subr.mxu0 0.0
        %831 = vmatpush2.xpose.msra.mxu0 0.0
        %832 = vmatprep.subr.mxu0 0.0
        %833 = vmatpush2.xpose.msra.mxu0 0.0
        %834 = vmatprep.subr.mxu0 0.0
        %835 = vmatpush2.xpose.msra.mxu0 0.0
        %836 = vmatprep.subr.mxu0 0.0
        %837 = vmatpush2.xpose.msra.mxu0 0.0
        %838 = vmatprep.subr.mxu0 0.0
        %839 = vmatpush2.xpose.msra.mxu0 0.0
        %840 = vmatprep.subr.mxu0 0.0
        %841 = vmatpush2.xpose.msra.mxu0 0.0
        %842 = vmatprep.subr.mxu0 0.0
        %843 = vmatpush2.xpose.msra.mxu0 0.0
        %844 = vmatprep.subr.mxu0 0.0
        %845 = vmatpush2.xpose.msra.mxu0 0.0
        %846 = vmatprep.subr.mxu0 0.0
        %847 = vmatpush2.xpose.msra.mxu0 0.0
        %848 = vmatprep.subr.mxu0 0.0
        %849 = vmatpush2.xpose.msra.mxu0 0.0
        %850 = vmatprep.subr.mxu0 0.0
        %851 = vmatpush2.xpose.msra.mxu0 0.0
        %852 = vmatprep.subr.mxu0 0.0
        %853 = vmatpush2.xpose.msra.mxu0 0.0
        %854 = vmatprep.subr.mxu0 0.0
        %855 = vmatpush2.xpose.msra.mxu0 0.0
        %856 = vmatprep.subr.mxu0 0.0
        %857 = vmatpush2.xpose.msra.mxu0 0.0
        %v858 = vand.u32 %v548, 4294901760
        %v859 = vsub.f32 %v548, %v858
        %v860 = vand.u32 %v859, 4294901760
        %861 = vmatprep.mubr.f32.mxu0 %v860
        %v862 = vand.u32 %v546, 4294901760
        %v863 = vsub.f32 %v546, %v862
        %v864 = vand.u32 %v863, 4294901760
        %865 = vmatmul.mubr.f32.gmra.mxu0 %v864
        %v866 = vpop.f32.mrf.mxu0
        %v867 = vadd.f32 %v789, %v866
        %v868 = vpop.f32.mrf.mxu0
        %869 = vdwg.mxu0
        %870 = vmatprep.subr.mxu0 0.0
        %871 = vmatpush1.xpose.msra.mxu0 0.0
        %872 = vmatprep.subr.mxu0 0.0
        %873 = vmatpush1.xpose.msra.mxu0 0.0
        %874 = vmatprep.subr.mxu0 0.0
        %875 = vmatpush1.xpose.msra.mxu0 0.0
        %876 = vmatprep.subr.mxu0 0.0
        %877 = vmatpush1.xpose.msra.mxu0 0.0
        %878 = vmatprep.subr.mxu0 0.0
        %879 = vmatpush1.xpose.msra.mxu0 0.0
        %880 = vmatprep.subr.mxu0 0.0
        %881 = vmatpush1.xpose.msra.mxu0 0.0
        %882 = vmatprep.subr.mxu0 0.0
        %883 = vmatpush1.xpose.msra.mxu0 0.0
        %884 = vmatprep.subr.mxu0 0.0
        %885 = vmatpush1.xpose.msra.mxu0 0.0
        %886 = vmatprep.subr.mxu0 0.0
        %887 = vmatpush1.xpose.msra.mxu0 0.0
        %888 = vmatprep.subr.mxu0 0.0
        %889 = vmatpush1.xpose.msra.mxu0 0.0
        %890 = vmatprep.subr.mxu0 0.0
        %891 = vmatpush1.xpose.msra.mxu0 0.0
        %892 = vmatprep.subr.mxu0 0.0
        %893 = vmatpush1.xpose.msra.mxu0 0.0
        %894 = vmatprep.subr.mxu0 0.0
        %895 = vmatpush1.xpose.msra.mxu0 0.0
        %896 = vmatprep.subr.mxu0 0.0
        %897 = vmatpush1.xpose.msra.mxu0 0.0
        %898 = vmatprep.subr.mxu0 0.0
        %899 = vmatpush1.xpose.msra.mxu0 0.0
        %v900 = vand.u32 %v548, 4294901760
        %v901 = vsub.f32 %v548, %v900
        %v902 = vand.u32 %v901, 4294901760
        %903 = vmatprep.subr.mxu0 %v902
        %v904 = vand.u32 %v546, 4294901760
        %v905 = vsub.f32 %v546, %v904
        %v906 = vand.u32 %v905, 4294901760
        %907 = vmatpush1.xpose.msra.mxu0 %v906
        %908 = vmatprep.subr.mxu0 0.0
        %909 = vmatpush2.xpose.msra.mxu0 0.0
        %910 = vmatprep.subr.mxu0 0.0
        %911 = vmatpush2.xpose.msra.mxu0 0.0
        %912 = vmatprep.subr.mxu0 0.0
        %913 = vmatpush2.xpose.msra.mxu0 0.0
        %914 = vmatprep.subr.mxu0 0.0
        %915 = vmatpush2.xpose.msra.mxu0 0.0
        %916 = vmatprep.subr.mxu0 0.0
        %917 = vmatpush2.xpose.msra.mxu0 0.0
        %918 = vmatprep.subr.mxu0 0.0
        %919 = vmatpush2.xpose.msra.mxu0 0.0
        %920 = vmatprep.subr.mxu0 0.0
        %921 = vmatpush2.xpose.msra.mxu0 0.0
        %922 = vmatprep.subr.mxu0 0.0
        %923 = vmatpush2.xpose.msra.mxu0 0.0
        %924 = vmatprep.subr.mxu0 0.0
        %925 = vmatpush2.xpose.msra.mxu0 0.0
        %926 = vmatprep.subr.mxu0 0.0
        %927 = vmatpush2.xpose.msra.mxu0 0.0
        %928 = vmatprep.subr.mxu0 0.0
        %929 = vmatpush2.xpose.msra.mxu0 0.0
        %930 = vmatprep.subr.mxu0 0.0
        %931 = vmatpush2.xpose.msra.mxu0 0.0
        %932 = vmatprep.subr.mxu0 0.0
        %933 = vmatpush2.xpose.msra.mxu0 0.0
        %934 = vmatprep.subr.mxu0 0.0
        %935 = vmatpush2.xpose.msra.mxu0 0.0
        %936 = vmatprep.subr.mxu0 0.0
        %937 = vmatpush2.xpose.msra.mxu0 0.0
        %938 = vmatprep.subr.mxu0 0.0
        %939 = vmatpush2.xpose.msra.mxu0 0.0
        %v940 = vand.u32 %v548, 4294901760
        %941 = vmatprep.mubr.f32.mxu0 %v940
        %v942 = vand.u32 %v546, 4294901760
        %943 = vmatmul.mubr.f32.gmra.mxu0 %v942
        %v944 = vpop.f32.mrf.mxu0
        %v945 = vadd.f32 %v867, %v944
        %v946 = vpop.f32.mrf.mxu0
        %947 = vdwg.mxu0
        %948 = vmatprep.subr.mxu0 0.0
        %949 = vmatpush1.xpose.msra.mxu0 0.0
        %950 = vmatprep.subr.mxu0 0.0
        %951 = vmatpush1.xpose.msra.mxu0 0.0
        %952 = vmatprep.subr.mxu0 0.0
        %953 = vmatpush1.xpose.msra.mxu0 0.0
        %954 = vmatprep.subr.mxu0 0.0
        %955 = vmatpush1.xpose.msra.mxu0 0.0
        %956 = vmatprep.subr.mxu0 0.0
        %957 = vmatpush1.xpose.msra.mxu0 0.0
        %958 = vmatprep.subr.mxu0 0.0
        %959 = vmatpush1.xpose.msra.mxu0 0.0
        %960 = vmatprep.subr.mxu0 0.0
        %961 = vmatpush1.xpose.msra.mxu0 0.0
        %962 = vmatprep.subr.mxu0 0.0
        %963 = vmatpush1.xpose.msra.mxu0 0.0
        %964 = vmatprep.subr.mxu0 0.0
        %965 = vmatpush1.xpose.msra.mxu0 0.0
        %966 = vmatprep.subr.mxu0 0.0
        %967 = vmatpush1.xpose.msra.mxu0 0.0
        %968 = vmatprep.subr.mxu0 0.0
        %969 = vmatpush1.xpose.msra.mxu0 0.0
        %970 = vmatprep.subr.mxu0 0.0
        %971 = vmatpush1.xpose.msra.mxu0 0.0
        %972 = vmatprep.subr.mxu0 0.0
        %973 = vmatpush1.xpose.msra.mxu0 0.0
        %974 = vmatprep.subr.mxu0 0.0
        %975 = vmatpush1.xpose.msra.mxu0 0.0
        %976 = vmatprep.subr.mxu0 0.0
        %977 = vmatpush1.xpose.msra.mxu0 0.0
        %v978 = vand.u32 %v548, 4294901760
        %979 = vmatprep.subr.mxu0 %v978
        %v980 = vand.u32 %v546, 4294901760
        %981 = vmatpush1.xpose.msra.mxu0 %v980
        %982 = vmatprep.subr.mxu0 0.0
        %983 = vmatpush2.xpose.msra.mxu0 0.0
        %984 = vmatprep.subr.mxu0 0.0
        %985 = vmatpush2.xpose.msra.mxu0 0.0
        %986 = vmatprep.subr.mxu0 0.0
        %987 = vmatpush2.xpose.msra.mxu0 0.0
        %988 = vmatprep.subr.mxu0 0.0
        %989 = vmatpush2.xpose.msra.mxu0 0.0
        %990 = vmatprep.subr.mxu0 0.0
        %991 = vmatpush2.xpose.msra.mxu0 0.0
        %992 = vmatprep.subr.mxu0 0.0
        %993 = vmatpush2.xpose.msra.mxu0 0.0
        %994 = vmatprep.subr.mxu0 0.0
        %995 = vmatpush2.xpose.msra.mxu0 0.0
        %996 = vmatprep.subr.mxu0 0.0
        %997 = vmatpush2.xpose.msra.mxu0 0.0
        %998 = vmatprep.subr.mxu0 0.0
        %999 = vmatpush2.xpose.msra.mxu0 0.0
        %1000 = vmatprep.subr.mxu0 0.0
        %1001 = vmatpush2.xpose.msra.mxu0 0.0
        %1002 = vmatprep.subr.mxu0 0.0
        %1003 = vmatpush2.xpose.msra.mxu0 0.0
        %1004 = vmatprep.subr.mxu0 0.0
        %1005 = vmatpush2.xpose.msra.mxu0 0.0
        %1006 = vmatprep.subr.mxu0 0.0
        %1007 = vmatpush2.xpose.msra.mxu0 0.0
        %1008 = vmatprep.subr.mxu0 0.0
        %1009 = vmatpush2.xpose.msra.mxu0 0.0
        %1010 = vmatprep.subr.mxu0 0.0
        %1011 = vmatpush2.xpose.msra.mxu0 0.0
        %1012 = vmatprep.subr.mxu0 0.0
        %1013 = vmatpush2.xpose.msra.mxu0 0.0
        %v1014 = vand.u32 %v548, 4294901760
        %1015 = vmatprep.mubr.f32.mxu0 %v1014
        %v1016 = vand.u32 %v546, 4294901760
        %1017 = vmatmul.mubr.f32.gmra.mxu0 %v1016
        %v1018 = vpop.f32.mrf.mxu0
        %v1019 = vadd.f32 %v945, %v1018
        %v1020 = vpop.f32.mrf.mxu0
        %1021 = vdwg.mxu0
        %v1022 = vmul.f32 %v1019, 0.00390625
        %v1023 = vld [vmem:[%s1] sm:$0xf]
        %1025 = vset.pattern.permute.xlu0 0
        %1026 = vperm.xlu0 %1025, %v1023
        %v1027 = vpop.permute.xlu0 %1026
        %v1029 = vunpack.c.l.s4 839922192
        %v1030 = vunpack.c.0.s8 %v1029
        %v1031 = vlaneseq
        %v1032 = vshrl.u32 %v1031, 7
        %v1033 = vsub.s32 %v1030, %v1032
        %v1034 = vrot.slane %v1027, %v1033
        %v1036 = vmul.f32 %v546, %v1034
        %v1038 = vcombine.high %v1036, %v1036
        %v1040 = vsel %vm530, %v1036, 0.0
        %v1041 = vsel %vm530, %v1038, 0.0
        %v1042 = vadd.f32 %v1040, %v1041
        %1043 = vadd.xlane.f32.xlu0 %v1042
        %v1044 = vpop.xlane.xlu0 %1043
        %v1045 = vlaneseq
        %v1046 = vshrl.u32 %v1045, 7
        %v1047 = vlaneseq
        %v1048 = vand.u32 %v1047, 127
        %vm1049 = vcmp.eq.s32.totalorder %v1046, %v1048
        %v1050 = vsel %vm1049, 1, 0
        %v1051 = vcvt.s32.f32 %v1050
        %v1052 = vld [vmem:[%s2] sm:$0xf]
        %1054 = vset.pattern.permute.xlu0 0
        %1055 = vperm.xlu0 %1054, %v1022
        %v1056 = vpop.permute.xlu0 %1055
        %v1058 = vmul.f32 %v1052, %v1056
        %vm1059 = vcmask 257024
        %v1060 = vsel %vm1059, %v1058, 0.0
        %v1061 = vrot.slane %v1060, 4
        %v1062 = vadd.f32 %v1060, %v1061
        %v1063 = vrot.slane %v1062, 2
        %v1064 = vadd.f32 %v1062, %v1063
        %v1065 = vrot.slane %v1064, 1
        %v1066 = vadd.f32 %v1064, %v1065
        %s1067 = scalar_lea.vmem %s2, 4
        %v1068 = vld [vmem:[%s1067] sm:$0xf]
        %1069 = vset.pattern.permute.xlu0 1
        %1070 = vperm.xlu0 %1069, %v1022
        %v1071 = vpop.permute.xlu0 %1070
        %v1073 = vmul.f32 %v1068, %v1071
        %v1074 = vsel %vm1059, %v1073, 0.0
        %v1075 = vrot.slane %v1074, 4
        %v1076 = vadd.f32 %v1074, %v1075
        %v1077 = vrot.slane %v1076, 2
        %v1078 = vadd.f32 %v1076, %v1077
        %v1079 = vrot.slane %v1078, 1
        %v1080 = vadd.f32 %v1078, %v1079
        %v1081 = vadd.f32 %v1066, %v1080
        %s1082 = scalar_lea.vmem %s2, 8
        %v1083 = vld [vmem:[%s1082] sm:$0xf]
        %1084 = vset.pattern.permute.xlu0 2
        %1085 = vperm.xlu0 %1084, %v1022
        %v1086 = vpop.permute.xlu0 %1085
        %v1088 = vmul.f32 %v1083, %v1086
        %v1089 = vsel %vm1059, %v1088, 0.0
        %v1090 = vrot.slane %v1089, 4
        %v1091 = vadd.f32 %v1089, %v1090
        %v1092 = vrot.slane %v1091, 2
        %v1093 = vadd.f32 %v1091, %v1092
        %v1094 = vrot.slane %v1093, 1
        %v1095 = vadd.f32 %v1093, %v1094
        %v1096 = vadd.f32 %v1081, %v1095
        %s1097 = scalar_lea.vmem %s2, 12
        %v1098 = vld [vmem:[%s1097] sm:$0xf]
        %1099 = vset.pattern.permute.xlu0 3
        %1100 = vperm.xlu0 %1099, %v1022
        %v1101 = vpop.permute.xlu0 %1100
        %v1103 = vmul.f32 %v1098, %v1101
        %v1104 = vsel %vm1059, %v1103, 0.0
        %v1105 = vrot.slane %v1104, 4
        %v1106 = vadd.f32 %v1104, %v1105
        %v1107 = vrot.slane %v1106, 2
        %v1108 = vadd.f32 %v1106, %v1107
        %v1109 = vrot.slane %v1108, 1
        %v1110 = vadd.f32 %v1108, %v1109
        %v1111 = vadd.f32 %v1096, %v1110
        %v1112 = vld [vmem:[%s3] sm:$0xf]
        %v1113 = vmul.f32 %v1112, %v1044
        %v1114 = vsel %vm1059, %v1113, 0.0
        %v1115 = vrot.slane %v1114, 4
        %v1116 = vadd.f32 %v1114, %v1115
        %v1117 = vrot.slane %v1116, 2
        %v1118 = vadd.f32 %v1116, %v1117
        %v1119 = vrot.slane %v1118, 1
        %v1120 = vadd.f32 %v1118, %v1119
        %v1121 = vmul.f32 %v1022, %v1051
        %vm1122 = vcmask 27648
        %v1123 = vsel %vm1122, %v1121, 0.0
        %1124 = vadd.xlane.f32.xlu0 %v1123
        %v1125 = vpop.xlane.xlu0 %1124
        %v1126 = vld [vmem:[#allocation5] sm:$0xf]
        %v1127 = vmul.f32 %v1126, %v1125
        %v1128 = vsel %vm1059, %v1127, 0.0
        %v1129 = vrot.slane %v1128, 4
        %v1130 = vadd.f32 %v1128, %v1129
        %v1131 = vrot.slane %v1130, 2
        %v1132 = vadd.f32 %v1130, %v1131
        %v1133 = vrot.slane %v1132, 1
        %v1134 = vadd.f32 %v1132, %v1133
        %vm1135 = vcmask 261120
        %v1136 = vsel %vm1135, %v1111, 0.0
        %1137 = vadd.xlane.f32.xlu0 %v1136
        %v1138 = vpop.xlane.xlu0 %1137
        %v1139 = vsel %vm1135, %v1120, 0.0
        %1140 = vadd.xlane.f32.xlu0 %v1139
        %v1141 = vpop.xlane.xlu0 %1140
        %v1142 = vadd.f32 %v1138, %v1141
        %v1143 = vsel %vm1135, %v1134, 0.0
        %1144 = vadd.xlane.f32.xlu0 %v1143
        %v1145 = vpop.xlane.xlu0 %1144
        %v1146 = vadd.f32 %v1142, %v1145
        %v1147 = vrcp.pop 96.0
        %v1148 = vmul.f32 %v1146, %v1147
        %v1149 = vsub.f32 %v1111, %v1148
        %v1150 = vmul.f32 %v1149, %v1149
        %v1151 = vsel %vm1135, %v1150, 0.0
        %1152 = vadd.xlane.f32.xlu0 %v1151
        %v1153 = vpop.xlane.xlu0 %1152
        %v1154 = vsub.f32 %v1120, %v1148
        %v1155 = vmul.f32 %v1154, %v1154
        %v1156 = vsel %vm1135, %v1155, 0.0
        %1157 = vadd.xlane.f32.xlu0 %v1156
        %v1158 = vpop.xlane.xlu0 %1157
        %v1159 = vadd.f32 %v1153, %v1158
        %v1160 = vsub.f32 %v1134, %v1148
        %v1161 = vmul.f32 %v1160, %v1160
        %v1162 = vsel %vm1135, %v1161, 0.0
        %1163 = vadd.xlane.f32.xlu0 %v1162
        %v1164 = vpop.xlane.xlu0 %1163
        %v1165 = vadd.f32 %v1159, %v1164
        %v1166 = vmul.f32 %v1165, %v1147
        %v1167 = vadd.f32 %v1166, 1e-05
        %v1168 = vrsqrt.pop %v1167
        %v1169 = vmul.f32 %v1149, %v1168
        %v1170 = vmul.f32 %v1154, %v1168
        %v1171 = vmul.f32 %v1160, %v1168
        %v1172 = vld [vmem:[#allocation7] sm:$0xff]
        %v1173 = vld [vmem:[#allocation7 + $0x8] sm:$0xff]
        %v1174 = vld [vmem:[#allocation7 + $0x10] sm:$0xff]
        %v1175 = vld [vmem:[#allocation7 + $0x18] sm:$0xff]
        %v1176 = vld [vmem:[#allocation8] sm:$0xff]
        %v1177 = vld [vmem:[#allocation8 + $0x8] sm:$0xff]
        %v1178 = vld [vmem:[#allocation8 + $0x10] sm:$0xff]
        %v1179 = vld [vmem:[#allocation8 + $0x18] sm:$0xff]
        %v1181 = vsel %vm1135, %v1170, 0
        %1183 = vmatprep.subr.mxu0 0.0
        %1184 = vmatpush1.msra.mxu0 0.0
        %1185 = vmatprep.subr.mxu0 0.0
        %1186 = vmatpush1.msra.mxu0 0.0
        %1187 = vmatprep.subr.mxu0 0.0
        %1188 = vmatpush1.msra.mxu0 0.0
        %1189 = vmatprep.subr.mxu0 0.0
        %1190 = vmatpush1.msra.mxu0 0.0
        %1191 = vmatprep.subr.mxu0 0.0
        %1192 = vmatpush1.msra.mxu0 0.0
        %1193 = vmatprep.subr.mxu0 0.0
        %1194 = vmatpush1.msra.mxu0 0.0
        %1195 = vmatprep.subr.mxu0 0.0
        %1196 = vmatpush1.msra.mxu0 0.0
        %1197 = vmatprep.subr.mxu0 0.0
        %1198 = vmatpush1.msra.mxu0 0.0
        %1199 = vmatprep.subr.mxu0 0.0
        %1200 = vmatpush1.msra.mxu0 0.0
        %1201 = vmatprep.subr.mxu0 0.0
        %1202 = vmatpush1.msra.mxu0 0.0
        %1203 = vmatprep.subr.mxu0 0.0
        %1204 = vmatpush1.msra.mxu0 0.0
        %1205 = vmatprep.subr.mxu0 0.0
        %1206 = vmatpush1.msra.mxu0 0.0
        %1207 = vmatprep.subr.mxu0 0.0
        %v1208 = vand.u32 %v1179, 4294901760
        %1209 = vmatpush1.msra.mxu0 %v1208
        %1210 = vmatprep.subr.mxu0 0.0
        %v1211 = vand.u32 %v1178, 4294901760
        %1212 = vmatpush1.msra.mxu0 %v1211
        %1213 = vmatprep.subr.mxu0 0.0
        %v1214 = vand.u32 %v1177, 4294901760
        %1215 = vmatpush1.msra.mxu0 %v1214
        %1216 = vmatprep.subr.mxu0 0.0
        %v1217 = vand.u32 %v1176, 4294901760
        %1218 = vmatpush1.msra.mxu0 %v1217
        %1219 = vmatprep.subr.mxu0 0.0
        %1220 = vmatpush2.msra.mxu0 0.0
        %1221 = vmatprep.subr.mxu0 0.0
        %1222 = vmatpush2.msra.mxu0 0.0
        %1223 = vmatprep.subr.mxu0 0.0
        %1224 = vmatpush2.msra.mxu0 0.0
        %1225 = vmatprep.subr.mxu0 0.0
        %1226 = vmatpush2.msra.mxu0 0.0
        %1227 = vmatprep.subr.mxu0 0.0
        %1228 = vmatpush2.msra.mxu0 0.0
        %1229 = vmatprep.subr.mxu0 0.0
        %1230 = vmatpush2.msra.mxu0 0.0
        %1231 = vmatprep.subr.mxu0 0.0
        %1232 = vmatpush2.msra.mxu0 0.0
        %1233 = vmatprep.subr.mxu0 0.0
        %1234 = vmatpush2.msra.mxu0 0.0
        %1235 = vmatprep.subr.mxu0 0.0
        %1236 = vmatpush2.msra.mxu0 0.0
        %1237 = vmatprep.subr.mxu0 0.0
        %1238 = vmatpush2.msra.mxu0 0.0
        %1239 = vmatprep.subr.mxu0 0.0
        %1240 = vmatpush2.msra.mxu0 0.0
        %1241 = vmatprep.subr.mxu0 0.0
        %1242 = vmatpush2.msra.mxu0 0.0
        %1243 = vmatprep.subr.mxu0 0.0
        %1244 = vmatpush2.msra.mxu0 0.0
        %1245 = vmatprep.subr.mxu0 0.0
        %1246 = vmatpush2.msra.mxu0 0.0
        %1247 = vmatprep.subr.mxu0 0.0
        %1248 = vmatpush2.msra.mxu0 0.0
        %1249 = vmatprep.subr.mxu0 0.0
        %1250 = vmatpush2.msra.mxu0 0.0
        %1251 = vmatprep.mubr.f32.mxu0 0.0
        %v1252 = vand.u32 %v1181, 4294901760
        %v1253 = vsub.f32 %v1181, %v1252
        %v1254 = vand.u32 %v1253, 4294901760
        %v1255 = vsub.f32 %v1253, %v1254
        %v1256 = vand.u32 %v1255, 4294901760
        %1257 = vmatmul.mubr.f32.gmra.mxu0 %v1256
        %v1258 = vpop.f32.mrf.mxu0
        %v1259 = vadd.f32 0.0, %v1258
        %v1260 = vpop.f32.mrf.mxu0
        %1261 = vdwg.mxu0
        %1262 = vmatprep.subr.mxu0 0.0
        %1263 = vmatpush1.msra.mxu0 0.0
        %1264 = vmatprep.subr.mxu0 0.0
        %1265 = vmatpush1.msra.mxu0 0.0
        %1266 = vmatprep.subr.mxu0 0.0
        %1267 = vmatpush1.msra.mxu0 0.0
        %1268 = vmatprep.subr.mxu0 0.0
        %1269 = vmatpush1.msra.mxu0 0.0
        %1270 = vmatprep.subr.mxu0 0.0
        %1271 = vmatpush1.msra.mxu0 0.0
        %1272 = vmatprep.subr.mxu0 0.0
        %1273 = vmatpush1.msra.mxu0 0.0
        %1274 = vmatprep.subr.mxu0 0.0
        %1275 = vmatpush1.msra.mxu0 0.0
        %1276 = vmatprep.subr.mxu0 0.0
        %1277 = vmatpush1.msra.mxu0 0.0
        %1278 = vmatprep.subr.mxu0 0.0
        %1279 = vmatpush1.msra.mxu0 0.0
        %1280 = vmatprep.subr.mxu0 0.0
        %1281 = vmatpush1.msra.mxu0 0.0
        %1282 = vmatprep.subr.mxu0 0.0
        %1283 = vmatpush1.msra.mxu0 0.0
        %1284 = vmatprep.subr.mxu0 0.0
        %1285 = vmatpush1.msra.mxu0 0.0
        %1286 = vmatprep.subr.mxu0 0.0
        %v1287 = vand.u32 %v1179, 4294901760
        %v1288 = vsub.f32 %v1179, %v1287
        %v1289 = vand.u32 %v1288, 4294901760
        %v1290 = vsub.f32 %v1288, %v1289
        %v1291 = vand.u32 %v1290, 4294901760
        %1292 = vmatpush1.msra.mxu0 %v1291
        %1293 = vmatprep.subr.mxu0 0.0
        %v1294 = vand.u32 %v1178, 4294901760
        %v1295 = vsub.f32 %v1178, %v1294
        %v1296 = vand.u32 %v1295, 4294901760
        %v1297 = vsub.f32 %v1295, %v1296
        %v1298 = vand.u32 %v1297, 4294901760
        %1299 = vmatpush1.msra.mxu0 %v1298
        %1300 = vmatprep.subr.mxu0 0.0
        %v1301 = vand.u32 %v1177, 4294901760
        %v1302 = vsub.f32 %v1177, %v1301
        %v1303 = vand.u32 %v1302, 4294901760
        %v1304 = vsub.f32 %v1302, %v1303
        %v1305 = vand.u32 %v1304, 4294901760
        %1306 = vmatpush1.msra.mxu0 %v1305
        %1307 = vmatprep.subr.mxu0 0.0
        %v1308 = vand.u32 %v1176, 4294901760
        %v1309 = vsub.f32 %v1176, %v1308
        %v1310 = vand.u32 %v1309, 4294901760
        %v1311 = vsub.f32 %v1309, %v1310
        %v1312 = vand.u32 %v1311, 4294901760
        %1313 = vmatpush1.msra.mxu0 %v1312
        %1314 = vmatprep.subr.mxu0 0.0
        %1315 = vmatpush2.msra.mxu0 0.0
        %1316 = vmatprep.subr.mxu0 0.0
        %1317 = vmatpush2.msra.mxu0 0.0
        %1318 = vmatprep.subr.mxu0 0.0
        %1319 = vmatpush2.msra.mxu0 0.0
        %1320 = vmatprep.subr.mxu0 0.0
        %1321 = vmatpush2.msra.mxu0 0.0
        %1322 = vmatprep.subr.mxu0 0.0
        %1323 = vmatpush2.msra.mxu0 0.0
        %1324 = vmatprep.subr.mxu0 0.0
        %1325 = vmatpush2.msra.mxu0 0.0
        %1326 = vmatprep.subr.mxu0 0.0
        %1327 = vmatpush2.msra.mxu0 0.0
        %1328 = vmatprep.subr.mxu0 0.0
        %1329 = vmatpush2.msra.mxu0 0.0
        %1330 = vmatprep.subr.mxu0 0.0
        %1331 = vmatpush2.msra.mxu0 0.0
        %1332 = vmatprep.subr.mxu0 0.0
        %1333 = vmatpush2.msra.mxu0 0.0
        %1334 = vmatprep.subr.mxu0 0.0
        %1335 = vmatpush2.msra.mxu0 0.0
        %1336 = vmatprep.subr.mxu0 0.0
        %1337 = vmatpush2.msra.mxu0 0.0
        %1338 = vmatprep.subr.mxu0 0.0
        %1339 = vmatpush2.msra.mxu0 0.0
        %1340 = vmatprep.subr.mxu0 0.0
        %1341 = vmatpush2.msra.mxu0 0.0
        %1342 = vmatprep.subr.mxu0 0.0
        %1343 = vmatpush2.msra.mxu0 0.0
        %1344 = vmatprep.subr.mxu0 0.0
        %1345 = vmatpush2.msra.mxu0 0.0
        %1346 = vmatprep.mubr.f32.mxu0 0.0
        %v1347 = vand.u32 %v1181, 4294901760
        %1348 = vmatmul.mubr.f32.gmra.mxu0 %v1347
        %v1349 = vpop.f32.mrf.mxu0
        %v1350 = vadd.f32 %v1259, %v1349
        %v1351 = vpop.f32.mrf.mxu0
        %1352 = vdwg.mxu0
        %1353 = vmatprep.subr.mxu0 0.0
        %1354 = vmatpush1.msra.mxu0 0.0
        %1355 = vmatprep.subr.mxu0 0.0
        %1356 = vmatpush1.msra.mxu0 0.0
        %1357 = vmatprep.subr.mxu0 0.0
        %1358 = vmatpush1.msra.mxu0 0.0
        %1359 = vmatprep.subr.mxu0 0.0
        %1360 = vmatpush1.msra.mxu0 0.0
        %1361 = vmatprep.subr.mxu0 0.0
        %1362 = vmatpush1.msra.mxu0 0.0
        %1363 = vmatprep.subr.mxu0 0.0
        %1364 = vmatpush1.msra.mxu0 0.0
        %1365 = vmatprep.subr.mxu0 0.0
        %1366 = vmatpush1.msra.mxu0 0.0
        %1367 = vmatprep.subr.mxu0 0.0
        %1368 = vmatpush1.msra.mxu0 0.0
        %1369 = vmatprep.subr.mxu0 0.0
        %1370 = vmatpush1.msra.mxu0 0.0
        %1371 = vmatprep.subr.mxu0 0.0
        %1372 = vmatpush1.msra.mxu0 0.0
        %1373 = vmatprep.subr.mxu0 0.0
        %1374 = vmatpush1.msra.mxu0 0.0
        %1375 = vmatprep.subr.mxu0 0.0
        %1376 = vmatpush1.msra.mxu0 0.0
        %1377 = vmatprep.subr.mxu0 0.0
        %v1378 = vand.u32 %v1179, 4294901760
        %v1379 = vsub.f32 %v1179, %v1378
        %1380 = vmatpush1.msra.mxu0 %v1379
        %1381 = vmatprep.subr.mxu0 0.0
        %v1382 = vand.u32 %v1178, 4294901760
        %v1383 = vsub.f32 %v1178, %v1382
        %1384 = vmatpush1.msra.mxu0 %v1383
        %1385 = vmatprep.subr.mxu0 0.0
        %v1386 = vand.u32 %v1177, 4294901760
        %v1387 = vsub.f32 %v1177, %v1386
        %1388 = vmatpush1.msra.mxu0 %v1387
        %1389 = vmatprep.subr.mxu0 0.0
        %v1390 = vand.u32 %v1176, 4294901760
        %v1391 = vsub.f32 %v1176, %v1390
        %1392 = vmatpush1.msra.mxu0 %v1391
        %1393 = vmatprep.subr.mxu0 0.0
        %1394 = vmatpush2.msra.mxu0 0.0
        %1395 = vmatprep.subr.mxu0 0.0
        %1396 = vmatpush2.msra.mxu0 0.0
        %1397 = vmatprep.subr.mxu0 0.0
        %1398 = vmatpush2.msra.mxu0 0.0
        %1399 = vmatprep.subr.mxu0 0.0
        %1400 = vmatpush2.msra.mxu0 0.0
        %1401 = vmatprep.subr.mxu0 0.0
        %1402 = vmatpush2.msra.mxu0 0.0
        %1403 = vmatprep.subr.mxu0 0.0
        %1404 = vmatpush2.msra.mxu0 0.0
        %1405 = vmatprep.subr.mxu0 0.0
        %1406 = vmatpush2.msra.mxu0 0.0
        %1407 = vmatprep.subr.mxu0 0.0
        %1408 = vmatpush2.msra.mxu0 0.0
        %1409 = vmatprep.subr.mxu0 0.0
        %1410 = vmatpush2.msra.mxu0 0.0
        %1411 = vmatprep.subr.mxu0 0.0
        %1412 = vmatpush2.msra.mxu0 0.0
        %1413 = vmatprep.subr.mxu0 0.0
        %1414 = vmatpush2.msra.mxu0 0.0
        %1415 = vmatprep.subr.mxu0 0.0
        %1416 = vmatpush2.msra.mxu0 0.0
        %1417 = vmatprep.subr.mxu0 0.0
        %1418 = vmatpush2.msra.mxu0 0.0
        %1419 = vmatprep.subr.mxu0 0.0
        %1420 = vmatpush2.msra.mxu0 0.0
        %1421 = vmatprep.subr.mxu0 0.0
        %1422 = vmatpush2.msra.mxu0 0.0
        %1423 = vmatprep.subr.mxu0 0.0
        %1424 = vmatpush2.msra.mxu0 0.0
        %1425 = vmatprep.mubr.f32.mxu0 0.0
        %v1426 = vand.u32 %v1181, 4294901760
        %v1427 = vsub.f32 %v1181, %v1426
        %1428 = vmatmul.mubr.f32.gmra.mxu0 %v1427
        %v1429 = vpop.f32.mrf.mxu0
        %v1430 = vadd.f32 %v1350, %v1429
        %v1431 = vpop.f32.mrf.mxu0
        %1432 = vdwg.mxu0
        %1433 = vmatprep.subr.mxu0 0.0
        %1434 = vmatpush1.msra.mxu0 0.0
        %1435 = vmatprep.subr.mxu0 0.0
        %1436 = vmatpush1.msra.mxu0 0.0
        %1437 = vmatprep.subr.mxu0 0.0
        %1438 = vmatpush1.msra.mxu0 0.0
        %1439 = vmatprep.subr.mxu0 0.0
        %1440 = vmatpush1.msra.mxu0 0.0
        %1441 = vmatprep.subr.mxu0 0.0
        %1442 = vmatpush1.msra.mxu0 0.0
        %1443 = vmatprep.subr.mxu0 0.0
        %1444 = vmatpush1.msra.mxu0 0.0
        %1445 = vmatprep.subr.mxu0 0.0
        %1446 = vmatpush1.msra.mxu0 0.0
        %1447 = vmatprep.subr.mxu0 0.0
        %1448 = vmatpush1.msra.mxu0 0.0
        %1449 = vmatprep.subr.mxu0 0.0
        %1450 = vmatpush1.msra.mxu0 0.0
        %1451 = vmatprep.subr.mxu0 0.0
        %1452 = vmatpush1.msra.mxu0 0.0
        %1453 = vmatprep.subr.mxu0 0.0
        %1454 = vmatpush1.msra.mxu0 0.0
        %1455 = vmatprep.subr.mxu0 0.0
        %1456 = vmatpush1.msra.mxu0 0.0
        %1457 = vmatprep.subr.mxu0 0.0
        %v1458 = vand.u32 %v1179, 4294901760
        %1459 = vmatpush1.msra.mxu0 %v1458
        %1460 = vmatprep.subr.mxu0 0.0
        %v1461 = vand.u32 %v1178, 4294901760
        %1462 = vmatpush1.msra.mxu0 %v1461
        %1463 = vmatprep.subr.mxu0 0.0
        %v1464 = vand.u32 %v1177, 4294901760
        %1465 = vmatpush1.msra.mxu0 %v1464
        %1466 = vmatprep.subr.mxu0 0.0
        %v1467 = vand.u32 %v1176, 4294901760
        %1468 = vmatpush1.msra.mxu0 %v1467
        %1469 = vmatprep.subr.mxu0 0.0
        %1470 = vmatpush2.msra.mxu0 0.0
        %1471 = vmatprep.subr.mxu0 0.0
        %1472 = vmatpush2.msra.mxu0 0.0
        %1473 = vmatprep.subr.mxu0 0.0
        %1474 = vmatpush2.msra.mxu0 0.0
        %1475 = vmatprep.subr.mxu0 0.0
        %1476 = vmatpush2.msra.mxu0 0.0
        %1477 = vmatprep.subr.mxu0 0.0
        %1478 = vmatpush2.msra.mxu0 0.0
        %1479 = vmatprep.subr.mxu0 0.0
        %1480 = vmatpush2.msra.mxu0 0.0
        %1481 = vmatprep.subr.mxu0 0.0
        %1482 = vmatpush2.msra.mxu0 0.0
        %1483 = vmatprep.subr.mxu0 0.0
        %1484 = vmatpush2.msra.mxu0 0.0
        %1485 = vmatprep.subr.mxu0 0.0
        %1486 = vmatpush2.msra.mxu0 0.0
        %1487 = vmatprep.subr.mxu0 0.0
        %1488 = vmatpush2.msra.mxu0 0.0
        %1489 = vmatprep.subr.mxu0 0.0
        %1490 = vmatpush2.msra.mxu0 0.0
        %1491 = vmatprep.subr.mxu0 0.0
        %1492 = vmatpush2.msra.mxu0 0.0
        %1493 = vmatprep.subr.mxu0 0.0
        %1494 = vmatpush2.msra.mxu0 0.0
        %1495 = vmatprep.subr.mxu0 0.0
        %1496 = vmatpush2.msra.mxu0 0.0
        %1497 = vmatprep.subr.mxu0 0.0
        %1498 = vmatpush2.msra.mxu0 0.0
        %1499 = vmatprep.subr.mxu0 0.0
        %1500 = vmatpush2.msra.mxu0 0.0
        %1501 = vmatprep.mubr.f32.mxu0 0.0
        %v1502 = vand.u32 %v1181, 4294901760
        %v1503 = vsub.f32 %v1181, %v1502
        %v1504 = vand.u32 %v1503, 4294901760
        %1505 = vmatmul.mubr.f32.gmra.mxu0 %v1504
        %v1506 = vpop.f32.mrf.mxu0
        %v1507 = vadd.f32 %v1430, %v1506
        %v1508 = vpop.f32.mrf.mxu0
        %1509 = vdwg.mxu0
        %1510 = vmatprep.subr.mxu0 0.0
        %1511 = vmatpush1.msra.mxu0 0.0
        %1512 = vmatprep.subr.mxu0 0.0
        %1513 = vmatpush1.msra.mxu0 0.0
        %1514 = vmatprep.subr.mxu0 0.0
        %1515 = vmatpush1.msra.mxu0 0.0
        %1516 = vmatprep.subr.mxu0 0.0
        %1517 = vmatpush1.msra.mxu0 0.0
        %1518 = vmatprep.subr.mxu0 0.0
        %1519 = vmatpush1.msra.mxu0 0.0
        %1520 = vmatprep.subr.mxu0 0.0
        %1521 = vmatpush1.msra.mxu0 0.0
        %1522 = vmatprep.subr.mxu0 0.0
        %1523 = vmatpush1.msra.mxu0 0.0
        %1524 = vmatprep.subr.mxu0 0.0
        %1525 = vmatpush1.msra.mxu0 0.0
        %1526 = vmatprep.subr.mxu0 0.0
        %1527 = vmatpush1.msra.mxu0 0.0
        %1528 = vmatprep.subr.mxu0 0.0
        %1529 = vmatpush1.msra.mxu0 0.0
        %1530 = vmatprep.subr.mxu0 0.0
        %1531 = vmatpush1.msra.mxu0 0.0
        %1532 = vmatprep.subr.mxu0 0.0
        %1533 = vmatpush1.msra.mxu0 0.0
        %1534 = vmatprep.subr.mxu0 0.0
        %v1535 = vand.u32 %v1179, 4294901760
        %v1536 = vsub.f32 %v1179, %v1535
        %v1537 = vand.u32 %v1536, 4294901760
        %1538 = vmatpush1.msra.mxu0 %v1537
        %1539 = vmatprep.subr.mxu0 0.0
        %v1540 = vand.u32 %v1178, 4294901760
        %v1541 = vsub.f32 %v1178, %v1540
        %v1542 = vand.u32 %v1541, 4294901760
        %1543 = vmatpush1.msra.mxu0 %v1542
        %1544 = vmatprep.subr.mxu0 0.0
        %v1545 = vand.u32 %v1177, 4294901760
        %v1546 = vsub.f32 %v1177, %v1545
        %v1547 = vand.u32 %v1546, 4294901760
        %1548 = vmatpush1.msra.mxu0 %v1547
        %1549 = vmatprep.subr.mxu0 0.0
        %v1550 = vand.u32 %v1176, 4294901760
        %v1551 = vsub.f32 %v1176, %v1550
        %v1552 = vand.u32 %v1551, 4294901760
        %1553 = vmatpush1.msra.mxu0 %v1552
        %1554 = vmatprep.subr.mxu0 0.0
        %1555 = vmatpush2.msra.mxu0 0.0
        %1556 = vmatprep.subr.mxu0 0.0
        %1557 = vmatpush2.msra.mxu0 0.0
        %1558 = vmatprep.subr.mxu0 0.0
        %1559 = vmatpush2.msra.mxu0 0.0
        %1560 = vmatprep.subr.mxu0 0.0
        %1561 = vmatpush2.msra.mxu0 0.0
        %1562 = vmatprep.subr.mxu0 0.0
        %1563 = vmatpush2.msra.mxu0 0.0
        %1564 = vmatprep.subr.mxu0 0.0
        %1565 = vmatpush2.msra.mxu0 0.0
        %1566 = vmatprep.subr.mxu0 0.0
        %1567 = vmatpush2.msra.mxu0 0.0
        %1568 = vmatprep.subr.mxu0 0.0
        %1569 = vmatpush2.msra.mxu0 0.0
        %1570 = vmatprep.subr.mxu0 0.0
        %1571 = vmatpush2.msra.mxu0 0.0
        %1572 = vmatprep.subr.mxu0 0.0
        %1573 = vmatpush2.msra.mxu0 0.0
        %1574 = vmatprep.subr.mxu0 0.0
        %1575 = vmatpush2.msra.mxu0 0.0
        %1576 = vmatprep.subr.mxu0 0.0
        %1577 = vmatpush2.msra.mxu0 0.0
        %1578 = vmatprep.subr.mxu0 0.0
        %1579 = vmatpush2.msra.mxu0 0.0
        %1580 = vmatprep.subr.mxu0 0.0
        %1581 = vmatpush2.msra.mxu0 0.0
        %1582 = vmatprep.subr.mxu0 0.0
        %1583 = vmatpush2.msra.mxu0 0.0
        %1584 = vmatprep.subr.mxu0 0.0
        %1585 = vmatpush2.msra.mxu0 0.0
        %1586 = vmatprep.mubr.f32.mxu0 0.0
        %v1587 = vand.u32 %v1181, 4294901760
        %1588 = vmatmul.mubr.f32.gmra.mxu0 %v1587
        %v1589 = vpop.f32.mrf.mxu0
        %v1590 = vadd.f32 %v1507, %v1589
        %v1591 = vpop.f32.mrf.mxu0
        %1592 = vdwg.mxu0
        %1593 = vmatprep.subr.mxu0 0.0
        %1594 = vmatpush1.msra.mxu0 0.0
        %1595 = vmatprep.subr.mxu0 0.0
        %1596 = vmatpush1.msra.mxu0 0.0
        %1597 = vmatprep.subr.mxu0 0.0
        %1598 = vmatpush1.msra.mxu0 0.0
        %1599 = vmatprep.subr.mxu0 0.0
        %1600 = vmatpush1.msra.mxu0 0.0
        %1601 = vmatprep.subr.mxu0 0.0
        %1602 = vmatpush1.msra.mxu0 0.0
        %1603 = vmatprep.subr.mxu0 0.0
        %1604 = vmatpush1.msra.mxu0 0.0
        %1605 = vmatprep.subr.mxu0 0.0
        %1606 = vmatpush1.msra.mxu0 0.0
        %1607 = vmatprep.subr.mxu0 0.0
        %1608 = vmatpush1.msra.mxu0 0.0
        %1609 = vmatprep.subr.mxu0 0.0
        %1610 = vmatpush1.msra.mxu0 0.0
        %1611 = vmatprep.subr.mxu0 0.0
        %1612 = vmatpush1.msra.mxu0 0.0
        %1613 = vmatprep.subr.mxu0 0.0
        %1614 = vmatpush1.msra.mxu0 0.0
        %1615 = vmatprep.subr.mxu0 0.0
        %1616 = vmatpush1.msra.mxu0 0.0
        %1617 = vmatprep.subr.mxu0 0.0
        %v1618 = vand.u32 %v1179, 4294901760
        %1619 = vmatpush1.msra.mxu0 %v1618
        %1620 = vmatprep.subr.mxu0 0.0
        %v1621 = vand.u32 %v1178, 4294901760
        %1622 = vmatpush1.msra.mxu0 %v1621
        %1623 = vmatprep.subr.mxu0 0.0
        %v1624 = vand.u32 %v1177, 4294901760
        %1625 = vmatpush1.msra.mxu0 %v1624
        %1626 = vmatprep.subr.mxu0 0.0
        %v1627 = vand.u32 %v1176, 4294901760
        %1628 = vmatpush1.msra.mxu0 %v1627
        %1629 = vmatprep.subr.mxu0 0.0
        %1630 = vmatpush2.msra.mxu0 0.0
        %1631 = vmatprep.subr.mxu0 0.0
        %1632 = vmatpush2.msra.mxu0 0.0
        %1633 = vmatprep.subr.mxu0 0.0
        %1634 = vmatpush2.msra.mxu0 0.0
        %1635 = vmatprep.subr.mxu0 0.0
        %1636 = vmatpush2.msra.mxu0 0.0
        %1637 = vmatprep.subr.mxu0 0.0
        %1638 = vmatpush2.msra.mxu0 0.0
        %1639 = vmatprep.subr.mxu0 0.0
        %1640 = vmatpush2.msra.mxu0 0.0
        %1641 = vmatprep.subr.mxu0 0.0
        %1642 = vmatpush2.msra.mxu0 0.0
        %1643 = vmatprep.subr.mxu0 0.0
        %1644 = vmatpush2.msra.mxu0 0.0
        %1645 = vmatprep.subr.mxu0 0.0
        %1646 = vmatpush2.msra.mxu0 0.0
        %1647 = vmatprep.subr.mxu0 0.0
        %1648 = vmatpush2.msra.mxu0 0.0
        %1649 = vmatprep.subr.mxu0 0.0
        %1650 = vmatpush2.msra.mxu0 0.0
        %1651 = vmatprep.subr.mxu0 0.0
        %1652 = vmatpush2.msra.mxu0 0.0
        %1653 = vmatprep.subr.mxu0 0.0
        %1654 = vmatpush2.msra.mxu0 0.0
        %1655 = vmatprep.subr.mxu0 0.0
        %1656 = vmatpush2.msra.mxu0 0.0
        %1657 = vmatprep.subr.mxu0 0.0
        %1658 = vmatpush2.msra.mxu0 0.0
        %1659 = vmatprep.subr.mxu0 0.0
        %1660 = vmatpush2.msra.mxu0 0.0
        %1661 = vmatprep.mubr.f32.mxu0 0.0
        %v1662 = vand.u32 %v1181, 4294901760
        %1663 = vmatmul.mubr.f32.gmra.mxu0 %v1662
        %v1664 = vpop.f32.mrf.mxu0
        %v1665 = vadd.f32 %v1590, %v1664
        %v1666 = vpop.f32.mrf.mxu0
        %1667 = vdwg.mxu0
        %v1669 = vsel %vm1135, %v1169, 0
        %1671 = vmatprep.subr.mxu0 0.0
        %1672 = vmatpush1.msra.mxu0 0.0
        %1673 = vmatprep.subr.mxu0 0.0
        %1674 = vmatpush1.msra.mxu0 0.0
        %1675 = vmatprep.subr.mxu0 0.0
        %1676 = vmatpush1.msra.mxu0 0.0
        %1677 = vmatprep.subr.mxu0 0.0
        %1678 = vmatpush1.msra.mxu0 0.0
        %1679 = vmatprep.subr.mxu0 0.0
        %1680 = vmatpush1.msra.mxu0 0.0
        %1681 = vmatprep.subr.mxu0 0.0
        %1682 = vmatpush1.msra.mxu0 0.0
        %1683 = vmatprep.subr.mxu0 0.0
        %1684 = vmatpush1.msra.mxu0 0.0
        %1685 = vmatprep.subr.mxu0 0.0
        %1686 = vmatpush1.msra.mxu0 0.0
        %1687 = vmatprep.subr.mxu0 0.0
        %1688 = vmatpush1.msra.mxu0 0.0
        %1689 = vmatprep.subr.mxu0 0.0
        %1690 = vmatpush1.msra.mxu0 0.0
        %1691 = vmatprep.subr.mxu0 0.0
        %1692 = vmatpush1.msra.mxu0 0.0
        %1693 = vmatprep.subr.mxu0 0.0
        %1694 = vmatpush1.msra.mxu0 0.0
        %1695 = vmatprep.subr.mxu0 0.0
        %v1696 = vand.u32 %v1175, 4294901760
        %1697 = vmatpush1.msra.mxu0 %v1696
        %1698 = vmatprep.subr.mxu0 0.0
        %v1699 = vand.u32 %v1174, 4294901760
        %1700 = vmatpush1.msra.mxu0 %v1699
        %1701 = vmatprep.subr.mxu0 0.0
        %v1702 = vand.u32 %v1173, 4294901760
        %1703 = vmatpush1.msra.mxu0 %v1702
        %1704 = vmatprep.subr.mxu0 0.0
        %v1705 = vand.u32 %v1172, 4294901760
        %1706 = vmatpush1.msra.mxu0 %v1705
        %1707 = vmatprep.subr.mxu0 0.0
        %1708 = vmatpush2.msra.mxu0 0.0
        %1709 = vmatprep.subr.mxu0 0.0
        %1710 = vmatpush2.msra.mxu0 0.0
        %1711 = vmatprep.subr.mxu0 0.0
        %1712 = vmatpush2.msra.mxu0 0.0
        %1713 = vmatprep.subr.mxu0 0.0
        %1714 = vmatpush2.msra.mxu0 0.0
        %1715 = vmatprep.subr.mxu0 0.0
        %1716 = vmatpush2.msra.mxu0 0.0
        %1717 = vmatprep.subr.mxu0 0.0
        %1718 = vmatpush2.msra.mxu0 0.0
        %1719 = vmatprep.subr.mxu0 0.0
        %1720 = vmatpush2.msra.mxu0 0.0
        %1721 = vmatprep.subr.mxu0 0.0
        %1722 = vmatpush2.msra.mxu0 0.0
        %1723 = vmatprep.subr.mxu0 0.0
        %1724 = vmatpush2.msra.mxu0 0.0
        %1725 = vmatprep.subr.mxu0 0.0
        %1726 = vmatpush2.msra.mxu0 0.0
        %1727 = vmatprep.subr.mxu0 0.0
        %1728 = vmatpush2.msra.mxu0 0.0
        %1729 = vmatprep.subr.mxu0 0.0
        %1730 = vmatpush2.msra.mxu0 0.0
        %1731 = vmatprep.subr.mxu0 0.0
        %1732 = vmatpush2.msra.mxu0 0.0
        %1733 = vmatprep.subr.mxu0 0.0
        %1734 = vmatpush2.msra.mxu0 0.0
        %1735 = vmatprep.subr.mxu0 0.0
        %1736 = vmatpush2.msra.mxu0 0.0
        %1737 = vmatprep.subr.mxu0 0.0
        %1738 = vmatpush2.msra.mxu0 0.0
        %1739 = vmatprep.mubr.f32.mxu0 0.0
        %v1740 = vand.u32 %v1669, 4294901760
        %v1741 = vsub.f32 %v1669, %v1740
        %v1742 = vand.u32 %v1741, 4294901760
        %v1743 = vsub.f32 %v1741, %v1742
        %v1744 = vand.u32 %v1743, 4294901760
        %1745 = vmatmul.mubr.f32.gmra.mxu0 %v1744
        %v1746 = vpop.f32.mrf.mxu0
        %v1747 = vadd.f32 %v1665, %v1746
        %v1748 = vpop.f32.mrf.mxu0
        %1749 = vdwg.mxu0
        %1750 = vmatprep.subr.mxu0 0.0
        %1751 = vmatpush1.msra.mxu0 0.0
        %1752 = vmatprep.subr.mxu0 0.0
        %1753 = vmatpush1.msra.mxu0 0.0
        %1754 = vmatprep.subr.mxu0 0.0
        %1755 = vmatpush1.msra.mxu0 0.0
        %1756 = vmatprep.subr.mxu0 0.0
        %1757 = vmatpush1.msra.mxu0 0.0
        %1758 = vmatprep.subr.mxu0 0.0
        %1759 = vmatpush1.msra.mxu0 0.0
        %1760 = vmatprep.subr.mxu0 0.0
        %1761 = vmatpush1.msra.mxu0 0.0
        %1762 = vmatprep.subr.mxu0 0.0
        %1763 = vmatpush1.msra.mxu0 0.0
        %1764 = vmatprep.subr.mxu0 0.0
        %1765 = vmatpush1.msra.mxu0 0.0
        %1766 = vmatprep.subr.mxu0 0.0
        %1767 = vmatpush1.msra.mxu0 0.0
        %1768 = vmatprep.subr.mxu0 0.0
        %1769 = vmatpush1.msra.mxu0 0.0
        %1770 = vmatprep.subr.mxu0 0.0
        %1771 = vmatpush1.msra.mxu0 0.0
        %1772 = vmatprep.subr.mxu0 0.0
        %1773 = vmatpush1.msra.mxu0 0.0
        %1774 = vmatprep.subr.mxu0 0.0
        %v1775 = vand.u32 %v1175, 4294901760
        %v1776 = vsub.f32 %v1175, %v1775
        %v1777 = vand.u32 %v1776, 4294901760
        %v1778 = vsub.f32 %v1776, %v1777
        %v1779 = vand.u32 %v1778, 4294901760
        %1780 = vmatpush1.msra.mxu0 %v1779
        %1781 = vmatprep.subr.mxu0 0.0
        %v1782 = vand.u32 %v1174, 4294901760
        %v1783 = vsub.f32 %v1174, %v1782
        %v1784 = vand.u32 %v1783, 4294901760
        %v1785 = vsub.f32 %v1783, %v1784
        %v1786 = vand.u32 %v1785, 4294901760
        %1787 = vmatpush1.msra.mxu0 %v1786
        %1788 = vmatprep.subr.mxu0 0.0
        %v1789 = vand.u32 %v1173, 4294901760
        %v1790 = vsub.f32 %v1173, %v1789
        %v1791 = vand.u32 %v1790, 4294901760
        %v1792 = vsub.f32 %v1790, %v1791
        %v1793 = vand.u32 %v1792, 4294901760
        %1794 = vmatpush1.msra.mxu0 %v1793
        %1795 = vmatprep.subr.mxu0 0.0
        %v1796 = vand.u32 %v1172, 4294901760
        %v1797 = vsub.f32 %v1172, %v1796
        %v1798 = vand.u32 %v1797, 4294901760
        %v1799 = vsub.f32 %v1797, %v1798
        %v1800 = vand.u32 %v1799, 4294901760
        %1801 = vmatpush1.msra.mxu0 %v1800
        %1802 = vmatprep.subr.mxu0 0.0
        %1803 = vmatpush2.msra.mxu0 0.0
        %1804 = vmatprep.subr.mxu0 0.0
        %1805 = vmatpush2.msra.mxu0 0.0
        %1806 = vmatprep.subr.mxu0 0.0
        %1807 = vmatpush2.msra.mxu0 0.0
        %1808 = vmatprep.subr.mxu0 0.0
        %1809 = vmatpush2.msra.mxu0 0.0
        %1810 = vmatprep.subr.mxu0 0.0
        %1811 = vmatpush2.msra.mxu0 0.0
        %1812 = vmatprep.subr.mxu0 0.0
        %1813 = vmatpush2.msra.mxu0 0.0
        %1814 = vmatprep.subr.mxu0 0.0
        %1815 = vmatpush2.msra.mxu0 0.0
        %1816 = vmatprep.subr.mxu0 0.0
        %1817 = vmatpush2.msra.mxu0 0.0
        %1818 = vmatprep.subr.mxu0 0.0
        %1819 = vmatpush2.msra.mxu0 0.0
        %1820 = vmatprep.subr.mxu0 0.0
        %1821 = vmatpush2.msra.mxu0 0.0
        %1822 = vmatprep.subr.mxu0 0.0
        %1823 = vmatpush2.msra.mxu0 0.0
        %1824 = vmatprep.subr.mxu0 0.0
        %1825 = vmatpush2.msra.mxu0 0.0
        %1826 = vmatprep.subr.mxu0 0.0
        %1827 = vmatpush2.msra.mxu0 0.0
        %1828 = vmatprep.subr.mxu0 0.0
        %1829 = vmatpush2.msra.mxu0 0.0
        %1830 = vmatprep.subr.mxu0 0.0
        %1831 = vmatpush2.msra.mxu0 0.0
        %1832 = vmatprep.subr.mxu0 0.0
        %1833 = vmatpush2.msra.mxu0 0.0
        %1834 = vmatprep.mubr.f32.mxu0 0.0
        %v1835 = vand.u32 %v1669, 4294901760
        %1836 = vmatmul.mubr.f32.gmra.mxu0 %v1835
        %v1837 = vpop.f32.mrf.mxu0
        %v1838 = vadd.f32 %v1747, %v1837
        %v1839 = vpop.f32.mrf.mxu0
        %1840 = vdwg.mxu0
        %1841 = vmatprep.subr.mxu0 0.0
        %1842 = vmatpush1.msra.mxu0 0.0
        %1843 = vmatprep.subr.mxu0 0.0
        %1844 = vmatpush1.msra.mxu0 0.0
        %1845 = vmatprep.subr.mxu0 0.0
        %1846 = vmatpush1.msra.mxu0 0.0
        %1847 = vmatprep.subr.mxu0 0.0
        %1848 = vmatpush1.msra.mxu0 0.0
        %1849 = vmatprep.subr.mxu0 0.0
        %1850 = vmatpush1.msra.mxu0 0.0
        %1851 = vmatprep.subr.mxu0 0.0
        %1852 = vmatpush1.msra.mxu0 0.0
        %1853 = vmatprep.subr.mxu0 0.0
        %1854 = vmatpush1.msra.mxu0 0.0
        %1855 = vmatprep.subr.mxu0 0.0
        %1856 = vmatpush1.msra.mxu0 0.0
        %1857 = vmatprep.subr.mxu0 0.0
        %1858 = vmatpush1.msra.mxu0 0.0
        %1859 = vmatprep.subr.mxu0 0.0
        %1860 = vmatpush1.msra.mxu0 0.0
        %1861 = vmatprep.subr.mxu0 0.0
        %1862 = vmatpush1.msra.mxu0 0.0
        %1863 = vmatprep.subr.mxu0 0.0
        %1864 = vmatpush1.msra.mxu0 0.0
        %1865 = vmatprep.subr.mxu0 0.0
        %v1866 = vand.u32 %v1175, 4294901760
        %v1867 = vsub.f32 %v1175, %v1866
        %1868 = vmatpush1.msra.mxu0 %v1867
        %1869 = vmatprep.subr.mxu0 0.0
        %v1870 = vand.u32 %v1174, 4294901760
        %v1871 = vsub.f32 %v1174, %v1870
        %1872 = vmatpush1.msra.mxu0 %v1871
        %1873 = vmatprep.subr.mxu0 0.0
        %v1874 = vand.u32 %v1173, 4294901760
        %v1875 = vsub.f32 %v1173, %v1874
        %1876 = vmatpush1.msra.mxu0 %v1875
        %1877 = vmatprep.subr.mxu0 0.0
        %v1878 = vand.u32 %v1172, 4294901760
        %v1879 = vsub.f32 %v1172, %v1878
        %1880 = vmatpush1.msra.mxu0 %v1879
        %1881 = vmatprep.subr.mxu0 0.0
        %1882 = vmatpush2.msra.mxu0 0.0
        %1883 = vmatprep.subr.mxu0 0.0
        %1884 = vmatpush2.msra.mxu0 0.0
        %1885 = vmatprep.subr.mxu0 0.0
        %1886 = vmatpush2.msra.mxu0 0.0
        %1887 = vmatprep.subr.mxu0 0.0
        %1888 = vmatpush2.msra.mxu0 0.0
        %1889 = vmatprep.subr.mxu0 0.0
        %1890 = vmatpush2.msra.mxu0 0.0
        %1891 = vmatprep.subr.mxu0 0.0
        %1892 = vmatpush2.msra.mxu0 0.0
        %1893 = vmatprep.subr.mxu0 0.0
        %1894 = vmatpush2.msra.mxu0 0.0
        %1895 = vmatprep.subr.mxu0 0.0
        %1896 = vmatpush2.msra.mxu0 0.0
        %1897 = vmatprep.subr.mxu0 0.0
        %1898 = vmatpush2.msra.mxu0 0.0
        %1899 = vmatprep.subr.mxu0 0.0
        %1900 = vmatpush2.msra.mxu0 0.0
        %1901 = vmatprep.subr.mxu0 0.0
        %1902 = vmatpush2.msra.mxu0 0.0
        %1903 = vmatprep.subr.mxu0 0.0
        %1904 = vmatpush2.msra.mxu0 0.0
        %1905 = vmatprep.subr.mxu0 0.0
        %1906 = vmatpush2.msra.mxu0 0.0
        %1907 = vmatprep.subr.mxu0 0.0
        %1908 = vmatpush2.msra.mxu0 0.0
        %1909 = vmatprep.subr.mxu0 0.0
        %1910 = vmatpush2.msra.mxu0 0.0
        %1911 = vmatprep.subr.mxu0 0.0
        %1912 = vmatpush2.msra.mxu0 0.0
        %1913 = vmatprep.mubr.f32.mxu0 0.0
        %v1914 = vand.u32 %v1669, 4294901760
        %v1915 = vsub.f32 %v1669, %v1914
        %1916 = vmatmul.mubr.f32.gmra.mxu0 %v1915
        %v1917 = vpop.f32.mrf.mxu0
        %v1918 = vadd.f32 %v1838, %v1917
        %v1919 = vpop.f32.mrf.mxu0
        %1920 = vdwg.mxu0
        %1921 = vmatprep.subr.mxu0 0.0
        %1922 = vmatpush1.msra.mxu0 0.0
        %1923 = vmatprep.subr.mxu0 0.0
        %1924 = vmatpush1.msra.mxu0 0.0
        %1925 = vmatprep.subr.mxu0 0.0
        %1926 = vmatpush1.msra.mxu0 0.0
        %1927 = vmatprep.subr.mxu0 0.0
        %1928 = vmatpush1.msra.mxu0 0.0
        %1929 = vmatprep.subr.mxu0 0.0
        %1930 = vmatpush1.msra.mxu0 0.0
        %1931 = vmatprep.subr.mxu0 0.0
        %1932 = vmatpush1.msra.mxu0 0.0
        %1933 = vmatprep.subr.mxu0 0.0
        %1934 = vmatpush1.msra.mxu0 0.0
        %1935 = vmatprep.subr.mxu0 0.0
        %1936 = vmatpush1.msra.mxu0 0.0
        %1937 = vmatprep.subr.mxu0 0.0
        %1938 = vmatpush1.msra.mxu0 0.0
        %1939 = vmatprep.subr.mxu0 0.0
        %1940 = vmatpush1.msra.mxu0 0.0
        %1941 = vmatprep.subr.mxu0 0.0
        %1942 = vmatpush1.msra.mxu0 0.0
        %1943 = vmatprep.subr.mxu0 0.0
        %1944 = vmatpush1.msra.mxu0 0.0
        %1945 = vmatprep.subr.mxu0 0.0
        %v1946 = vand.u32 %v1175, 4294901760
        %1947 = vmatpush1.msra.mxu0 %v1946
        %1948 = vmatprep.subr.mxu0 0.0
        %v1949 = vand.u32 %v1174, 4294901760
        %1950 = vmatpush1.msra.mxu0 %v1949
        %1951 = vmatprep.subr.mxu0 0.0
        %v1952 = vand.u32 %v1173, 4294901760
        %1953 = vmatpush1.msra.mxu0 %v1952
        %1954 = vmatprep.subr.mxu0 0.0
        %v1955 = vand.u32 %v1172, 4294901760
        %1956 = vmatpush1.msra.mxu0 %v1955
        %1957 = vmatprep.subr.mxu0 0.0
        %1958 = vmatpush2.msra.mxu0 0.0
        %1959 = vmatprep.subr.mxu0 0.0
        %1960 = vmatpush2.msra.mxu0 0.0
        %1961 = vmatprep.subr.mxu0 0.0
        %1962 = vmatpush2.msra.mxu0 0.0
        %1963 = vmatprep.subr.mxu0 0.0
        %1964 = vmatpush2.msra.mxu0 0.0
        %1965 = vmatprep.subr.mxu0 0.0
        %1966 = vmatpush2.msra.mxu0 0.0
        %1967 = vmatprep.subr.mxu0 0.0
        %1968 = vmatpush2.msra.mxu0 0.0
        %1969 = vmatprep.subr.mxu0 0.0
        %1970 = vmatpush2.msra.mxu0 0.0
        %1971 = vmatprep.subr.mxu0 0.0
        %1972 = vmatpush2.msra.mxu0 0.0
        %1973 = vmatprep.subr.mxu0 0.0
        %1974 = vmatpush2.msra.mxu0 0.0
        %1975 = vmatprep.subr.mxu0 0.0
        %1976 = vmatpush2.msra.mxu0 0.0
        %1977 = vmatprep.subr.mxu0 0.0
        %1978 = vmatpush2.msra.mxu0 0.0
        %1979 = vmatprep.subr.mxu0 0.0
        %1980 = vmatpush2.msra.mxu0 0.0
        %1981 = vmatprep.subr.mxu0 0.0
        %1982 = vmatpush2.msra.mxu0 0.0
        %1983 = vmatprep.subr.mxu0 0.0
        %1984 = vmatpush2.msra.mxu0 0.0
        %1985 = vmatprep.subr.mxu0 0.0
        %1986 = vmatpush2.msra.mxu0 0.0
        %1987 = vmatprep.subr.mxu0 0.0
        %1988 = vmatpush2.msra.mxu0 0.0
        %1989 = vmatprep.mubr.f32.mxu0 0.0
        %v1990 = vand.u32 %v1669, 4294901760
        %v1991 = vsub.f32 %v1669, %v1990
        %v1992 = vand.u32 %v1991, 4294901760
        %1993 = vmatmul.mubr.f32.gmra.mxu0 %v1992
        %v1994 = vpop.f32.mrf.mxu0
        %v1995 = vadd.f32 %v1918, %v1994
        %v1996 = vpop.f32.mrf.mxu0
        %1997 = vdwg.mxu0
        %1998 = vmatprep.subr.mxu0 0.0
        %1999 = vmatpush1.msra.mxu0 0.0
        %2000 = vmatprep.subr.mxu0 0.0
        %2001 = vmatpush1.msra.mxu0 0.0
        %2002 = vmatprep.subr.mxu0 0.0
        %2003 = vmatpush1.msra.mxu0 0.0
        %2004 = vmatprep.subr.mxu0 0.0
        %2005 = vmatpush1.msra.mxu0 0.0
        %2006 = vmatprep.subr.mxu0 0.0
        %2007 = vmatpush1.msra.mxu0 0.0
        %2008 = vmatprep.subr.mxu0 0.0
        %2009 = vmatpush1.msra.mxu0 0.0
        %2010 = vmatprep.subr.mxu0 0.0
        %2011 = vmatpush1.msra.mxu0 0.0
        %2012 = vmatprep.subr.mxu0 0.0
        %2013 = vmatpush1.msra.mxu0 0.0
        %2014 = vmatprep.subr.mxu0 0.0
        %2015 = vmatpush1.msra.mxu0 0.0
        %2016 = vmatprep.subr.mxu0 0.0
        %2017 = vmatpush1.msra.mxu0 0.0
        %2018 = vmatprep.subr.mxu0 0.0
        %2019 = vmatpush1.msra.mxu0 0.0
        %2020 = vmatprep.subr.mxu0 0.0
        %2021 = vmatpush1.msra.mxu0 0.0
        %2022 = vmatprep.subr.mxu0 0.0
        %v2023 = vand.u32 %v1175, 4294901760
        %v2024 = vsub.f32 %v1175, %v2023
        %v2025 = vand.u32 %v2024, 4294901760
        %2026 = vmatpush1.msra.mxu0 %v2025
        %2027 = vmatprep.subr.mxu0 0.0
        %v2028 = vand.u32 %v1174, 4294901760
        %v2029 = vsub.f32 %v1174, %v2028
        %v2030 = vand.u32 %v2029, 4294901760
        %2031 = vmatpush1.msra.mxu0 %v2030
        %2032 = vmatprep.subr.mxu0 0.0
        %v2033 = vand.u32 %v1173, 4294901760
        %v2034 = vsub.f32 %v1173, %v2033
        %v2035 = vand.u32 %v2034, 4294901760
        %2036 = vmatpush1.msra.mxu0 %v2035
        %2037 = vmatprep.subr.mxu0 0.0
        %v2038 = vand.u32 %v1172, 4294901760
        %v2039 = vsub.f32 %v1172, %v2038
        %v2040 = vand.u32 %v2039, 4294901760
        %2041 = vmatpush1.msra.mxu0 %v2040
        %2042 = vmatprep.subr.mxu0 0.0
        %2043 = vmatpush2.msra.mxu0 0.0
        %2044 = vmatprep.subr.mxu0 0.0
        %2045 = vmatpush2.msra.mxu0 0.0
        %2046 = vmatprep.subr.mxu0 0.0
        %2047 = vmatpush2.msra.mxu0 0.0
        %2048 = vmatprep.subr.mxu0 0.0
        %2049 = vmatpush2.msra.mxu0 0.0
        %2050 = vmatprep.subr.mxu0 0.0
        %2051 = vmatpush2.msra.mxu0 0.0
        %2052 = vmatprep.subr.mxu0 0.0
        %2053 = vmatpush2.msra.mxu0 0.0
        %2054 = vmatprep.subr.mxu0 0.0
        %2055 = vmatpush2.msra.mxu0 0.0
        %2056 = vmatprep.subr.mxu0 0.0
        %2057 = vmatpush2.msra.mxu0 0.0
        %2058 = vmatprep.subr.mxu0 0.0
        %2059 = vmatpush2.msra.mxu0 0.0
        %2060 = vmatprep.subr.mxu0 0.0
        %2061 = vmatpush2.msra.mxu0 0.0
        %2062 = vmatprep.subr.mxu0 0.0
        %2063 = vmatpush2.msra.mxu0 0.0
        %2064 = vmatprep.subr.mxu0 0.0
        %2065 = vmatpush2.msra.mxu0 0.0
        %2066 = vmatprep.subr.mxu0 0.0
        %2067 = vmatpush2.msra.mxu0 0.0
        %2068 = vmatprep.subr.mxu0 0.0
        %2069 = vmatpush2.msra.mxu0 0.0
        %2070 = vmatprep.subr.mxu0 0.0
        %2071 = vmatpush2.msra.mxu0 0.0
        %2072 = vmatprep.subr.mxu0 0.0
        %2073 = vmatpush2.msra.mxu0 0.0
        %2074 = vmatprep.mubr.f32.mxu0 0.0
        %v2075 = vand.u32 %v1669, 4294901760
        %2076 = vmatmul.mubr.f32.gmra.mxu0 %v2075
        %v2077 = vpop.f32.mrf.mxu0
        %v2078 = vadd.f32 %v1995, %v2077
        %v2079 = vpop.f32.mrf.mxu0
        %2080 = vdwg.mxu0
        %2081 = vmatprep.subr.mxu0 0.0
        %2082 = vmatpush1.msra.mxu0 0.0
        %2083 = vmatprep.subr.mxu0 0.0
        %2084 = vmatpush1.msra.mxu0 0.0
        %2085 = vmatprep.subr.mxu0 0.0
        %2086 = vmatpush1.msra.mxu0 0.0
        %2087 = vmatprep.subr.mxu0 0.0
        %2088 = vmatpush1.msra.mxu0 0.0
        %2089 = vmatprep.subr.mxu0 0.0
        %2090 = vmatpush1.msra.mxu0 0.0
        %2091 = vmatprep.subr.mxu0 0.0
        %2092 = vmatpush1.msra.mxu0 0.0
        %2093 = vmatprep.subr.mxu0 0.0
        %2094 = vmatpush1.msra.mxu0 0.0
        %2095 = vmatprep.subr.mxu0 0.0
        %2096 = vmatpush1.msra.mxu0 0.0
        %2097 = vmatprep.subr.mxu0 0.0
        %2098 = vmatpush1.msra.mxu0 0.0
        %2099 = vmatprep.subr.mxu0 0.0
        %2100 = vmatpush1.msra.mxu0 0.0
        %2101 = vmatprep.subr.mxu0 0.0
        %2102 = vmatpush1.msra.mxu0 0.0
        %2103 = vmatprep.subr.mxu0 0.0
        %2104 = vmatpush1.msra.mxu0 0.0
        %2105 = vmatprep.subr.mxu0 0.0
        %v2106 = vand.u32 %v1175, 4294901760
        %2107 = vmatpush1.msra.mxu0 %v2106
        %2108 = vmatprep.subr.mxu0 0.0
        %v2109 = vand.u32 %v1174, 4294901760
        %2110 = vmatpush1.msra.mxu0 %v2109
        %2111 = vmatprep.subr.mxu0 0.0
        %v2112 = vand.u32 %v1173, 4294901760
        %2113 = vmatpush1.msra.mxu0 %v2112
        %2114 = vmatprep.subr.mxu0 0.0
        %v2115 = vand.u32 %v1172, 4294901760
        %2116 = vmatpush1.msra.mxu0 %v2115
        %2117 = vmatprep.subr.mxu0 0.0
        %2118 = vmatpush2.msra.mxu0 0.0
        %2119 = vmatprep.subr.mxu0 0.0
        %2120 = vmatpush2.msra.mxu0 0.0
        %2121 = vmatprep.subr.mxu0 0.0
        %2122 = vmatpush2.msra.mxu0 0.0
        %2123 = vmatprep.subr.mxu0 0.0
        %2124 = vmatpush2.msra.mxu0 0.0
        %2125 = vmatprep.subr.mxu0 0.0
        %2126 = vmatpush2.msra.mxu0 0.0
        %2127 = vmatprep.subr.mxu0 0.0
        %2128 = vmatpush2.msra.mxu0 0.0
        %2129 = vmatprep.subr.mxu0 0.0
        %2130 = vmatpush2.msra.mxu0 0.0
        %2131 = vmatprep.subr.mxu0 0.0
        %2132 = vmatpush2.msra.mxu0 0.0
        %2133 = vmatprep.subr.mxu0 0.0
        %2134 = vmatpush2.msra.mxu0 0.0
        %2135 = vmatprep.subr.mxu0 0.0
        %2136 = vmatpush2.msra.mxu0 0.0
        %2137 = vmatprep.subr.mxu0 0.0
        %2138 = vmatpush2.msra.mxu0 0.0
        %2139 = vmatprep.subr.mxu0 0.0
        %2140 = vmatpush2.msra.mxu0 0.0
        %2141 = vmatprep.subr.mxu0 0.0
        %2142 = vmatpush2.msra.mxu0 0.0
        %2143 = vmatprep.subr.mxu0 0.0
        %2144 = vmatpush2.msra.mxu0 0.0
        %2145 = vmatprep.subr.mxu0 0.0
        %2146 = vmatpush2.msra.mxu0 0.0
        %2147 = vmatprep.subr.mxu0 0.0
        %2148 = vmatpush2.msra.mxu0 0.0
        %2149 = vmatprep.mubr.f32.mxu0 0.0
        %v2150 = vand.u32 %v1669, 4294901760
        %2151 = vmatmul.mubr.f32.gmra.mxu0 %v2150
        %v2152 = vpop.f32.mrf.mxu0
        %v2153 = vadd.f32 %v2078, %v2152
        %v2154 = vpop.f32.mrf.mxu0
        %2155 = vdwg.mxu0
        %v2156 = vld [vmem:[#allocation10] sm:$0xff]
        %v2157 = vld [vmem:[#allocation10 + $0x8] sm:$0xff]
        %v2158 = vld [vmem:[#allocation10 + $0x10] sm:$0xff]
        %v2159 = vld [vmem:[#allocation10 + $0x18] sm:$0xff]
        %v2161 = vsel %vm1135, %v1171, 0
        %2163 = vmatprep.subr.mxu0 0.0
        %2164 = vmatpush1.msra.mxu0 0.0
        %2165 = vmatprep.subr.mxu0 0.0
        %2166 = vmatpush1.msra.mxu0 0.0
        %2167 = vmatprep.subr.mxu0 0.0
        %2168 = vmatpush1.msra.mxu0 0.0
        %2169 = vmatprep.subr.mxu0 0.0
        %2170 = vmatpush1.msra.mxu0 0.0
        %2171 = vmatprep.subr.mxu0 0.0
        %2172 = vmatpush1.msra.mxu0 0.0
        %2173 = vmatprep.subr.mxu0 0.0
        %2174 = vmatpush1.msra.mxu0 0.0
        %2175 = vmatprep.subr.mxu0 0.0
        %2176 = vmatpush1.msra.mxu0 0.0
        %2177 = vmatprep.subr.mxu0 0.0
        %2178 = vmatpush1.msra.mxu0 0.0
        %2179 = vmatprep.subr.mxu0 0.0
        %2180 = vmatpush1.msra.mxu0 0.0
        %2181 = vmatprep.subr.mxu0 0.0
        %2182 = vmatpush1.msra.mxu0 0.0
        %2183 = vmatprep.subr.mxu0 0.0
        %2184 = vmatpush1.msra.mxu0 0.0
        %2185 = vmatprep.subr.mxu0 0.0
        %2186 = vmatpush1.msra.mxu0 0.0
        %2187 = vmatprep.subr.mxu0 0.0
        %v2188 = vand.u32 %v2159, 4294901760
        %2189 = vmatpush1.msra.mxu0 %v2188
        %2190 = vmatprep.subr.mxu0 0.0
        %v2191 = vand.u32 %v2158, 4294901760
        %2192 = vmatpush1.msra.mxu0 %v2191
        %2193 = vmatprep.subr.mxu0 0.0
        %v2194 = vand.u32 %v2157, 4294901760
        %2195 = vmatpush1.msra.mxu0 %v2194
        %2196 = vmatprep.subr.mxu0 0.0
        %v2197 = vand.u32 %v2156, 4294901760
        %2198 = vmatpush1.msra.mxu0 %v2197
        %2199 = vmatprep.subr.mxu0 0.0
        %2200 = vmatpush2.msra.mxu0 0.0
        %2201 = vmatprep.subr.mxu0 0.0
        %2202 = vmatpush2.msra.mxu0 0.0
        %2203 = vmatprep.subr.mxu0 0.0
        %2204 = vmatpush2.msra.mxu0 0.0
        %2205 = vmatprep.subr.mxu0 0.0
        %2206 = vmatpush2.msra.mxu0 0.0
        %2207 = vmatprep.subr.mxu0 0.0
        %2208 = vmatpush2.msra.mxu0 0.0
        %2209 = vmatprep.subr.mxu0 0.0
        %2210 = vmatpush2.msra.mxu0 0.0
        %2211 = vmatprep.subr.mxu0 0.0
        %2212 = vmatpush2.msra.mxu0 0.0
        %2213 = vmatprep.subr.mxu0 0.0
        %2214 = vmatpush2.msra.mxu0 0.0
        %2215 = vmatprep.subr.mxu0 0.0
        %2216 = vmatpush2.msra.mxu0 0.0
        %2217 = vmatprep.subr.mxu0 0.0
        %2218 = vmatpush2.msra.mxu0 0.0
        %2219 = vmatprep.subr.mxu0 0.0
        %2220 = vmatpush2.msra.mxu0 0.0
        %2221 = vmatprep.subr.mxu0 0.0
        %2222 = vmatpush2.msra.mxu0 0.0
        %2223 = vmatprep.subr.mxu0 0.0
        %2224 = vmatpush2.msra.mxu0 0.0
        %2225 = vmatprep.subr.mxu0 0.0
        %2226 = vmatpush2.msra.mxu0 0.0
        %2227 = vmatprep.subr.mxu0 0.0
        %2228 = vmatpush2.msra.mxu0 0.0
        %2229 = vmatprep.subr.mxu0 0.0
        %2230 = vmatpush2.msra.mxu0 0.0
        %2231 = vmatprep.mubr.f32.mxu0 0.0
        %v2232 = vand.u32 %v2161, 4294901760
        %v2233 = vsub.f32 %v2161, %v2232
        %v2234 = vand.u32 %v2233, 4294901760
        %v2235 = vsub.f32 %v2233, %v2234
        %v2236 = vand.u32 %v2235, 4294901760
        %2237 = vmatmul.mubr.f32.gmra.mxu0 %v2236
        %v2238 = vpop.f32.mrf.mxu0
        %v2239 = vadd.f32 0.0, %v2238
        %v2240 = vpop.f32.mrf.mxu0
        %2241 = vdwg.mxu0
        %2242 = vmatprep.subr.mxu0 0.0
        %2243 = vmatpush1.msra.mxu0 0.0
        %2244 = vmatprep.subr.mxu0 0.0
        %2245 = vmatpush1.msra.mxu0 0.0
        %2246 = vmatprep.subr.mxu0 0.0
        %2247 = vmatpush1.msra.mxu0 0.0
        %2248 = vmatprep.subr.mxu0 0.0
        %2249 = vmatpush1.msra.mxu0 0.0
        %2250 = vmatprep.subr.mxu0 0.0
        %2251 = vmatpush1.msra.mxu0 0.0
        %2252 = vmatprep.subr.mxu0 0.0
        %2253 = vmatpush1.msra.mxu0 0.0
        %2254 = vmatprep.subr.mxu0 0.0
        %2255 = vmatpush1.msra.mxu0 0.0
        %2256 = vmatprep.subr.mxu0 0.0
        %2257 = vmatpush1.msra.mxu0 0.0
        %2258 = vmatprep.subr.mxu0 0.0
        %2259 = vmatpush1.msra.mxu0 0.0
        %2260 = vmatprep.subr.mxu0 0.0
        %2261 = vmatpush1.msra.mxu0 0.0
        %2262 = vmatprep.subr.mxu0 0.0
        %2263 = vmatpush1.msra.mxu0 0.0
        %2264 = vmatprep.subr.mxu0 0.0
        %2265 = vmatpush1.msra.mxu0 0.0
        %2266 = vmatprep.subr.mxu0 0.0
        %v2267 = vand.u32 %v2159, 4294901760
        %v2268 = vsub.f32 %v2159, %v2267
        %v2269 = vand.u32 %v2268, 4294901760
        %v2270 = vsub.f32 %v2268, %v2269
        %v2271 = vand.u32 %v2270, 4294901760
        %2272 = vmatpush1.msra.mxu0 %v2271
        %2273 = vmatprep.subr.mxu0 0.0
        %v2274 = vand.u32 %v2158, 4294901760
        %v2275 = vsub.f32 %v2158, %v2274
        %v2276 = vand.u32 %v2275, 4294901760
        %v2277 = vsub.f32 %v2275, %v2276
        %v2278 = vand.u32 %v2277, 4294901760
        %2279 = vmatpush1.msra.mxu0 %v2278
        %2280 = vmatprep.subr.mxu0 0.0
        %v2281 = vand.u32 %v2157, 4294901760
        %v2282 = vsub.f32 %v2157, %v2281
        %v2283 = vand.u32 %v2282, 4294901760
        %v2284 = vsub.f32 %v2282, %v2283
        %v2285 = vand.u32 %v2284, 4294901760
        %2286 = vmatpush1.msra.mxu0 %v2285
        %2287 = vmatprep.subr.mxu0 0.0
        %v2288 = vand.u32 %v2156, 4294901760
        %v2289 = vsub.f32 %v2156, %v2288
        %v2290 = vand.u32 %v2289, 4294901760
        %v2291 = vsub.f32 %v2289, %v2290
        %v2292 = vand.u32 %v2291, 4294901760
        %2293 = vmatpush1.msra.mxu0 %v2292
        %2294 = vmatprep.subr.mxu0 0.0
        %2295 = vmatpush2.msra.mxu0 0.0
        %2296 = vmatprep.subr.mxu0 0.0
        %2297 = vmatpush2.msra.mxu0 0.0
        %2298 = vmatprep.subr.mxu0 0.0
        %2299 = vmatpush2.msra.mxu0 0.0
        %2300 = vmatprep.subr.mxu0 0.0
        %2301 = vmatpush2.msra.mxu0 0.0
        %2302 = vmatprep.subr.mxu0 0.0
        %2303 = vmatpush2.msra.mxu0 0.0
        %2304 = vmatprep.subr.mxu0 0.0
        %2305 = vmatpush2.msra.mxu0 0.0
        %2306 = vmatprep.subr.mxu0 0.0
        %2307 = vmatpush2.msra.mxu0 0.0
        %2308 = vmatprep.subr.mxu0 0.0
        %2309 = vmatpush2.msra.mxu0 0.0
        %2310 = vmatprep.subr.mxu0 0.0
        %2311 = vmatpush2.msra.mxu0 0.0
        %2312 = vmatprep.subr.mxu0 0.0
        %2313 = vmatpush2.msra.mxu0 0.0
        %2314 = vmatprep.subr.mxu0 0.0
        %2315 = vmatpush2.msra.mxu0 0.0
        %2316 = vmatprep.subr.mxu0 0.0
        %2317 = vmatpush2.msra.mxu0 0.0
        %2318 = vmatprep.subr.mxu0 0.0
        %2319 = vmatpush2.msra.mxu0 0.0
        %2320 = vmatprep.subr.mxu0 0.0
        %2321 = vmatpush2.msra.mxu0 0.0
        %2322 = vmatprep.subr.mxu0 0.0
        %2323 = vmatpush2.msra.mxu0 0.0
        %2324 = vmatprep.subr.mxu0 0.0
        %2325 = vmatpush2.msra.mxu0 0.0
        %2326 = vmatprep.mubr.f32.mxu0 0.0
        %v2327 = vand.u32 %v2161, 4294901760
        %2328 = vmatmul.mubr.f32.gmra.mxu0 %v2327
        %v2329 = vpop.f32.mrf.mxu0
        %v2330 = vadd.f32 %v2239, %v2329
        %v2331 = vpop.f32.mrf.mxu0
        %2332 = vdwg.mxu0
        %2333 = vmatprep.subr.mxu0 0.0
        %2334 = vmatpush1.msra.mxu0 0.0
        %2335 = vmatprep.subr.mxu0 0.0
        %2336 = vmatpush1.msra.mxu0 0.0
        %2337 = vmatprep.subr.mxu0 0.0
        %2338 = vmatpush1.msra.mxu0 0.0
        %2339 = vmatprep.subr.mxu0 0.0
        %2340 = vmatpush1.msra.mxu0 0.0
        %2341 = vmatprep.subr.mxu0 0.0
        %2342 = vmatpush1.msra.mxu0 0.0
        %2343 = vmatprep.subr.mxu0 0.0
        %2344 = vmatpush1.msra.mxu0 0.0
        %2345 = vmatprep.subr.mxu0 0.0
        %2346 = vmatpush1.msra.mxu0 0.0
        %2347 = vmatprep.subr.mxu0 0.0
        %2348 = vmatpush1.msra.mxu0 0.0
        %2349 = vmatprep.subr.mxu0 0.0
        %2350 = vmatpush1.msra.mxu0 0.0
        %2351 = vmatprep.subr.mxu0 0.0
        %2352 = vmatpush1.msra.mxu0 0.0
        %2353 = vmatprep.subr.mxu0 0.0
        %2354 = vmatpush1.msra.mxu0 0.0
        %2355 = vmatprep.subr.mxu0 0.0
        %2356 = vmatpush1.msra.mxu0 0.0
        %2357 = vmatprep.subr.mxu0 0.0
        %v2358 = vand.u32 %v2159, 4294901760
        %v2359 = vsub.f32 %v2159, %v2358
        %2360 = vmatpush1.msra.mxu0 %v2359
        %2361 = vmatprep.subr.mxu0 0.0
        %v2362 = vand.u32 %v2158, 4294901760
        %v2363 = vsub.f32 %v2158, %v2362
        %2364 = vmatpush1.msra.mxu0 %v2363
        %2365 = vmatprep.subr.mxu0 0.0
        %v2366 = vand.u32 %v2157, 4294901760
        %v2367 = vsub.f32 %v2157, %v2366
        %2368 = vmatpush1.msra.mxu0 %v2367
        %2369 = vmatprep.subr.mxu0 0.0
        %v2370 = vand.u32 %v2156, 4294901760
        %v2371 = vsub.f32 %v2156, %v2370
        %2372 = vmatpush1.msra.mxu0 %v2371
        %2373 = vmatprep.subr.mxu0 0.0
        %2374 = vmatpush2.msra.mxu0 0.0
        %2375 = vmatprep.subr.mxu0 0.0
        %2376 = vmatpush2.msra.mxu0 0.0
        %2377 = vmatprep.subr.mxu0 0.0
        %2378 = vmatpush2.msra.mxu0 0.0
        %2379 = vmatprep.subr.mxu0 0.0
        %2380 = vmatpush2.msra.mxu0 0.0
        %2381 = vmatprep.subr.mxu0 0.0
        %2382 = vmatpush2.msra.mxu0 0.0
        %2383 = vmatprep.subr.mxu0 0.0
        %2384 = vmatpush2.msra.mxu0 0.0
        %2385 = vmatprep.subr.mxu0 0.0
        %2386 = vmatpush2.msra.mxu0 0.0
        %2387 = vmatprep.subr.mxu0 0.0
        %2388 = vmatpush2.msra.mxu0 0.0
        %2389 = vmatprep.subr.mxu0 0.0
        %2390 = vmatpush2.msra.mxu0 0.0
        %2391 = vmatprep.subr.mxu0 0.0
        %2392 = vmatpush2.msra.mxu0 0.0
        %2393 = vmatprep.subr.mxu0 0.0
        %2394 = vmatpush2.msra.mxu0 0.0
        %2395 = vmatprep.subr.mxu0 0.0
        %2396 = vmatpush2.msra.mxu0 0.0
        %2397 = vmatprep.subr.mxu0 0.0
        %2398 = vmatpush2.msra.mxu0 0.0
        %2399 = vmatprep.subr.mxu0 0.0
        %2400 = vmatpush2.msra.mxu0 0.0
        %2401 = vmatprep.subr.mxu0 0.0
        %2402 = vmatpush2.msra.mxu0 0.0
        %2403 = vmatprep.subr.mxu0 0.0
        %2404 = vmatpush2.msra.mxu0 0.0
        %2405 = vmatprep.mubr.f32.mxu0 0.0
        %v2406 = vand.u32 %v2161, 4294901760
        %v2407 = vsub.f32 %v2161, %v2406
        %2408 = vmatmul.mubr.f32.gmra.mxu0 %v2407
        %v2409 = vpop.f32.mrf.mxu0
        %v2410 = vadd.f32 %v2330, %v2409
        %v2411 = vpop.f32.mrf.mxu0
        %2412 = vdwg.mxu0
        %2413 = vmatprep.subr.mxu0 0.0
        %2414 = vmatpush1.msra.mxu0 0.0
        %2415 = vmatprep.subr.mxu0 0.0
        %2416 = vmatpush1.msra.mxu0 0.0
        %2417 = vmatprep.subr.mxu0 0.0
        %2418 = vmatpush1.msra.mxu0 0.0
        %2419 = vmatprep.subr.mxu0 0.0
        %2420 = vmatpush1.msra.mxu0 0.0
        %2421 = vmatprep.subr.mxu0 0.0
        %2422 = vmatpush1.msra.mxu0 0.0
        %2423 = vmatprep.subr.mxu0 0.0
        %2424 = vmatpush1.msra.mxu0 0.0
        %2425 = vmatprep.subr.mxu0 0.0
        %2426 = vmatpush1.msra.mxu0 0.0
        %2427 = vmatprep.subr.mxu0 0.0
        %2428 = vmatpush1.msra.mxu0 0.0
        %2429 = vmatprep.subr.mxu0 0.0
        %2430 = vmatpush1.msra.mxu0 0.0
        %2431 = vmatprep.subr.mxu0 0.0
        %2432 = vmatpush1.msra.mxu0 0.0
        %2433 = vmatprep.subr.mxu0 0.0
        %2434 = vmatpush1.msra.mxu0 0.0
        %2435 = vmatprep.subr.mxu0 0.0
        %2436 = vmatpush1.msra.mxu0 0.0
        %2437 = vmatprep.subr.mxu0 0.0
        %v2438 = vand.u32 %v2159, 4294901760
        %2439 = vmatpush1.msra.mxu0 %v2438
        %2440 = vmatprep.subr.mxu0 0.0
        %v2441 = vand.u32 %v2158, 4294901760
        %2442 = vmatpush1.msra.mxu0 %v2441
        %2443 = vmatprep.subr.mxu0 0.0
        %v2444 = vand.u32 %v2157, 4294901760
        %2445 = vmatpush1.msra.mxu0 %v2444
        %2446 = vmatprep.subr.mxu0 0.0
        %v2447 = vand.u32 %v2156, 4294901760
        %2448 = vmatpush1.msra.mxu0 %v2447
        %2449 = vmatprep.subr.mxu0 0.0
        %2450 = vmatpush2.msra.mxu0 0.0
        %2451 = vmatprep.subr.mxu0 0.0
        %2452 = vmatpush2.msra.mxu0 0.0
        %2453 = vmatprep.subr.mxu0 0.0
        %2454 = vmatpush2.msra.mxu0 0.0
        %2455 = vmatprep.subr.mxu0 0.0
        %2456 = vmatpush2.msra.mxu0 0.0
        %2457 = vmatprep.subr.mxu0 0.0
        %2458 = vmatpush2.msra.mxu0 0.0
        %2459 = vmatprep.subr.mxu0 0.0
        %2460 = vmatpush2.msra.mxu0 0.0
        %2461 = vmatprep.subr.mxu0 0.0
        %2462 = vmatpush2.msra.mxu0 0.0
        %2463 = vmatprep.subr.mxu0 0.0
        %2464 = vmatpush2.msra.mxu0 0.0
        %2465 = vmatprep.subr.mxu0 0.0
        %2466 = vmatpush2.msra.mxu0 0.0
        %2467 = vmatprep.subr.mxu0 0.0
        %2468 = vmatpush2.msra.mxu0 0.0
        %2469 = vmatprep.subr.mxu0 0.0
        %2470 = vmatpush2.msra.mxu0 0.0
        %2471 = vmatprep.subr.mxu0 0.0
        %2472 = vmatpush2.msra.mxu0 0.0
        %2473 = vmatprep.subr.mxu0 0.0
        %2474 = vmatpush2.msra.mxu0 0.0
        %2475 = vmatprep.subr.mxu0 0.0
        %2476 = vmatpush2.msra.mxu0 0.0
        %2477 = vmatprep.subr.mxu0 0.0
        %2478 = vmatpush2.msra.mxu0 0.0
        %2479 = vmatprep.subr.mxu0 0.0
        %2480 = vmatpush2.msra.mxu0 0.0
        %2481 = vmatprep.mubr.f32.mxu0 0.0
        %v2482 = vand.u32 %v2161, 4294901760
        %v2483 = vsub.f32 %v2161, %v2482
        %v2484 = vand.u32 %v2483, 4294901760
        %2485 = vmatmul.mubr.f32.gmra.mxu0 %v2484
        %v2486 = vpop.f32.mrf.mxu0
        %v2487 = vadd.f32 %v2410, %v2486
        %v2488 = vpop.f32.mrf.mxu0
        %2489 = vdwg.mxu0
        %2490 = vmatprep.subr.mxu0 0.0
        %2491 = vmatpush1.msra.mxu0 0.0
        %2492 = vmatprep.subr.mxu0 0.0
        %2493 = vmatpush1.msra.mxu0 0.0
        %2494 = vmatprep.subr.mxu0 0.0
        %2495 = vmatpush1.msra.mxu0 0.0
        %2496 = vmatprep.subr.mxu0 0.0
        %2497 = vmatpush1.msra.mxu0 0.0
        %2498 = vmatprep.subr.mxu0 0.0
        %2499 = vmatpush1.msra.mxu0 0.0
        %2500 = vmatprep.subr.mxu0 0.0
        %2501 = vmatpush1.msra.mxu0 0.0
        %2502 = vmatprep.subr.mxu0 0.0
        %2503 = vmatpush1.msra.mxu0 0.0
        %2504 = vmatprep.subr.mxu0 0.0
        %2505 = vmatpush1.msra.mxu0 0.0
        %2506 = vmatprep.subr.mxu0 0.0
        %2507 = vmatpush1.msra.mxu0 0.0
        %2508 = vmatprep.subr.mxu0 0.0
        %2509 = vmatpush1.msra.mxu0 0.0
        %2510 = vmatprep.subr.mxu0 0.0
        %2511 = vmatpush1.msra.mxu0 0.0
        %2512 = vmatprep.subr.mxu0 0.0
        %2513 = vmatpush1.msra.mxu0 0.0
        %2514 = vmatprep.subr.mxu0 0.0
        %v2515 = vand.u32 %v2159, 4294901760
        %v2516 = vsub.f32 %v2159, %v2515
        %v2517 = vand.u32 %v2516, 4294901760
        %2518 = vmatpush1.msra.mxu0 %v2517
        %2519 = vmatprep.subr.mxu0 0.0
        %v2520 = vand.u32 %v2158, 4294901760
        %v2521 = vsub.f32 %v2158, %v2520
        %v2522 = vand.u32 %v2521, 4294901760
        %2523 = vmatpush1.msra.mxu0 %v2522
        %2524 = vmatprep.subr.mxu0 0.0
        %v2525 = vand.u32 %v2157, 4294901760
        %v2526 = vsub.f32 %v2157, %v2525
        %v2527 = vand.u32 %v2526, 4294901760
        %2528 = vmatpush1.msra.mxu0 %v2527
        %2529 = vmatprep.subr.mxu0 0.0
        %v2530 = vand.u32 %v2156, 4294901760
        %v2531 = vsub.f32 %v2156, %v2530
        %v2532 = vand.u32 %v2531, 4294901760
        %2533 = vmatpush1.msra.mxu0 %v2532
        %2534 = vmatprep.subr.mxu0 0.0
        %2535 = vmatpush2.msra.mxu0 0.0
        %2536 = vmatprep.subr.mxu0 0.0
        %2537 = vmatpush2.msra.mxu0 0.0
        %2538 = vmatprep.subr.mxu0 0.0
        %2539 = vmatpush2.msra.mxu0 0.0
        %2540 = vmatprep.subr.mxu0 0.0
        %2541 = vmatpush2.msra.mxu0 0.0
        %2542 = vmatprep.subr.mxu0 0.0
        %2543 = vmatpush2.msra.mxu0 0.0
        %2544 = vmatprep.subr.mxu0 0.0
        %2545 = vmatpush2.msra.mxu0 0.0
        %2546 = vmatprep.subr.mxu0 0.0
        %2547 = vmatpush2.msra.mxu0 0.0
        %2548 = vmatprep.subr.mxu0 0.0
        %2549 = vmatpush2.msra.mxu0 0.0
        %2550 = vmatprep.subr.mxu0 0.0
        %2551 = vmatpush2.msra.mxu0 0.0
        %2552 = vmatprep.subr.mxu0 0.0
        %2553 = vmatpush2.msra.mxu0 0.0
        %2554 = vmatprep.subr.mxu0 0.0
        %2555 = vmatpush2.msra.mxu0 0.0
        %2556 = vmatprep.subr.mxu0 0.0
        %2557 = vmatpush2.msra.mxu0 0.0
        %2558 = vmatprep.subr.mxu0 0.0
        %2559 = vmatpush2.msra.mxu0 0.0
        %2560 = vmatprep.subr.mxu0 0.0
        %2561 = vmatpush2.msra.mxu0 0.0
        %2562 = vmatprep.subr.mxu0 0.0
        %2563 = vmatpush2.msra.mxu0 0.0
        %2564 = vmatprep.subr.mxu0 0.0
        %2565 = vmatpush2.msra.mxu0 0.0
        %2566 = vmatprep.mubr.f32.mxu0 0.0
        %v2567 = vand.u32 %v2161, 4294901760
        %2568 = vmatmul.mubr.f32.gmra.mxu0 %v2567
        %v2569 = vpop.f32.mrf.mxu0
        %v2570 = vadd.f32 %v2487, %v2569
        %v2571 = vpop.f32.mrf.mxu0
        %2572 = vdwg.mxu0
        %2573 = vmatprep.subr.mxu0 0.0
        %2574 = vmatpush1.msra.mxu0 0.0
        %2575 = vmatprep.subr.mxu0 0.0
        %2576 = vmatpush1.msra.mxu0 0.0
        %2577 = vmatprep.subr.mxu0 0.0
        %2578 = vmatpush1.msra.mxu0 0.0
        %2579 = vmatprep.subr.mxu0 0.0
        %2580 = vmatpush1.msra.mxu0 0.0
        %2581 = vmatprep.subr.mxu0 0.0
        %2582 = vmatpush1.msra.mxu0 0.0
        %2583 = vmatprep.subr.mxu0 0.0
        %2584 = vmatpush1.msra.mxu0 0.0
        %2585 = vmatprep.subr.mxu0 0.0
        %2586 = vmatpush1.msra.mxu0 0.0
        %2587 = vmatprep.subr.mxu0 0.0
        %2588 = vmatpush1.msra.mxu0 0.0
        %2589 = vmatprep.subr.mxu0 0.0
        %2590 = vmatpush1.msra.mxu0 0.0
        %2591 = vmatprep.subr.mxu0 0.0
        %2592 = vmatpush1.msra.mxu0 0.0
        %2593 = vmatprep.subr.mxu0 0.0
        %2594 = vmatpush1.msra.mxu0 0.0
        %2595 = vmatprep.subr.mxu0 0.0
        %2596 = vmatpush1.msra.mxu0 0.0
        %2597 = vmatprep.subr.mxu0 0.0
        %v2598 = vand.u32 %v2159, 4294901760
        %2599 = vmatpush1.msra.mxu0 %v2598
        %2600 = vmatprep.subr.mxu0 0.0
        %v2601 = vand.u32 %v2158, 4294901760
        %2602 = vmatpush1.msra.mxu0 %v2601
        %2603 = vmatprep.subr.mxu0 0.0
        %v2604 = vand.u32 %v2157, 4294901760
        %2605 = vmatpush1.msra.mxu0 %v2604
        %2606 = vmatprep.subr.mxu0 0.0
        %v2607 = vand.u32 %v2156, 4294901760
        %2608 = vmatpush1.msra.mxu0 %v2607
        %2609 = vmatprep.subr.mxu0 0.0
        %2610 = vmatpush2.msra.mxu0 0.0
        %2611 = vmatprep.subr.mxu0 0.0
        %2612 = vmatpush2.msra.mxu0 0.0
        %2613 = vmatprep.subr.mxu0 0.0
        %2614 = vmatpush2.msra.mxu0 0.0
        %2615 = vmatprep.subr.mxu0 0.0
        %2616 = vmatpush2.msra.mxu0 0.0
        %2617 = vmatprep.subr.mxu0 0.0
        %2618 = vmatpush2.msra.mxu0 0.0
        %2619 = vmatprep.subr.mxu0 0.0
        %2620 = vmatpush2.msra.mxu0 0.0
        %2621 = vmatprep.subr.mxu0 0.0
        %2622 = vmatpush2.msra.mxu0 0.0
        %2623 = vmatprep.subr.mxu0 0.0
        %2624 = vmatpush2.msra.mxu0 0.0
        %2625 = vmatprep.subr.mxu0 0.0
        %2626 = vmatpush2.msra.mxu0 0.0
        %2627 = vmatprep.subr.mxu0 0.0
        %2628 = vmatpush2.msra.mxu0 0.0
        %2629 = vmatprep.subr.mxu0 0.0
        %2630 = vmatpush2.msra.mxu0 0.0
        %2631 = vmatprep.subr.mxu0 0.0
        %2632 = vmatpush2.msra.mxu0 0.0
        %2633 = vmatprep.subr.mxu0 0.0
        %2634 = vmatpush2.msra.mxu0 0.0
        %2635 = vmatprep.subr.mxu0 0.0
        %2636 = vmatpush2.msra.mxu0 0.0
        %2637 = vmatprep.subr.mxu0 0.0
        %2638 = vmatpush2.msra.mxu0 0.0
        %2639 = vmatprep.subr.mxu0 0.0
        %2640 = vmatpush2.msra.mxu0 0.0
        %2641 = vmatprep.mubr.f32.mxu0 0.0
        %v2642 = vand.u32 %v2161, 4294901760
        %2643 = vmatmul.mubr.f32.gmra.mxu0 %v2642
        %v2644 = vpop.f32.mrf.mxu0
        %v2645 = vadd.f32 %v2570, %v2644
        %v2646 = vpop.f32.mrf.mxu0
        %2647 = vdwg.mxu0
        %v2648 = vadd.f32 %v2153, %v2645
        %v2649 = vld [vmem:[#allocation11] sm:$0x1]
        %v2650 = vadd.f32 %v2648, %v2649
        %v2651 = vmax.f32 %v2650, 0.0
        %v2652 = vand.u32 2147483647, %v2650
        %v2653 = vsub.f32 0.0, %v2652
        %v2654 = vmul.f32 %v2653, 1.442695
        %v2655 = vpow.pop %v2654
        %v2656 = vadd.f32 %v2655, 1.0
        %v2657 = vlog2.pop %v2656
        %v2658 = vmul.f32 %v2657, 0.6931472
        %v2659 = vmul.f32 -0.5, %v2655
        %v2660 = vadd.f32 %v2659, 1.0
        %v2661 = vmul.f32 %v2660, %v2655
        %v2662 = vand.u32 2147483647, %v2655
        %vm2663 = vcmp.lt.f32.partialorder %v2662, 0.0004427343
        %v2664 = vsel %vm2663, %v2661, %v2658
        %v2665 = vadd.f32 %v2651, %v2664
        %v2666 = vtanh.pop %v2665
        %v2667 = vmul.f32 %v2650, %v2666
        %v2668 = vld [vmem:[%s9] sm:$0xf]
        %v2669 = vlaneseq
        %v2670 = vshrl.u32 %v2669, 7
        %v2671 = vsub.s32 0, %v2670
        %v2672 = vrot.slane %v2667, %v2671
        %v2673 = vmul.f32 %v2668, %v2672
        %v2674 = vsel %vm530, %v2673, 0.0
        %2675 = vadd.xlane.f32.xlu0 %v2674
        %v2676 = vpop.xlane.xlu0 %2675
        %v2677 = vld [vmem:[%s10] sm:$0xf]
        %v2678 = vadd.f32 %v2676, %v2677
        %v2679 = vmax.f32 %v2678, 0.0
        %v2680 = vld [vmem:[%s11] sm:$0xf]
        %v2681 = vld [vmem:[%s12] sm:$0xf]
        %vm2682 = vcmask 31744
        %v2684 = vsel %vm2682, %v2680, 0
        %v2687 = vsel %vm530, %v2679, 0
        %2689 = vmatprep.subr.mxu0 0.0
        %2690 = vmatpush1.msra.mxu0 0.0
        %2691 = vmatprep.subr.mxu0 0.0
        %2692 = vmatpush1.msra.mxu0 0.0
        %2693 = vmatprep.subr.mxu0 0.0
        %2694 = vmatpush1.msra.mxu0 0.0
        %2695 = vmatprep.subr.mxu0 0.0
        %2696 = vmatpush1.msra.mxu0 0.0
        %2697 = vmatprep.subr.mxu0 0.0
        %2698 = vmatpush1.msra.mxu0 0.0
        %2699 = vmatprep.subr.mxu0 0.0
        %2700 = vmatpush1.msra.mxu0 0.0
        %2701 = vmatprep.subr.mxu0 0.0
        %2702 = vmatpush1.msra.mxu0 0.0
        %2703 = vmatprep.subr.mxu0 0.0
        %2704 = vmatpush1.msra.mxu0 0.0
        %2705 = vmatprep.subr.mxu0 0.0
        %2706 = vmatpush1.msra.mxu0 0.0
        %2707 = vmatprep.subr.mxu0 0.0
        %2708 = vmatpush1.msra.mxu0 0.0
        %2709 = vmatprep.subr.mxu0 0.0
        %2710 = vmatpush1.msra.mxu0 0.0
        %2711 = vmatprep.subr.mxu0 0.0
        %2712 = vmatpush1.msra.mxu0 0.0
        %2713 = vmatprep.subr.mxu0 0.0
        %2714 = vmatpush1.msra.mxu0 0.0
        %2715 = vmatprep.subr.mxu0 0.0
        %2716 = vmatpush1.msra.mxu0 0.0
        %2717 = vmatprep.subr.mxu0 0.0
        %2718 = vmatpush1.msra.mxu0 0.0
        %2719 = vmatprep.subr.mxu0 0.0
        %v2720 = vand.u32 %v2687, 4294901760
        %2721 = vmatpush1.msra.mxu0 %v2720
        %2722 = vmatprep.subr.mxu0 0.0
        %2723 = vmatpush2.msra.mxu0 0.0
        %2724 = vmatprep.subr.mxu0 0.0
        %2725 = vmatpush2.msra.mxu0 0.0
        %2726 = vmatprep.subr.mxu0 0.0
        %2727 = vmatpush2.msra.mxu0 0.0
        %2728 = vmatprep.subr.mxu0 0.0
        %2729 = vmatpush2.msra.mxu0 0.0
        %2730 = vmatprep.subr.mxu0 0.0
        %2731 = vmatpush2.msra.mxu0 0.0
        %2732 = vmatprep.subr.mxu0 0.0
        %2733 = vmatpush2.msra.mxu0 0.0
        %2734 = vmatprep.subr.mxu0 0.0
        %2735 = vmatpush2.msra.mxu0 0.0
        %2736 = vmatprep.subr.mxu0 0.0
        %2737 = vmatpush2.msra.mxu0 0.0
        %2738 = vmatprep.subr.mxu0 0.0
        %2739 = vmatpush2.msra.mxu0 0.0
        %2740 = vmatprep.subr.mxu0 0.0
        %2741 = vmatpush2.msra.mxu0 0.0
        %2742 = vmatprep.subr.mxu0 0.0
        %2743 = vmatpush2.msra.mxu0 0.0
        %2744 = vmatprep.subr.mxu0 0.0
        %2745 = vmatpush2.msra.mxu0 0.0
        %2746 = vmatprep.subr.mxu0 0.0
        %2747 = vmatpush2.msra.mxu0 0.0
        %2748 = vmatprep.subr.mxu0 0.0
        %2749 = vmatpush2.msra.mxu0 0.0
        %2750 = vmatprep.subr.mxu0 0.0
        %2751 = vmatpush2.msra.mxu0 0.0
        %2752 = vmatprep.subr.mxu0 0.0
        %2753 = vmatpush2.msra.mxu0 0.0
        %2754 = vmatprep.mubr.f32.mxu0 0.0
        %v2755 = vand.u32 %v2684, 4294901760
        %v2756 = vsub.f32 %v2684, %v2755
        %v2757 = vand.u32 %v2756, 4294901760
        %v2758 = vsub.f32 %v2756, %v2757
        %v2759 = vand.u32 %v2758, 4294901760
        %2760 = vmatmul.mubr.f32.gmra.mxu0 %v2759
        %v2761 = vpop.f32.mrf.mxu0
        %v2762 = vadd.f32 %v2681, %v2761
        %v2763 = vpop.f32.mrf.mxu0
        %2764 = vdwg.mxu0
        %2765 = vmatprep.subr.mxu0 0.0
        %2766 = vmatpush1.msra.mxu0 0.0
        %2767 = vmatprep.subr.mxu0 0.0
        %2768 = vmatpush1.msra.mxu0 0.0
        %2769 = vmatprep.subr.mxu0 0.0
        %2770 = vmatpush1.msra.mxu0 0.0
        %2771 = vmatprep.subr.mxu0 0.0
        %2772 = vmatpush1.msra.mxu0 0.0
        %2773 = vmatprep.subr.mxu0 0.0
        %2774 = vmatpush1.msra.mxu0 0.0
        %2775 = vmatprep.subr.mxu0 0.0
        %2776 = vmatpush1.msra.mxu0 0.0
        %2777 = vmatprep.subr.mxu0 0.0
        %2778 = vmatpush1.msra.mxu0 0.0
        %2779 = vmatprep.subr.mxu0 0.0
        %2780 = vmatpush1.msra.mxu0 0.0
        %2781 = vmatprep.subr.mxu0 0.0
        %2782 = vmatpush1.msra.mxu0 0.0
        %2783 = vmatprep.subr.mxu0 0.0
        %2784 = vmatpush1.msra.mxu0 0.0
        %2785 = vmatprep.subr.mxu0 0.0
        %2786 = vmatpush1.msra.mxu0 0.0
        %2787 = vmatprep.subr.mxu0 0.0
        %2788 = vmatpush1.msra.mxu0 0.0
        %2789 = vmatprep.subr.mxu0 0.0
        %2790 = vmatpush1.msra.mxu0 0.0
        %2791 = vmatprep.subr.mxu0 0.0
        %2792 = vmatpush1.msra.mxu0 0.0
        %2793 = vmatprep.subr.mxu0 0.0
        %2794 = vmatpush1.msra.mxu0 0.0
        %2795 = vmatprep.subr.mxu0 0.0
        %v2796 = vand.u32 %v2687, 4294901760
        %v2797 = vsub.f32 %v2687, %v2796
        %v2798 = vand.u32 %v2797, 4294901760
        %v2799 = vsub.f32 %v2797, %v2798
        %v2800 = vand.u32 %v2799, 4294901760
        %2801 = vmatpush1.msra.mxu0 %v2800
        %2802 = vmatprep.subr.mxu0 0.0
        %2803 = vmatpush2.msra.mxu0 0.0
        %2804 = vmatprep.subr.mxu0 0.0
        %2805 = vmatpush2.msra.mxu0 0.0
        %2806 = vmatprep.subr.mxu0 0.0
        %2807 = vmatpush2.msra.mxu0 0.0
        %2808 = vmatprep.subr.mxu0 0.0
        %2809 = vmatpush2.msra.mxu0 0.0
        %2810 = vmatprep.subr.mxu0 0.0
        %2811 = vmatpush2.msra.mxu0 0.0
        %2812 = vmatprep.subr.mxu0 0.0
        %2813 = vmatpush2.msra.mxu0 0.0
        %2814 = vmatprep.subr.mxu0 0.0
        %2815 = vmatpush2.msra.mxu0 0.0
        %2816 = vmatprep.subr.mxu0 0.0
        %2817 = vmatpush2.msra.mxu0 0.0
        %2818 = vmatprep.subr.mxu0 0.0
        %2819 = vmatpush2.msra.mxu0 0.0
        %2820 = vmatprep.subr.mxu0 0.0
        %2821 = vmatpush2.msra.mxu0 0.0
        %2822 = vmatprep.subr.mxu0 0.0
        %2823 = vmatpush2.msra.mxu0 0.0
        %2824 = vmatprep.subr.mxu0 0.0
        %2825 = vmatpush2.msra.mxu0 0.0
        %2826 = vmatprep.subr.mxu0 0.0
        %2827 = vmatpush2.msra.mxu0 0.0
        %2828 = vmatprep.subr.mxu0 0.0
        %2829 = vmatpush2.msra.mxu0 0.0
        %2830 = vmatprep.subr.mxu0 0.0
        %2831 = vmatpush2.msra.mxu0 0.0
        %2832 = vmatprep.subr.mxu0 0.0
        %2833 = vmatpush2.msra.mxu0 0.0
        %2834 = vmatprep.mubr.f32.mxu0 0.0
        %v2835 = vand.u32 %v2684, 4294901760
        %2836 = vmatmul.mubr.f32.gmra.mxu0 %v2835
        %v2837 = vpop.f32.mrf.mxu0
        %v2838 = vadd.f32 %v2762, %v2837
        %v2839 = vpop.f32.mrf.mxu0
        %2840 = vdwg.mxu0
        %2841 = vmatprep.subr.mxu0 0.0
        %2842 = vmatpush1.msra.mxu0 0.0
        %2843 = vmatprep.subr.mxu0 0.0
        %2844 = vmatpush1.msra.mxu0 0.0
        %2845 = vmatprep.subr.mxu0 0.0
        %2846 = vmatpush1.msra.mxu0 0.0
        %2847 = vmatprep.subr.mxu0 0.0
        %2848 = vmatpush1.msra.mxu0 0.0
        %2849 = vmatprep.subr.mxu0 0.0
        %2850 = vmatpush1.msra.mxu0 0.0
        %2851 = vmatprep.subr.mxu0 0.0
        %2852 = vmatpush1.msra.mxu0 0.0
        %2853 = vmatprep.subr.mxu0 0.0
        %2854 = vmatpush1.msra.mxu0 0.0
        %2855 = vmatprep.subr.mxu0 0.0
        %2856 = vmatpush1.msra.mxu0 0.0
        %2857 = vmatprep.subr.mxu0 0.0
        %2858 = vmatpush1.msra.mxu0 0.0
        %2859 = vmatprep.subr.mxu0 0.0
        %2860 = vmatpush1.msra.mxu0 0.0
        %2861 = vmatprep.subr.mxu0 0.0
        %2862 = vmatpush1.msra.mxu0 0.0
        %2863 = vmatprep.subr.mxu0 0.0
        %2864 = vmatpush1.msra.mxu0 0.0
        %2865 = vmatprep.subr.mxu0 0.0
        %2866 = vmatpush1.msra.mxu0 0.0
        %2867 = vmatprep.subr.mxu0 0.0
        %2868 = vmatpush1.msra.mxu0 0.0
        %2869 = vmatprep.subr.mxu0 0.0
        %2870 = vmatpush1.msra.mxu0 0.0
        %2871 = vmatprep.subr.mxu0 0.0
        %v2872 = vand.u32 %v2687, 4294901760
        %v2873 = vsub.f32 %v2687, %v2872
        %2874 = vmatpush1.msra.mxu0 %v2873
        %2875 = vmatprep.subr.mxu0 0.0
        %2876 = vmatpush2.msra.mxu0 0.0
        %2877 = vmatprep.subr.mxu0 0.0
        %2878 = vmatpush2.msra.mxu0 0.0
        %2879 = vmatprep.subr.mxu0 0.0
        %2880 = vmatpush2.msra.mxu0 0.0
        %2881 = vmatprep.subr.mxu0 0.0
        %2882 = vmatpush2.msra.mxu0 0.0
        %2883 = vmatprep.subr.mxu0 0.0
        %2884 = vmatpush2.msra.mxu0 0.0
        %2885 = vmatprep.subr.mxu0 0.0
        %2886 = vmatpush2.msra.mxu0 0.0
        %2887 = vmatprep.subr.mxu0 0.0
        %2888 = vmatpush2.msra.mxu0 0.0
        %2889 = vmatprep.subr.mxu0 0.0
        %2890 = vmatpush2.msra.mxu0 0.0
        %2891 = vmatprep.subr.mxu0 0.0
        %2892 = vmatpush2.msra.mxu0 0.0
        %2893 = vmatprep.subr.mxu0 0.0
        %2894 = vmatpush2.msra.mxu0 0.0
        %2895 = vmatprep.subr.mxu0 0.0
        %2896 = vmatpush2.msra.mxu0 0.0
        %2897 = vmatprep.subr.mxu0 0.0
        %2898 = vmatpush2.msra.mxu0 0.0
        %2899 = vmatprep.subr.mxu0 0.0
        %2900 = vmatpush2.msra.mxu0 0.0
        %2901 = vmatprep.subr.mxu0 0.0
        %2902 = vmatpush2.msra.mxu0 0.0
        %2903 = vmatprep.subr.mxu0 0.0
        %2904 = vmatpush2.msra.mxu0 0.0
        %2905 = vmatprep.subr.mxu0 0.0
        %2906 = vmatpush2.msra.mxu0 0.0
        %2907 = vmatprep.mubr.f32.mxu0 0.0
        %v2908 = vand.u32 %v2684, 4294901760
        %v2909 = vsub.f32 %v2684, %v2908
        %2910 = vmatmul.mubr.f32.gmra.mxu0 %v2909
        %v2911 = vpop.f32.mrf.mxu0
        %v2912 = vadd.f32 %v2838, %v2911
        %v2913 = vpop.f32.mrf.mxu0
        %2914 = vdwg.mxu0
        %2915 = vmatprep.subr.mxu0 0.0
        %2916 = vmatpush1.msra.mxu0 0.0
        %2917 = vmatprep.subr.mxu0 0.0
        %2918 = vmatpush1.msra.mxu0 0.0
        %2919 = vmatprep.subr.mxu0 0.0
        %2920 = vmatpush1.msra.mxu0 0.0
        %2921 = vmatprep.subr.mxu0 0.0
        %2922 = vmatpush1.msra.mxu0 0.0
        %2923 = vmatprep.subr.mxu0 0.0
        %2924 = vmatpush1.msra.mxu0 0.0
        %2925 = vmatprep.subr.mxu0 0.0
        %2926 = vmatpush1.msra.mxu0 0.0
        %2927 = vmatprep.subr.mxu0 0.0
        %2928 = vmatpush1.msra.mxu0 0.0
        %2929 = vmatprep.subr.mxu0 0.0
        %2930 = vmatpush1.msra.mxu0 0.0
        %2931 = vmatprep.subr.mxu0 0.0
        %2932 = vmatpush1.msra.mxu0 0.0
        %2933 = vmatprep.subr.mxu0 0.0
        %2934 = vmatpush1.msra.mxu0 0.0
        %2935 = vmatprep.subr.mxu0 0.0
        %2936 = vmatpush1.msra.mxu0 0.0
        %2937 = vmatprep.subr.mxu0 0.0
        %2938 = vmatpush1.msra.mxu0 0.0
        %2939 = vmatprep.subr.mxu0 0.0
        %2940 = vmatpush1.msra.mxu0 0.0
        %2941 = vmatprep.subr.mxu0 0.0
        %2942 = vmatpush1.msra.mxu0 0.0
        %2943 = vmatprep.subr.mxu0 0.0
        %2944 = vmatpush1.msra.mxu0 0.0
        %2945 = vmatprep.subr.mxu0 0.0
        %v2946 = vand.u32 %v2687, 4294901760
        %2947 = vmatpush1.msra.mxu0 %v2946
        %2948 = vmatprep.subr.mxu0 0.0
        %2949 = vmatpush2.msra.mxu0 0.0
        %2950 = vmatprep.subr.mxu0 0.0
        %2951 = vmatpush2.msra.mxu0 0.0
        %2952 = vmatprep.subr.mxu0 0.0
        %2953 = vmatpush2.msra.mxu0 0.0
        %2954 = vmatprep.subr.mxu0 0.0
        %2955 = vmatpush2.msra.mxu0 0.0
        %2956 = vmatprep.subr.mxu0 0.0
        %2957 = vmatpush2.msra.mxu0 0.0
        %2958 = vmatprep.subr.mxu0 0.0
        %2959 = vmatpush2.msra.mxu0 0.0
        %2960 = vmatprep.subr.mxu0 0.0
        %2961 = vmatpush2.msra.mxu0 0.0
        %2962 = vmatprep.subr.mxu0 0.0
        %2963 = vmatpush2.msra.mxu0 0.0
        %2964 = vmatprep.subr.mxu0 0.0
        %2965 = vmatpush2.msra.mxu0 0.0
        %2966 = vmatprep.subr.mxu0 0.0
        %2967 = vmatpush2.msra.mxu0 0.0
        %2968 = vmatprep.subr.mxu0 0.0
        %2969 = vmatpush2.msra.mxu0 0.0
        %2970 = vmatprep.subr.mxu0 0.0
        %2971 = vmatpush2.msra.mxu0 0.0
        %2972 = vmatprep.subr.mxu0 0.0
        %2973 = vmatpush2.msra.mxu0 0.0
        %2974 = vmatprep.subr.mxu0 0.0
        %2975 = vmatpush2.msra.mxu0 0.0
        %2976 = vmatprep.subr.mxu0 0.0
        %2977 = vmatpush2.msra.mxu0 0.0
        %2978 = vmatprep.subr.mxu0 0.0
        %2979 = vmatpush2.msra.mxu0 0.0
        %2980 = vmatprep.mubr.f32.mxu0 0.0
        %v2981 = vand.u32 %v2684, 4294901760
        %v2982 = vsub.f32 %v2684, %v2981
        %v2983 = vand.u32 %v2982, 4294901760
        %2984 = vmatmul.mubr.f32.gmra.mxu0 %v2983
        %v2985 = vpop.f32.mrf.mxu0
        %v2986 = vadd.f32 %v2912, %v2985
        %v2987 = vpop.f32.mrf.mxu0
        %2988 = vdwg.mxu0
        %2989 = vmatprep.subr.mxu0 0.0
        %2990 = vmatpush1.msra.mxu0 0.0
        %2991 = vmatprep.subr.mxu0 0.0
        %2992 = vmatpush1.msra.mxu0 0.0
        %2993 = vmatprep.subr.mxu0 0.0
        %2994 = vmatpush1.msra.mxu0 0.0
        %2995 = vmatprep.subr.mxu0 0.0
        %2996 = vmatpush1.msra.mxu0 0.0
        %2997 = vmatprep.subr.mxu0 0.0
        %2998 = vmatpush1.msra.mxu0 0.0
        %2999 = vmatprep.subr.mxu0 0.0
        %3000 = vmatpush1.msra.mxu0 0.0
        %3001 = vmatprep.subr.mxu0 0.0
        %3002 = vmatpush1.msra.mxu0 0.0
        %3003 = vmatprep.subr.mxu0 0.0
        %3004 = vmatpush1.msra.mxu0 0.0
        %3005 = vmatprep.subr.mxu0 0.0
        %3006 = vmatpush1.msra.mxu0 0.0
        %3007 = vmatprep.subr.mxu0 0.0
        %3008 = vmatpush1.msra.mxu0 0.0
        %3009 = vmatprep.subr.mxu0 0.0
        %3010 = vmatpush1.msra.mxu0 0.0
        %3011 = vmatprep.subr.mxu0 0.0
        %3012 = vmatpush1.msra.mxu0 0.0
        %3013 = vmatprep.subr.mxu0 0.0
        %3014 = vmatpush1.msra.mxu0 0.0
        %3015 = vmatprep.subr.mxu0 0.0
        %3016 = vmatpush1.msra.mxu0 0.0
        %3017 = vmatprep.subr.mxu0 0.0
        %3018 = vmatpush1.msra.mxu0 0.0
        %3019 = vmatprep.subr.mxu0 0.0
        %v3020 = vand.u32 %v2687, 4294901760
        %v3021 = vsub.f32 %v2687, %v3020
        %v3022 = vand.u32 %v3021, 4294901760
        %3023 = vmatpush1.msra.mxu0 %v3022
        %3024 = vmatprep.subr.mxu0 0.0
        %3025 = vmatpush2.msra.mxu0 0.0
        %3026 = vmatprep.subr.mxu0 0.0
        %3027 = vmatpush2.msra.mxu0 0.0
        %3028 = vmatprep.subr.mxu0 0.0
        %3029 = vmatpush2.msra.mxu0 0.0
        %3030 = vmatprep.subr.mxu0 0.0
        %3031 = vmatpush2.msra.mxu0 0.0
        %3032 = vmatprep.subr.mxu0 0.0
        %3033 = vmatpush2.msra.mxu0 0.0
        %3034 = vmatprep.subr.mxu0 0.0
        %3035 = vmatpush2.msra.mxu0 0.0
        %3036 = vmatprep.subr.mxu0 0.0
        %3037 = vmatpush2.msra.mxu0 0.0
        %3038 = vmatprep.subr.mxu0 0.0
        %3039 = vmatpush2.msra.mxu0 0.0
        %3040 = vmatprep.subr.mxu0 0.0
        %3041 = vmatpush2.msra.mxu0 0.0
        %3042 = vmatprep.subr.mxu0 0.0
        %3043 = vmatpush2.msra.mxu0 0.0
        %3044 = vmatprep.subr.mxu0 0.0
        %3045 = vmatpush2.msra.mxu0 0.0
        %3046 = vmatprep.subr.mxu0 0.0
        %3047 = vmatpush2.msra.mxu0 0.0
        %3048 = vmatprep.subr.mxu0 0.0
        %3049 = vmatpush2.msra.mxu0 0.0
        %3050 = vmatprep.subr.mxu0 0.0
        %3051 = vmatpush2.msra.mxu0 0.0
        %3052 = vmatprep.subr.mxu0 0.0
        %3053 = vmatpush2.msra.mxu0 0.0
        %3054 = vmatprep.subr.mxu0 0.0
        %3055 = vmatpush2.msra.mxu0 0.0
        %3056 = vmatprep.mubr.f32.mxu0 0.0
        %v3057 = vand.u32 %v2684, 4294901760
        %3058 = vmatmul.mubr.f32.gmra.mxu0 %v3057
        %v3059 = vpop.f32.mrf.mxu0
        %v3060 = vadd.f32 %v2986, %v3059
        %v3061 = vpop.f32.mrf.mxu0
        %3062 = vdwg.mxu0
        %3063 = vmatprep.subr.mxu0 0.0
        %3064 = vmatpush1.msra.mxu0 0.0
        %3065 = vmatprep.subr.mxu0 0.0
        %3066 = vmatpush1.msra.mxu0 0.0
        %3067 = vmatprep.subr.mxu0 0.0
        %3068 = vmatpush1.msra.mxu0 0.0
        %3069 = vmatprep.subr.mxu0 0.0
        %3070 = vmatpush1.msra.mxu0 0.0
        %3071 = vmatprep.subr.mxu0 0.0
        %3072 = vmatpush1.msra.mxu0 0.0
        %3073 = vmatprep.subr.mxu0 0.0
        %3074 = vmatpush1.msra.mxu0 0.0
        %3075 = vmatprep.subr.mxu0 0.0
        %3076 = vmatpush1.msra.mxu0 0.0
        %3077 = vmatprep.subr.mxu0 0.0
        %3078 = vmatpush1.msra.mxu0 0.0
        %3079 = vmatprep.subr.mxu0 0.0
        %3080 = vmatpush1.msra.mxu0 0.0
        %3081 = vmatprep.subr.mxu0 0.0
        %3082 = vmatpush1.msra.mxu0 0.0
        %3083 = vmatprep.subr.mxu0 0.0
        %3084 = vmatpush1.msra.mxu0 0.0
        %3085 = vmatprep.subr.mxu0 0.0
        %3086 = vmatpush1.msra.mxu0 0.0
        %3087 = vmatprep.subr.mxu0 0.0
        %3088 = vmatpush1.msra.mxu0 0.0
        %3089 = vmatprep.subr.mxu0 0.0
        %3090 = vmatpush1.msra.mxu0 0.0
        %3091 = vmatprep.subr.mxu0 0.0
        %3092 = vmatpush1.msra.mxu0 0.0
        %3093 = vmatprep.subr.mxu0 0.0
        %v3094 = vand.u32 %v2687, 4294901760
        %3095 = vmatpush1.msra.mxu0 %v3094
        %3096 = vmatprep.subr.mxu0 0.0
        %3097 = vmatpush2.msra.mxu0 0.0
        %3098 = vmatprep.subr.mxu0 0.0
        %3099 = vmatpush2.msra.mxu0 0.0
        %3100 = vmatprep.subr.mxu0 0.0
        %3101 = vmatpush2.msra.mxu0 0.0
        %3102 = vmatprep.subr.mxu0 0.0
        %3103 = vmatpush2.msra.mxu0 0.0
        %3104 = vmatprep.subr.mxu0 0.0
        %3105 = vmatpush2.msra.mxu0 0.0
        %3106 = vmatprep.subr.mxu0 0.0
        %3107 = vmatpush2.msra.mxu0 0.0
        %3108 = vmatprep.subr.mxu0 0.0
        %3109 = vmatpush2.msra.mxu0 0.0
        %3110 = vmatprep.subr.mxu0 0.0
        %3111 = vmatpush2.msra.mxu0 0.0
        %3112 = vmatprep.subr.mxu0 0.0
        %3113 = vmatpush2.msra.mxu0 0.0
        %3114 = vmatprep.subr.mxu0 0.0
        %3115 = vmatpush2.msra.mxu0 0.0
        %3116 = vmatprep.subr.mxu0 0.0
        %3117 = vmatpush2.msra.mxu0 0.0
        %3118 = vmatprep.subr.mxu0 0.0
        %3119 = vmatpush2.msra.mxu0 0.0
        %3120 = vmatprep.subr.mxu0 0.0
        %3121 = vmatpush2.msra.mxu0 0.0
        %3122 = vmatprep.subr.mxu0 0.0
        %3123 = vmatpush2.msra.mxu0 0.0
        %3124 = vmatprep.subr.mxu0 0.0
        %3125 = vmatpush2.msra.mxu0 0.0
        %3126 = vmatprep.subr.mxu0 0.0
        %3127 = vmatpush2.msra.mxu0 0.0
        %3128 = vmatprep.mubr.f32.mxu0 0.0
        %v3129 = vand.u32 %v2684, 4294901760
        %3130 = vmatmul.mubr.f32.gmra.mxu0 %v3129
        %v3131 = vpop.f32.mrf.mxu0
        %v3132 = vadd.f32 %v3060, %v3131
        %v3133 = vpop.f32.mrf.mxu0
        %3134 = vdwg.mxu0
        %v3135 = vmul.f32 %v3132, 0.5
        %v3136 = vtanh.pop %v3135
        %v3137 = vadd.f32 %v3136, 1.0
        %v3138 = vmul.f32 %v3137, 0.5
        %3140 = vset.pattern.permute.xlu0 0
        %3141 = vperm.xlu0 %3140, %v3138
        %v3142 = vpop.permute.xlu0 %3141
        %v3144 = vunpack.c.l.s4 839922192
        %v3145 = vunpack.c.0.s8 %v3144
        %v3146 = vlaneseq
        %v3147 = vshrl.u32 %v3146, 7
        %v3148 = vsub.s32 %v3145, %v3147
        %v3149 = vrot.slane %v3142, %v3148
        %v3151 = vmul.f32 %v526, %v3149
        %3152 = vst [vmem:[%s525] sm:$0xff] %v3151
        %s3153 = sand.u32 %s319, 1
        %s3154 = scalar_lea.sflag [#allocation4], %s3153
        %s3155 = sand.u32 %s319, 1
        %s3156 = smul.addr %s3155, 8
        %s3157 = scalar_lea.vmem [#allocation13], %s3156
        // Predicated region
        $region97: #{tpu_custom_call.1} parent=71 // pred_check
          %p3158 = pneg %p329
        $region98: #{tpu_custom_call.1} parent=71 // pred_check_branch
          %3160 = sbr.rel (%p3158) target = $region100
        $region99: #{tpu_custom_call.1} parent=71 // pred_region
          %s3162 = ssub.s32 128, 128
          %3163 = vsyncadd %s3154, %s3162
          %s3164 = smul.addr %s33, 2
          %s3165 = smul.addr %s3164, 64
          %s3166 = scalar_lea.hbm %s13, %s3165
          %s3168 = sshll.u32 %s3157, 4
          %s3169 = int_to_ptr.vmem [resolvable:$true] %s3168
          %3171 = dma.vmem_to_hbm [thread:$0]  %s3169, 128, %s3166, %s3154
        $region100: #{tpu_custom_call.1} parent=71 // pred_fallthru
          _
      $region72: #{tpu_custom_call.1} parent=5 // pred_fallthru
        _
      %p3172 = scmp.le.s32.totalorder 2, %s28
      // Predicated region
      $region101: #{tpu_custom_call.1} parent=5 // pred_check
        %p3173 = pneg %p3172
      $region102: #{tpu_custom_call.1} parent=5 // pred_check_branch
        %3175 = sbr.rel (%p3173) target = $region104
      $region103: #{tpu_custom_call.1} parent=5 // pred_region
        %s3176 = ssub.s32 %s28, 2
        // Predicated region
        $region105: #{tpu_custom_call.1} parent=103 // pred_check
          %p3177 = pneg %p335
        $region106: #{tpu_custom_call.1} parent=103 // pred_check_branch
          %3179 = sbr.rel (%p3177) target = $region108
        $region107: #{tpu_custom_call.1} parent=103 // pred_region
          %s3180 = sand.u32 %s320, 1
          %s3181 = scalar_lea.sflag [#allocation4], %s3180
          %s3182 = sand.u32 %s320, 1
          %s3183 = smul.addr %s3182, 8
          %s3184 = scalar_lea.vmem [#allocation13], %s3183
          %3185 = dma.done %s3181, 128
        $region108: #{tpu_custom_call.1} parent=103 // pred_fallthru
          _
      $region104: #{tpu_custom_call.1} parent=5 // pred_fallthru
        _
    $region6: #{tpu_custom_call.1} parent=1 // loop_footer
      %s32 = sadd.s32 1, %s28
    $region7: #{tpu_custom_call.1} parent=1 // loop_footer_branch
      %27 = sbr.rel target = $region3
    $region8: #{tpu_custom_call.1} parent=1 // loop_exit
      _
    %3186 = vsyncpa [#allocation3], 1
    %s3187 = scalar_lea.sflag [#allocation3], 1
    %3188 = vsyncpa %s3187, 1
    %3189 = vsyncpa [#allocation6], 1
    %3190 = vsyncpa [#allocation9], 1
    %3191 = vsyncpa [#allocation12], 1
    %3192 = vsyncpa [#allocation4], 1
    %s3193 = scalar_lea.sflag [#allocation4], 1
    %3194 = vsyncpa %s3193, 1

</llo_original>
